<compile_context>
chip_gen: v5e
topology: v5e:2x2
jax: 0.10.0
libtpu: 0.0.40
codegen_flags: <defaults>
</compile_context>

<pallas_src>
import functools
import math

import jax
import jax.numpy as jnp
from jax import lax
from jax.experimental import pallas as pl
from jax.experimental.pallas import tpu as pltpu


def _round_up(x, m):
    return (x + m - 1) // m * m


# ------------------------------ kernel builder --------------------------------
def _make_fused_rnn_kernel(n_layer, T, Bp, Hp, mxu_dtype):
    """Fused LSTM stack + last-step classifier; single pallas_call, no grid."""

    def kernel(*refs):
        x_ref = refs[0]                            # (T*Bp, Dp)     mxu_dtype
        layer_refs = refs[1:1 + 3 * n_layer]       # per layer: w_ih, w_hh, b
        w_cls_ref = refs[1 + 3 * n_layer]          # (Hp, Cp)       f32
        b_cls_ref = refs[2 + 3 * n_layer]          # (1, Cp)        f32
        out_ref = refs[3 + 3 * n_layer]            # (Bp, Cp)       f32
        seq_a = refs[4 + 3 * n_layer]              # (T*Bp, Hp)     mxu_dtype
        seq_b = refs[5 + 3 * n_layer]              # (T*Bp, Hp)     mxu_dtype
        gx_sc = refs[6 + 3 * n_layer]              # (T*Bp, 4*Hp)   f32

        seq_bufs = (seq_a, seq_b)
        h = jnp.zeros((Bp, Hp), jnp.float32)

        for l in range(n_layer):                   # static layer unroll
            w_ih_ref = layer_refs[3 * l + 0]       # (Dp_l, 4*Hp) gates [i,f,o,g]
            w_hh_ref = layer_refs[3 * l + 1]       # (Hp,   4*Hp)
            b_ref = layer_refs[3 * l + 2]          # (1,    4*Hp) f32 (b_ih+b_hh)
            last_layer = (l == n_layer - 1)

            # Ping-pong hand-off buffers: a layer never reads the buffer it is
            # writing, so the ordering stays robust under any later pipelining.
            src = seq_bufs[(l - 1) % 2]
            dst = seq_bufs[l % 2]

            inp = x_ref[...] if l == 0 else src[...]          # (T*Bp, Dp_l) bf16

            # Hoisted input projection for the whole sequence: one big bf16 MXU
            # pass with f32 accumulation, materialised in VMEM scratch so the
            # time loop only takes aligned ref slices of it.
            gx_sc[...] = (jnp.dot(inp, w_ih_ref[...],
                                  preferred_element_type=jnp.float32)
                          + b_ref[...])

            def step(t, carry, *, dst=dst, w_hh_ref=w_hh_ref,
                     last_layer=last_layer):
                h, c = carry
                row = pl.multiple_of(t * Bp, Bp)   # sublane-aligned gx slice
                # Serial critical path: only h @ W_hh (bf16 operands, f32 acc).
                gates = gx_sc[pl.ds(row, Bp), :] + jnp.dot(
                    h.astype(mxu_dtype), w_hh_ref[...],
                    preferred_element_type=jnp.float32)        # (Bp, 4*Hp) f32
                # Gate order [i | f | o | g]; each gate sits on a full 128-lane
                # block, so these slices are lane-aligned (no XLU shuffles).
                sig = jax.nn.sigmoid(gates[:, :3 * Hp])
                g_g = jnp.tanh(gates[:, 3 * Hp:])
                i_g = sig[:, 0 * Hp:1 * Hp]
                f_g = sig[:, 1 * Hp:2 * Hp]
                o_g = sig[:, 2 * Hp:3 * Hp]
                c = f_g * c + i_g * g_g                         # f32 cell state
                h = o_g * jnp.tanh(c)
                if not last_layer:
                    dst[pl.ds(row, Bp), :] = h.astype(mxu_dtype)
                return (h, c)

            h, _ = lax.fori_loop(
                0, T, step,
                (jnp.zeros((Bp, Hp), jnp.float32),
                 jnp.zeros((Bp, Hp), jnp.float32)),
                unroll=min(T, 8))

        # Fused classifier on the last timestep's hidden state (lane-dense out).
        out_ref[...] = (jnp.dot(h, w_cls_ref[...],
                                preferred_element_type=jnp.float32)
                        + b_cls_ref[...]).astype(out_ref.dtype)

    return kernel


# ------------------------- one-time weight preprocessing -----------------------
def prepare_rnn_params(lstm_params, cls_w, cls_b, *, mxu_dtype=jnp.bfloat16):
    """Reorder gates [i,f,g,o]->[i,f,o,g], pad every gate / dim to lane/sublane
    alignment, transpose to (in, out) layout, and cast MXU operands to bf16.
    Run ONCE; the results are closed over by the jitted forward."""
    n_layer = len(lstm_params)
    H = lstm_params[0][1].shape[1]               # w_hh: (4H, H)
    Hp = _round_up(H, 128)
    C = cls_w.shape[0]
    Cp = _round_up(C, 128)
    D0 = lstm_params[0][0].shape[1]              # w_ih(layer0): (4H, D)
    Dp0 = _round_up(D0, 128)

    def gate_blocks(w):                          # split [i,f,g,o] -> (i,f,o,g)
        i, f, g, o = jnp.split(jnp.asarray(w, jnp.float32), 4, axis=0)
        return (i, f, o, g)

    def prep_w(w, k_pad):                        # (4H, K) -> (k_pad, 4*Hp)
        cols = []
        for blk in gate_blocks(w):
            bt = blk.T                           # (K, H)
            cols.append(jnp.pad(bt, ((0, k_pad - bt.shape[0]), (0, Hp - H))))
        return jnp.concatenate(cols, axis=1).astype(mxu_dtype)

    def prep_b(b_ih, b_hh):                      # (4H,) -> (1, 4*Hp) f32
        parts = [jnp.pad(p, (0, Hp - H))
                 for p in gate_blocks(jnp.asarray(b_ih, jnp.float32)
                                      + jnp.asarray(b_hh, jnp.float32))]
        return jnp.concatenate(parts).reshape(1, 4 * Hp)

    weights = []
    d_pad = Dp0
    for (w_ih, w_hh, b_ih, b_hh) in lstm_params:
        weights.append(prep_w(w_ih, d_pad))      # (d_pad, 4*Hp) bf16
        weights.append(prep_w(w_hh, Hp))         # (Hp,   4*Hp) bf16
        weights.append(prep_b(b_ih, b_hh))       # (1,    4*Hp) f32
        d_pad = Hp

    w_cls_p = jnp.pad(jnp.asarray(cls_w, jnp.float32).T,
                      ((0, Hp - H), (0, Cp - C)))              # (Hp, Cp) f32
    b_cls_p = jnp.pad(jnp.asarray(cls_b, jnp.float32),
                      (0, Cp - C)).reshape(1, Cp)              # (1, Cp)  f32

    meta = dict(n_layer=n_layer, H=H, Hp=Hp, C=C, Cp=Cp, D=D0, Dp=Dp0,
                mxu_dtype=mxu_dtype)
    return tuple(weights), w_cls_p, b_cls_p, meta


# ------------------------------ wrapper / model --------------------------------
def make_rnn_forward(prepared):
    weights, w_cls_p, b_cls_p, meta = prepared
    n_layer = meta["n_layer"]
    Hp, Cp, Dp = meta["Hp"], meta["Cp"], meta["Dp"]
    mxu_dtype = meta["mxu_dtype"]

    @jax.jit
    def forward(x_btd):
        x = jnp.asarray(x_btd, jnp.float32)      # (B, T, D)
        B, T, D = x.shape
        Bp = _round_up(B, 8)

        # Time-major, batch/feature padded, flattened: (T*Bp, Dp) in bf16.
        x_t = jnp.transpose(x, (1, 0, 2))
        x_t = jnp.pad(x_t, ((0, 0), (0, Bp - B), (0, Dp - D)))
        x_tb = x_t.reshape(T * Bp, Dp).astype(mxu_dtype)

        # Explicit scoped-VMEM budget: whole working set x2 headroom.
        itemsz = jnp.dtype(mxu_dtype).itemsize
        bytes_w = (sum(int(w.size) * w.dtype.itemsize for w in weights)
                   + w_cls_p.size * 4 + b_cls_p.size * 4)
        bytes_act = (x_tb.size * itemsz                # input sequence
                     + 2 * T * Bp * Hp * itemsz        # seq ping-pong scratch
                     + T * Bp * 4 * Hp * 4             # gx scratch (f32)
                     + Bp * Cp * 4)                    # output
        vmem_limit = int(min(100 * 1024 * 1024,
                             max(4 * 1024 * 1024, 2 * (bytes_w + bytes_act))))

        out = pl.pallas_call(
            _make_fused_rnn_kernel(n_layer, T, Bp, Hp, mxu_dtype),
            out_shape=jax.ShapeDtypeStruct((Bp, Cp), jnp.float32),
            scratch_shapes=[
                pltpu.VMEM((T * Bp, Hp), mxu_dtype),        # hand-off (ping)
                pltpu.VMEM((T * Bp, Hp), mxu_dtype),        # hand-off (pong)
                pltpu.VMEM((T * Bp, 4 * Hp), jnp.float32),  # hoisted gate proj
            ],
            compiler_params=pltpu.CompilerParams(
                vmem_limit_bytes=vmem_limit),
        )(x_tb, *weights, w_cls_p, b_cls_p)

        return out[:B, :meta["C"]]

    return forward


# -------------------------- pure-JAX reference (check) -------------------------
def rnn_reference(x_btd, lstm_params, cls_w, cls_b):
    h_seq = jnp.asarray(x_btd, jnp.float32)                    # (B, T, D)
    for (w_ih, w_hh, b_ih, b_hh) in lstm_params:
        B, T, _ = h_seq.shape
        H = w_hh.shape[1]

        def step(carry, x_t):
            h, c = carry
            gates = x_t @ w_ih.T + b_ih + h @ w_hh.T + b_hh
            i, f, g, o = jnp.split(gates, 4, axis=-1)
            i, f, g, o = (jax.nn.sigmoid(i), jax.nn.sigmoid(f),
                          jnp.tanh(g), jax.nn.sigmoid(o))
            c = f * c + i * g
            h = o * jnp.tanh(c)
            return (h, c), h

        init = (jnp.zeros((B, H), jnp.float32), jnp.zeros((B, H), jnp.float32))
        _, hs = jax.lax.scan(step, init, jnp.transpose(h_seq, (1, 0, 2)))
        h_seq = jnp.transpose(hs, (1, 0, 2))
    return h_seq[:, -1, :] @ cls_w.T + cls_b


# ------------------------------------ main --------------------------------------
if __name__ == "__main__":
    # Small shapes consistent with rnn(in_dim, hidden_dim, n_layer, n_class).
    B, T = 2, 8
    in_dim, hidden_dim, n_layer, n_class = 16, 32, 2, 10

    key = jax.random.PRNGKey(0)
    k_x, key = jax.random.split(key)
    x = jax.random.normal(k_x, (B, T, in_dim), jnp.float32)

    # PyTorch-style uniform(-1/sqrt(H), 1/sqrt(H)) init.
    bound = 1.0 / math.sqrt(hidden_dim)
    lstm_params = []
    d_in = in_dim
    for _layer in range(n_layer):
        k1, k2, k3, k4, key = jax.random.split(key, 5)
        w_ih = jax.random.uniform(k1, (4 * hidden_dim, d_in), jnp.float32, -bound, bound)
        w_hh = jax.random.uniform(k2, (4 * hidden_dim, hidden_dim), jnp.float32, -bound, bound)
        b_ih = jax.random.uniform(k3, (4 * hidden_dim,), jnp.float32, -bound, bound)
        b_hh = jax.random.uniform(k4, (4 * hidden_dim,), jnp.float32, -bound, bound)
        lstm_params.append((w_ih, w_hh, b_ih, b_hh))
        d_in = hidden_dim

    k5, k6, key = jax.random.split(key, 3)
    cls_w = jax.random.uniform(k5, (n_class, hidden_dim), jnp.float32, -bound, bound)
    cls_b = jax.random.uniform(k6, (n_class,), jnp.float32, -bound, bound)

    # One-time weight preprocessing, then a jitted forward that closes over it.
    prepared = prepare_rnn_params(lstm_params, cls_w, cls_b)
    rnn_forward = make_rnn_forward(prepared)

    out = jax.block_until_ready(rnn_forward(x))
    ref = jax.block_until_ready(rnn_reference(x, lstm_params, cls_w, cls_b))

    assert out.shape == (B, n_class), out.shape
    # bf16 MXU operands (f32 accumulation / cell state) -> tolerance sized for
    # bf16 rounding of weights/activations vs. the all-f32 reference.
    assert jnp.allclose(out, ref, rtol=3e-2, atol=3e-2), float(jnp.max(jnp.abs(out - ref)))

    print("KERNEL_OK")
</pallas_src>

<mosaic_0001>
module attributes {stable_mosaic.version = 11 : i64} {
  func.func @kernel(%arg0: memref<64x128xbf16, #tpu.memory_space<vmem>>, %arg1: memref<128x512xbf16, #tpu.memory_space<vmem>>, %arg2: memref<128x512xbf16, #tpu.memory_space<vmem>>, %arg3: memref<1x512xf32, #tpu.memory_space<vmem>>, %arg4: memref<128x512xbf16, #tpu.memory_space<vmem>>, %arg5: memref<128x512xbf16, #tpu.memory_space<vmem>>, %arg6: memref<1x512xf32, #tpu.memory_space<vmem>>, %arg7: memref<128x128xf32, #tpu.memory_space<vmem>>, %arg8: memref<1x128xf32, #tpu.memory_space<vmem>>, %arg9: memref<8x128xf32, #tpu.memory_space<vmem>>, %arg10: memref<64x128xbf16, #tpu.memory_space<vmem>>, %arg11: memref<64x128xbf16, #tpu.memory_space<vmem>>, %arg12: memref<64x512xf32, #tpu.memory_space<vmem>>) attributes {dimension_semantics = [], scalar_prefetch = 0 : i64, scratch_operands = 3 : i64, tpu.core_type = #tpu.core_type<tc>} {
    %c0 = arith.constant 0 : index
    %c0_0 = arith.constant 0 : index
    %0 = vector.load %arg0[%c0, %c0_0] : memref<64x128xbf16, #tpu.memory_space<vmem>>, vector<64x128xbf16>
    %c0_1 = arith.constant 0 : index
    %c0_2 = arith.constant 0 : index
    %1 = vector.load %arg1[%c0_1, %c0_2] : memref<128x512xbf16, #tpu.memory_space<vmem>>, vector<128x512xbf16>
    %cst = arith.constant dense<0.000000e+00> : vector<64x512xf32>
    %2 = tpu.matmul %0, %1, %cst {dimension_numbers = #tpu.dot_dimension_numbers<[1], [0], [0], [1], [0, 0, 1, 1], [], []>} : vector<64x128xbf16>, vector<128x512xbf16>, vector<64x512xf32> -> vector<64x512xf32>
    %c0_3 = arith.constant 0 : index
    %c0_4 = arith.constant 0 : index
    %3 = vector.load %arg3[%c0_3, %c0_4] : memref<1x512xf32, #tpu.memory_space<vmem>>, vector<1x512xf32>
    %4 = vector.broadcast %3 : vector<1x512xf32> to vector<64x512xf32>
    %5 = arith.addf %2, %4 : vector<64x512xf32>
    %c0_5 = arith.constant 0 : index
    %c0_6 = arith.constant 0 : index
    %6 = vector.load %arg12[%c0_5, %c0_6] : memref<64x512xf32, #tpu.memory_space<vmem>>, vector<64x512xf32>
    tpu.vector_store %arg12[%c0_5, %c0_6], %5 {strides = array<i32>} : memref<64x512xf32, #tpu.memory_space<vmem>>, vector<64x512xf32>,
    %cst_7 = arith.constant 0.000000e+00 : f32
    %7 = vector.broadcast %cst_7 : f32 to vector<8x128xf32>
    %cst_8 = arith.constant 0.000000e+00 : f32
    %8 = vector.broadcast %cst_8 : f32 to vector<8x128xf32>
    %c0_i32 = arith.constant 0 : i32
    %c8_i32 = arith.constant 8 : i32
    %9 = arith.muli %c0_i32, %c8_i32 : i32
    %10 = tpu.assume_multiple %9, 8 : i32
    %11 = arith.index_cast %10 : i32 to index
    %c0_9 = arith.constant 0 : index
    %12 = vector.load %arg12[%11, %c0_9] : memref<64x512xf32, #tpu.memory_space<vmem>>, vector<8x512xf32>
    %13 = arith.truncf %7 : vector<8x128xf32> to vector<8x128xbf16>
    %c0_10 = arith.constant 0 : index
    %c0_11 = arith.constant 0 : index
    %14 = vector.load %arg2[%c0_10, %c0_11] : memref<128x512xbf16, #tpu.memory_space<vmem>>, vector<128x512xbf16>
    %cst_12 = arith.constant dense<0.000000e+00> : vector<8x512xf32>
    %15 = tpu.matmul %13, %14, %cst_12 {dimension_numbers = #tpu.dot_dimension_numbers<[1], [0], [0], [1], [0, 0, 1, 1], [], []>} : vector<8x128xbf16>, vector<128x512xbf16>, vector<8x512xf32> -> vector<8x512xf32>
    %16 = arith.addf %12, %15 : vector<8x512xf32>
    %17 = vector.extract_strided_slice %16 {offsets = [0, 0], sizes = [8, 384], strides = [1, 1]} : vector<8x512xf32> to vector<8x384xf32>
    %18 = arith.negf %17 : vector<8x384xf32>
    %19 = math.exp %18 : vector<8x384xf32>
    %cst_13 = arith.constant 1.000000e+00 : f32
    %20 = vector.broadcast %cst_13 : f32 to vector<8x384xf32>
    %21 = arith.addf %20, %19 : vector<8x384xf32>
    %22 = arith.divf %20, %21 : vector<8x384xf32>
    %23 = vector.extract_strided_slice %16 {offsets = [0, 384], sizes = [8, 128], strides = [1, 1]} : vector<8x512xf32> to vector<8x128xf32>
    %24 = math.tanh %23 : vector<8x128xf32>
    %25 = vector.extract_strided_slice %22 {offsets = [0, 0], sizes = [8, 128], strides = [1, 1]} : vector<8x384xf32> to vector<8x128xf32>
    %26 = vector.extract_strided_slice %22 {offsets = [0, 128], sizes = [8, 128], strides = [1, 1]} : vector<8x384xf32> to vector<8x128xf32>
    %27 = vector.extract_strided_slice %22 {offsets = [0, 256], sizes = [8, 128], strides = [1, 1]} : vector<8x384xf32> to vector<8x128xf32>
    %28 = arith.mulf %26, %8 : vector<8x128xf32>
    %29 = arith.mulf %25, %24 : vector<8x128xf32>
    %30 = arith.addf %28, %29 : vector<8x128xf32>
    %31 = math.tanh %30 : vector<8x128xf32>
    %32 = arith.mulf %27, %31 : vector<8x128xf32>
    %33 = arith.truncf %32 : vector<8x128xf32> to vector<8x128xbf16>
    %34 = arith.index_cast %10 : i32 to index
    %c0_14 = arith.constant 0 : index
    %35 = vector.load %arg10[%34, %c0_14] : memref<64x128xbf16, #tpu.memory_space<vmem>>, vector<8x128xbf16>
    tpu.vector_store %arg10[%34, %c0_14], %33 {strides = array<i32>} : memref<64x128xbf16, #tpu.memory_space<vmem>>, vector<8x128xbf16>,
    %c1_i32 = arith.constant 1 : i32
    %c8_i32_15 = arith.constant 8 : i32
    %36 = arith.muli %c1_i32, %c8_i32_15 : i32
    %37 = tpu.assume_multiple %36, 8 : i32
    %38 = arith.index_cast %37 : i32 to index
    %c0_16 = arith.constant 0 : index
    %39 = vector.load %arg12[%38, %c0_16] : memref<64x512xf32, #tpu.memory_space<vmem>>, vector<8x512xf32>
    %40 = arith.truncf %32 : vector<8x128xf32> to vector<8x128xbf16>
    %c0_17 = arith.constant 0 : index
    %c0_18 = arith.constant 0 : index
    %41 = vector.load %arg2[%c0_17, %c0_18] : memref<128x512xbf16, #tpu.memory_space<vmem>>, vector<128x512xbf16>
    %cst_19 = arith.constant dense<0.000000e+00> : vector<8x512xf32>
    %42 = tpu.matmul %40, %41, %cst_19 {dimension_numbers = #tpu.dot_dimension_numbers<[1], [0], [0], [1], [0, 0, 1, 1], [], []>} : vector<8x128xbf16>, vector<128x512xbf16>, vector<8x512xf32> -> vector<8x512xf32>
    %43 = arith.addf %39, %42 : vector<8x512xf32>
    %44 = vector.extract_strided_slice %43 {offsets = [0, 0], sizes = [8, 384], strides = [1, 1]} : vector<8x512xf32> to vector<8x384xf32>
    %45 = arith.negf %44 : vector<8x384xf32>
    %46 = math.exp %45 : vector<8x384xf32>
    %cst_20 = arith.constant 1.000000e+00 : f32
    %47 = vector.broadcast %cst_20 : f32 to vector<8x384xf32>
    %48 = arith.addf %47, %46 : vector<8x384xf32>
    %49 = arith.divf %47, %48 : vector<8x384xf32>
    %50 = vector.extract_strided_slice %43 {offsets = [0, 384], sizes = [8, 128], strides = [1, 1]} : vector<8x512xf32> to vector<8x128xf32>
    %51 = math.tanh %50 : vector<8x128xf32>
    %52 = vector.extract_strided_slice %49 {offsets = [0, 0], sizes = [8, 128], strides = [1, 1]} : vector<8x384xf32> to vector<8x128xf32>
    %53 = vector.extract_strided_slice %49 {offsets = [0, 128], sizes = [8, 128], strides = [1, 1]} : vector<8x384xf32> to vector<8x128xf32>
    %54 = vector.extract_strided_slice %49 {offsets = [0, 256], sizes = [8, 128], strides = [1, 1]} : vector<8x384xf32> to vector<8x128xf32>
    %55 = arith.mulf %53, %30 : vector<8x128xf32>
    %56 = arith.mulf %52, %51 : vector<8x128xf32>
    %57 = arith.addf %55, %56 : vector<8x128xf32>
    %58 = math.tanh %57 : vector<8x128xf32>
    %59 = arith.mulf %54, %58 : vector<8x128xf32>
    %60 = arith.truncf %59 : vector<8x128xf32> to vector<8x128xbf16>
    %61 = arith.index_cast %37 : i32 to index
    %c0_21 = arith.constant 0 : index
    %62 = vector.load %arg10[%61, %c0_21] : memref<64x128xbf16, #tpu.memory_space<vmem>>, vector<8x128xbf16>
    tpu.vector_store %arg10[%61, %c0_21], %60 {strides = array<i32>} : memref<64x128xbf16, #tpu.memory_space<vmem>>, vector<8x128xbf16>,
    %c2_i32 = arith.constant 2 : i32
    %c8_i32_22 = arith.constant 8 : i32
    %63 = arith.muli %c2_i32, %c8_i32_22 : i32
    %64 = tpu.assume_multiple %63, 8 : i32
    %65 = arith.index_cast %64 : i32 to index
    %c0_23 = arith.constant 0 : index
    %66 = vector.load %arg12[%65, %c0_23] : memref<64x512xf32, #tpu.memory_space<vmem>>, vector<8x512xf32>
    %67 = arith.truncf %59 : vector<8x128xf32> to vector<8x128xbf16>
    %c0_24 = arith.constant 0 : index
    %c0_25 = arith.constant 0 : index
    %68 = vector.load %arg2[%c0_24, %c0_25] : memref<128x512xbf16, #tpu.memory_space<vmem>>, vector<128x512xbf16>
    %cst_26 = arith.constant dense<0.000000e+00> : vector<8x512xf32>
    %69 = tpu.matmul %67, %68, %cst_26 {dimension_numbers = #tpu.dot_dimension_numbers<[1], [0], [0], [1], [0, 0, 1, 1], [], []>} : vector<8x128xbf16>, vector<128x512xbf16>, vector<8x512xf32> -> vector<8x512xf32>
    %70 = arith.addf %66, %69 : vector<8x512xf32>
    %71 = vector.extract_strided_slice %70 {offsets = [0, 0], sizes = [8, 384], strides = [1, 1]} : vector<8x512xf32> to vector<8x384xf32>
    %72 = arith.negf %71 : vector<8x384xf32>
    %73 = math.exp %72 : vector<8x384xf32>
    %cst_27 = arith.constant 1.000000e+00 : f32
    %74 = vector.broadcast %cst_27 : f32 to vector<8x384xf32>
    %75 = arith.addf %74, %73 : vector<8x384xf32>
    %76 = arith.divf %74, %75 : vector<8x384xf32>
    %77 = vector.extract_strided_slice %70 {offsets = [0, 384], sizes = [8, 128], strides = [1, 1]} : vector<8x512xf32> to vector<8x128xf32>
    %78 = math.tanh %77 : vector<8x128xf32>
    %79 = vector.extract_strided_slice %76 {offsets = [0, 0], sizes = [8, 128], strides = [1, 1]} : vector<8x384xf32> to vector<8x128xf32>
    %80 = vector.extract_strided_slice %76 {offsets = [0, 128], sizes = [8, 128], strides = [1, 1]} : vector<8x384xf32> to vector<8x128xf32>
    %81 = vector.extract_strided_slice %76 {offsets = [0, 256], sizes = [8, 128], strides = [1, 1]} : vector<8x384xf32> to vector<8x128xf32>
    %82 = arith.mulf %80, %57 : vector<8x128xf32>
    %83 = arith.mulf %79, %78 : vector<8x128xf32>
    %84 = arith.addf %82, %83 : vector<8x128xf32>
    %85 = math.tanh %84 : vector<8x128xf32>
    %86 = arith.mulf %81, %85 : vector<8x128xf32>
    %87 = arith.truncf %86 : vector<8x128xf32> to vector<8x128xbf16>
    %88 = arith.index_cast %64 : i32 to index
    %c0_28 = arith.constant 0 : index
    %89 = vector.load %arg10[%88, %c0_28] : memref<64x128xbf16, #tpu.memory_space<vmem>>, vector<8x128xbf16>
    tpu.vector_store %arg10[%88, %c0_28], %87 {strides = array<i32>} : memref<64x128xbf16, #tpu.memory_space<vmem>>, vector<8x128xbf16>,
    %c3_i32 = arith.constant 3 : i32
    %c8_i32_29 = arith.constant 8 : i32
    %90 = arith.muli %c3_i32, %c8_i32_29 : i32
    %91 = tpu.assume_multiple %90, 8 : i32
    %92 = arith.index_cast %91 : i32 to index
    %c0_30 = arith.constant 0 : index
    %93 = vector.load %arg12[%92, %c0_30] : memref<64x512xf32, #tpu.memory_space<vmem>>, vector<8x512xf32>
    %94 = arith.truncf %86 : vector<8x128xf32> to vector<8x128xbf16>
    %c0_31 = arith.constant 0 : index
    %c0_32 = arith.constant 0 : index
    %95 = vector.load %arg2[%c0_31, %c0_32] : memref<128x512xbf16, #tpu.memory_space<vmem>>, vector<128x512xbf16>
    %cst_33 = arith.constant dense<0.000000e+00> : vector<8x512xf32>
    %96 = tpu.matmul %94, %95, %cst_33 {dimension_numbers = #tpu.dot_dimension_numbers<[1], [0], [0], [1], [0, 0, 1, 1], [], []>} : vector<8x128xbf16>, vector<128x512xbf16>, vector<8x512xf32> -> vector<8x512xf32>
    %97 = arith.addf %93, %96 : vector<8x512xf32>
    %98 = vector.extract_strided_slice %97 {offsets = [0, 0], sizes = [8, 384], strides = [1, 1]} : vector<8x512xf32> to vector<8x384xf32>
    %99 = arith.negf %98 : vector<8x384xf32>
    %100 = math.exp %99 : vector<8x384xf32>
    %cst_34 = arith.constant 1.000000e+00 : f32
    %101 = vector.broadcast %cst_34 : f32 to vector<8x384xf32>
    %102 = arith.addf %101, %100 : vector<8x384xf32>
    %103 = arith.divf %101, %102 : vector<8x384xf32>
    %104 = vector.extract_strided_slice %97 {offsets = [0, 384], sizes = [8, 128], strides = [1, 1]} : vector<8x512xf32> to vector<8x128xf32>
    %105 = math.tanh %104 : vector<8x128xf32>
    %106 = vector.extract_strided_slice %103 {offsets = [0, 0], sizes = [8, 128], strides = [1, 1]} : vector<8x384xf32> to vector<8x128xf32>
    %107 = vector.extract_strided_slice %103 {offsets = [0, 128], sizes = [8, 128], strides = [1, 1]} : vector<8x384xf32> to vector<8x128xf32>
    %108 = vector.extract_strided_slice %103 {offsets = [0, 256], sizes = [8, 128], strides = [1, 1]} : vector<8x384xf32> to vector<8x128xf32>
    %109 = arith.mulf %107, %84 : vector<8x128xf32>
    %110 = arith.mulf %106, %105 : vector<8x128xf32>
    %111 = arith.addf %109, %110 : vector<8x128xf32>
    %112 = math.tanh %111 : vector<8x128xf32>
    %113 = arith.mulf %108, %112 : vector<8x128xf32>
    %114 = arith.truncf %113 : vector<8x128xf32> to vector<8x128xbf16>
    %115 = arith.index_cast %91 : i32 to index
    %c0_35 = arith.constant 0 : index
    %116 = vector.load %arg10[%115, %c0_35] : memref<64x128xbf16, #tpu.memory_space<vmem>>, vector<8x128xbf16>
    tpu.vector_store %arg10[%115, %c0_35], %114 {strides = array<i32>} : memref<64x128xbf16, #tpu.memory_space<vmem>>, vector<8x128xbf16>,
    %c4_i32 = arith.constant 4 : i32
    %c8_i32_36 = arith.constant 8 : i32
    %117 = arith.muli %c4_i32, %c8_i32_36 : i32
    %118 = tpu.assume_multiple %117, 8 : i32
    %119 = arith.index_cast %118 : i32 to index
    %c0_37 = arith.constant 0 : index
    %120 = vector.load %arg12[%119, %c0_37] : memref<64x512xf32, #tpu.memory_space<vmem>>, vector<8x512xf32>
    %121 = arith.truncf %113 : vector<8x128xf32> to vector<8x128xbf16>
    %c0_38 = arith.constant 0 : index
    %c0_39 = arith.constant 0 : index
    %122 = vector.load %arg2[%c0_38, %c0_39] : memref<128x512xbf16, #tpu.memory_space<vmem>>, vector<128x512xbf16>
    %cst_40 = arith.constant dense<0.000000e+00> : vector<8x512xf32>
    %123 = tpu.matmul %121, %122, %cst_40 {dimension_numbers = #tpu.dot_dimension_numbers<[1], [0], [0], [1], [0, 0, 1, 1], [], []>} : vector<8x128xbf16>, vector<128x512xbf16>, vector<8x512xf32> -> vector<8x512xf32>
    %124 = arith.addf %120, %123 : vector<8x512xf32>
    %125 = vector.extract_strided_slice %124 {offsets = [0, 0], sizes = [8, 384], strides = [1, 1]} : vector<8x512xf32> to vector<8x384xf32>
    %126 = arith.negf %125 : vector<8x384xf32>
    %127 = math.exp %126 : vector<8x384xf32>
    %cst_41 = arith.constant 1.000000e+00 : f32
    %128 = vector.broadcast %cst_41 : f32 to vector<8x384xf32>
    %129 = arith.addf %128, %127 : vector<8x384xf32>
    %130 = arith.divf %128, %129 : vector<8x384xf32>
    %131 = vector.extract_strided_slice %124 {offsets = [0, 384], sizes = [8, 128], strides = [1, 1]} : vector<8x512xf32> to vector<8x128xf32>
    %132 = math.tanh %131 : vector<8x128xf32>
    %133 = vector.extract_strided_slice %130 {offsets = [0, 0], sizes = [8, 128], strides = [1, 1]} : vector<8x384xf32> to vector<8x128xf32>
    %134 = vector.extract_strided_slice %130 {offsets = [0, 128], sizes = [8, 128], strides = [1, 1]} : vector<8x384xf32> to vector<8x128xf32>
    %135 = vector.extract_strided_slice %130 {offsets = [0, 256], sizes = [8, 128], strides = [1, 1]} : vector<8x384xf32> to vector<8x128xf32>
    %136 = arith.mulf %134, %111 : vector<8x128xf32>
    %137 = arith.mulf %133, %132 : vector<8x128xf32>
    %138 = arith.addf %136, %137 : vector<8x128xf32>
    %139 = math.tanh %138 : vector<8x128xf32>
    %140 = arith.mulf %135, %139 : vector<8x128xf32>
    %141 = arith.truncf %140 : vector<8x128xf32> to vector<8x128xbf16>
    %142 = arith.index_cast %118 : i32 to index
    %c0_42 = arith.constant 0 : index
    %143 = vector.load %arg10[%142, %c0_42] : memref<64x128xbf16, #tpu.memory_space<vmem>>, vector<8x128xbf16>
    tpu.vector_store %arg10[%142, %c0_42], %141 {strides = array<i32>} : memref<64x128xbf16, #tpu.memory_space<vmem>>, vector<8x128xbf16>,
    %c5_i32 = arith.constant 5 : i32
    %c8_i32_43 = arith.constant 8 : i32
    %144 = arith.muli %c5_i32, %c8_i32_43 : i32
    %145 = tpu.assume_multiple %144, 8 : i32
    %146 = arith.index_cast %145 : i32 to index
    %c0_44 = arith.constant 0 : index
    %147 = vector.load %arg12[%146, %c0_44] : memref<64x512xf32, #tpu.memory_space<vmem>>, vector<8x512xf32>
    %148 = arith.truncf %140 : vector<8x128xf32> to vector<8x128xbf16>
    %c0_45 = arith.constant 0 : index
    %c0_46 = arith.constant 0 : index
    %149 = vector.load %arg2[%c0_45, %c0_46] : memref<128x512xbf16, #tpu.memory_space<vmem>>, vector<128x512xbf16>
    %cst_47 = arith.constant dense<0.000000e+00> : vector<8x512xf32>
    %150 = tpu.matmul %148, %149, %cst_47 {dimension_numbers = #tpu.dot_dimension_numbers<[1], [0], [0], [1], [0, 0, 1, 1], [], []>} : vector<8x128xbf16>, vector<128x512xbf16>, vector<8x512xf32> -> vector<8x512xf32>
    %151 = arith.addf %147, %150 : vector<8x512xf32>
    %152 = vector.extract_strided_slice %151 {offsets = [0, 0], sizes = [8, 384], strides = [1, 1]} : vector<8x512xf32> to vector<8x384xf32>
    %153 = arith.negf %152 : vector<8x384xf32>
    %154 = math.exp %153 : vector<8x384xf32>
    %cst_48 = arith.constant 1.000000e+00 : f32
    %155 = vector.broadcast %cst_48 : f32 to vector<8x384xf32>
    %156 = arith.addf %155, %154 : vector<8x384xf32>
    %157 = arith.divf %155, %156 : vector<8x384xf32>
    %158 = vector.extract_strided_slice %151 {offsets = [0, 384], sizes = [8, 128], strides = [1, 1]} : vector<8x512xf32> to vector<8x128xf32>
    %159 = math.tanh %158 : vector<8x128xf32>
    %160 = vector.extract_strided_slice %157 {offsets = [0, 0], sizes = [8, 128], strides = [1, 1]} : vector<8x384xf32> to vector<8x128xf32>
    %161 = vector.extract_strided_slice %157 {offsets = [0, 128], sizes = [8, 128], strides = [1, 1]} : vector<8x384xf32> to vector<8x128xf32>
    %162 = vector.extract_strided_slice %157 {offsets = [0, 256], sizes = [8, 128], strides = [1, 1]} : vector<8x384xf32> to vector<8x128xf32>
    %163 = arith.mulf %161, %138 : vector<8x128xf32>
    %164 = arith.mulf %160, %159 : vector<8x128xf32>
    %165 = arith.addf %163, %164 : vector<8x128xf32>
    %166 = math.tanh %165 : vector<8x128xf32>
    %167 = arith.mulf %162, %166 : vector<8x128xf32>
    %168 = arith.truncf %167 : vector<8x128xf32> to vector<8x128xbf16>
    %169 = arith.index_cast %145 : i32 to index
    %c0_49 = arith.constant 0 : index
    %170 = vector.load %arg10[%169, %c0_49] : memref<64x128xbf16, #tpu.memory_space<vmem>>, vector<8x128xbf16>
    tpu.vector_store %arg10[%169, %c0_49], %168 {strides = array<i32>} : memref<64x128xbf16, #tpu.memory_space<vmem>>, vector<8x128xbf16>,
    %c6_i32 = arith.constant 6 : i32
    %c8_i32_50 = arith.constant 8 : i32
    %171 = arith.muli %c6_i32, %c8_i32_50 : i32
    %172 = tpu.assume_multiple %171, 8 : i32
    %173 = arith.index_cast %172 : i32 to index
    %c0_51 = arith.constant 0 : index
    %174 = vector.load %arg12[%173, %c0_51] : memref<64x512xf32, #tpu.memory_space<vmem>>, vector<8x512xf32>
    %175 = arith.truncf %167 : vector<8x128xf32> to vector<8x128xbf16>
    %c0_52 = arith.constant 0 : index
    %c0_53 = arith.constant 0 : index
    %176 = vector.load %arg2[%c0_52, %c0_53] : memref<128x512xbf16, #tpu.memory_space<vmem>>, vector<128x512xbf16>
    %cst_54 = arith.constant dense<0.000000e+00> : vector<8x512xf32>
    %177 = tpu.matmul %175, %176, %cst_54 {dimension_numbers = #tpu.dot_dimension_numbers<[1], [0], [0], [1], [0, 0, 1, 1], [], []>} : vector<8x128xbf16>, vector<128x512xbf16>, vector<8x512xf32> -> vector<8x512xf32>
    %178 = arith.addf %174, %177 : vector<8x512xf32>
    %179 = vector.extract_strided_slice %178 {offsets = [0, 0], sizes = [8, 384], strides = [1, 1]} : vector<8x512xf32> to vector<8x384xf32>
    %180 = arith.negf %179 : vector<8x384xf32>
    %181 = math.exp %180 : vector<8x384xf32>
    %cst_55 = arith.constant 1.000000e+00 : f32
    %182 = vector.broadcast %cst_55 : f32 to vector<8x384xf32>
    %183 = arith.addf %182, %181 : vector<8x384xf32>
    %184 = arith.divf %182, %183 : vector<8x384xf32>
    %185 = vector.extract_strided_slice %178 {offsets = [0, 384], sizes = [8, 128], strides = [1, 1]} : vector<8x512xf32> to vector<8x128xf32>
    %186 = math.tanh %185 : vector<8x128xf32>
    %187 = vector.extract_strided_slice %184 {offsets = [0, 0], sizes = [8, 128], strides = [1, 1]} : vector<8x384xf32> to vector<8x128xf32>
    %188 = vector.extract_strided_slice %184 {offsets = [0, 128], sizes = [8, 128], strides = [1, 1]} : vector<8x384xf32> to vector<8x128xf32>
    %189 = vector.extract_strided_slice %184 {offsets = [0, 256], sizes = [8, 128], strides = [1, 1]} : vector<8x384xf32> to vector<8x128xf32>
    %190 = arith.mulf %188, %165 : vector<8x128xf32>
    %191 = arith.mulf %187, %186 : vector<8x128xf32>
    %192 = arith.addf %190, %191 : vector<8x128xf32>
    %193 = math.tanh %192 : vector<8x128xf32>
    %194 = arith.mulf %189, %193 : vector<8x128xf32>
    %195 = arith.truncf %194 : vector<8x128xf32> to vector<8x128xbf16>
    %196 = arith.index_cast %172 : i32 to index
    %c0_56 = arith.constant 0 : index
    %197 = vector.load %arg10[%196, %c0_56] : memref<64x128xbf16, #tpu.memory_space<vmem>>, vector<8x128xbf16>
    tpu.vector_store %arg10[%196, %c0_56], %195 {strides = array<i32>} : memref<64x128xbf16, #tpu.memory_space<vmem>>, vector<8x128xbf16>,
    %c7_i32 = arith.constant 7 : i32
    %c8_i32_57 = arith.constant 8 : i32
    %198 = arith.muli %c7_i32, %c8_i32_57 : i32
    %199 = tpu.assume_multiple %198, 8 : i32
    %200 = arith.index_cast %199 : i32 to index
    %c0_58 = arith.constant 0 : index
    %201 = vector.load %arg12[%200, %c0_58] : memref<64x512xf32, #tpu.memory_space<vmem>>, vector<8x512xf32>
    %202 = arith.truncf %194 : vector<8x128xf32> to vector<8x128xbf16>
    %c0_59 = arith.constant 0 : index
    %c0_60 = arith.constant 0 : index
    %203 = vector.load %arg2[%c0_59, %c0_60] : memref<128x512xbf16, #tpu.memory_space<vmem>>, vector<128x512xbf16>
    %cst_61 = arith.constant dense<0.000000e+00> : vector<8x512xf32>
    %204 = tpu.matmul %202, %203, %cst_61 {dimension_numbers = #tpu.dot_dimension_numbers<[1], [0], [0], [1], [0, 0, 1, 1], [], []>} : vector<8x128xbf16>, vector<128x512xbf16>, vector<8x512xf32> -> vector<8x512xf32>
    %205 = arith.addf %201, %204 : vector<8x512xf32>
    %206 = vector.extract_strided_slice %205 {offsets = [0, 0], sizes = [8, 384], strides = [1, 1]} : vector<8x512xf32> to vector<8x384xf32>
    %207 = arith.negf %206 : vector<8x384xf32>
    %208 = math.exp %207 : vector<8x384xf32>
    %cst_62 = arith.constant 1.000000e+00 : f32
    %209 = vector.broadcast %cst_62 : f32 to vector<8x384xf32>
    %210 = arith.addf %209, %208 : vector<8x384xf32>
    %211 = arith.divf %209, %210 : vector<8x384xf32>
    %212 = vector.extract_strided_slice %205 {offsets = [0, 384], sizes = [8, 128], strides = [1, 1]} : vector<8x512xf32> to vector<8x128xf32>
    %213 = math.tanh %212 : vector<8x128xf32>
    %214 = vector.extract_strided_slice %211 {offsets = [0, 0], sizes = [8, 128], strides = [1, 1]} : vector<8x384xf32> to vector<8x128xf32>
    %215 = vector.extract_strided_slice %211 {offsets = [0, 128], sizes = [8, 128], strides = [1, 1]} : vector<8x384xf32> to vector<8x128xf32>
    %216 = vector.extract_strided_slice %211 {offsets = [0, 256], sizes = [8, 128], strides = [1, 1]} : vector<8x384xf32> to vector<8x128xf32>
    %217 = arith.mulf %215, %192 : vector<8x128xf32>
    %218 = arith.mulf %214, %213 : vector<8x128xf32>
    %219 = arith.addf %217, %218 : vector<8x128xf32>
    %220 = math.tanh %219 : vector<8x128xf32>
    %221 = arith.mulf %216, %220 : vector<8x128xf32>
    %222 = arith.truncf %221 : vector<8x128xf32> to vector<8x128xbf16>
    %223 = arith.index_cast %199 : i32 to index
    %c0_63 = arith.constant 0 : index
    %224 = vector.load %arg10[%223, %c0_63] : memref<64x128xbf16, #tpu.memory_space<vmem>>, vector<8x128xbf16>
    tpu.vector_store %arg10[%223, %c0_63], %222 {strides = array<i32>} : memref<64x128xbf16, #tpu.memory_space<vmem>>, vector<8x128xbf16>,
    %c8_i32_64 = arith.constant 8 : i32
    %c0_65 = arith.constant 0 : index
    %c0_66 = arith.constant 0 : index
    %225 = vector.load %arg10[%c0_65, %c0_66] : memref<64x128xbf16, #tpu.memory_space<vmem>>, vector<64x128xbf16>
    %c0_67 = arith.constant 0 : index
    %c0_68 = arith.constant 0 : index
    %226 = vector.load %arg4[%c0_67, %c0_68] : memref<128x512xbf16, #tpu.memory_space<vmem>>, vector<128x512xbf16>
    %cst_69 = arith.constant dense<0.000000e+00> : vector<64x512xf32>
    %227 = tpu.matmul %225, %226, %cst_69 {dimension_numbers = #tpu.dot_dimension_numbers<[1], [0], [0], [1], [0, 0, 1, 1], [], []>} : vector<64x128xbf16>, vector<128x512xbf16>, vector<64x512xf32> -> vector<64x512xf32>
    %c0_70 = arith.constant 0 : index
    %c0_71 = arith.constant 0 : index
    %228 = vector.load %arg6[%c0_70, %c0_71] : memref<1x512xf32, #tpu.memory_space<vmem>>, vector<1x512xf32>
    %229 = vector.broadcast %228 : vector<1x512xf32> to vector<64x512xf32>
    %230 = arith.addf %227, %229 : vector<64x512xf32>
    %c0_72 = arith.constant 0 : index
    %c0_73 = arith.constant 0 : index
    %231 = vector.load %arg12[%c0_72, %c0_73] : memref<64x512xf32, #tpu.memory_space<vmem>>, vector<64x512xf32>
    tpu.vector_store %arg12[%c0_72, %c0_73], %230 {strides = array<i32>} : memref<64x512xf32, #tpu.memory_space<vmem>>, vector<64x512xf32>,
    %cst_74 = arith.constant 0.000000e+00 : f32
    %232 = vector.broadcast %cst_74 : f32 to vector<8x128xf32>
    %cst_75 = arith.constant 0.000000e+00 : f32
    %233 = vector.broadcast %cst_75 : f32 to vector<8x128xf32>
    %c0_i32_76 = arith.constant 0 : i32
    %c8_i32_77 = arith.constant 8 : i32
    %234 = arith.muli %c0_i32_76, %c8_i32_77 : i32
    %235 = tpu.assume_multiple %234, 8 : i32
    %236 = arith.index_cast %235 : i32 to index
    %c0_78 = arith.constant 0 : index
    %237 = vector.load %arg12[%236, %c0_78] : memref<64x512xf32, #tpu.memory_space<vmem>>, vector<8x512xf32>
    %238 = arith.truncf %232 : vector<8x128xf32> to vector<8x128xbf16>
    %c0_79 = arith.constant 0 : index
    %c0_80 = arith.constant 0 : index
    %239 = vector.load %arg5[%c0_79, %c0_80] : memref<128x512xbf16, #tpu.memory_space<vmem>>, vector<128x512xbf16>
    %cst_81 = arith.constant dense<0.000000e+00> : vector<8x512xf32>
    %240 = tpu.matmul %238, %239, %cst_81 {dimension_numbers = #tpu.dot_dimension_numbers<[1], [0], [0], [1], [0, 0, 1, 1], [], []>} : vector<8x128xbf16>, vector<128x512xbf16>, vector<8x512xf32> -> vector<8x512xf32>
    %241 = arith.addf %237, %240 : vector<8x512xf32>
    %242 = vector.extract_strided_slice %241 {offsets = [0, 0], sizes = [8, 384], strides = [1, 1]} : vector<8x512xf32> to vector<8x384xf32>
    %243 = arith.negf %242 : vector<8x384xf32>
    %244 = math.exp %243 : vector<8x384xf32>
    %cst_82 = arith.constant 1.000000e+00 : f32
    %245 = vector.broadcast %cst_82 : f32 to vector<8x384xf32>
    %246 = arith.addf %245, %244 : vector<8x384xf32>
    %247 = arith.divf %245, %246 : vector<8x384xf32>
    %248 = vector.extract_strided_slice %241 {offsets = [0, 384], sizes = [8, 128], strides = [1, 1]} : vector<8x512xf32> to vector<8x128xf32>
    %249 = math.tanh %248 : vector<8x128xf32>
    %250 = vector.extract_strided_slice %247 {offsets = [0, 0], sizes = [8, 128], strides = [1, 1]} : vector<8x384xf32> to vector<8x128xf32>
    %251 = vector.extract_strided_slice %247 {offsets = [0, 128], sizes = [8, 128], strides = [1, 1]} : vector<8x384xf32> to vector<8x128xf32>
    %252 = vector.extract_strided_slice %247 {offsets = [0, 256], sizes = [8, 128], strides = [1, 1]} : vector<8x384xf32> to vector<8x128xf32>
    %253 = arith.mulf %251, %233 : vector<8x128xf32>
    %254 = arith.mulf %250, %249 : vector<8x128xf32>
    %255 = arith.addf %253, %254 : vector<8x128xf32>
    %256 = math.tanh %255 : vector<8x128xf32>
    %257 = arith.mulf %252, %256 : vector<8x128xf32>
    %c1_i32_83 = arith.constant 1 : i32
    %c8_i32_84 = arith.constant 8 : i32
    %258 = arith.muli %c1_i32_83, %c8_i32_84 : i32
    %259 = tpu.assume_multiple %258, 8 : i32
    %260 = arith.index_cast %259 : i32 to index
    %c0_85 = arith.constant 0 : index
    %261 = vector.load %arg12[%260, %c0_85] : memref<64x512xf32, #tpu.memory_space<vmem>>, vector<8x512xf32>
    %262 = arith.truncf %257 : vector<8x128xf32> to vector<8x128xbf16>
    %c0_86 = arith.constant 0 : index
    %c0_87 = arith.constant 0 : index
    %263 = vector.load %arg5[%c0_86, %c0_87] : memref<128x512xbf16, #tpu.memory_space<vmem>>, vector<128x512xbf16>
    %cst_88 = arith.constant dense<0.000000e+00> : vector<8x512xf32>
    %264 = tpu.matmul %262, %263, %cst_88 {dimension_numbers = #tpu.dot_dimension_numbers<[1], [0], [0], [1], [0, 0, 1, 1], [], []>} : vector<8x128xbf16>, vector<128x512xbf16>, vector<8x512xf32> -> vector<8x512xf32>
    %265 = arith.addf %261, %264 : vector<8x512xf32>
    %266 = vector.extract_strided_slice %265 {offsets = [0, 0], sizes = [8, 384], strides = [1, 1]} : vector<8x512xf32> to vector<8x384xf32>
    %267 = arith.negf %266 : vector<8x384xf32>
    %268 = math.exp %267 : vector<8x384xf32>
    %cst_89 = arith.constant 1.000000e+00 : f32
    %269 = vector.broadcast %cst_89 : f32 to vector<8x384xf32>
    %270 = arith.addf %269, %268 : vector<8x384xf32>
    %271 = arith.divf %269, %270 : vector<8x384xf32>
    %272 = vector.extract_strided_slice %265 {offsets = [0, 384], sizes = [8, 128], strides = [1, 1]} : vector<8x512xf32> to vector<8x128xf32>
    %273 = math.tanh %272 : vector<8x128xf32>
    %274 = vector.extract_strided_slice %271 {offsets = [0, 0], sizes = [8, 128], strides = [1, 1]} : vector<8x384xf32> to vector<8x128xf32>
    %275 = vector.extract_strided_slice %271 {offsets = [0, 128], sizes = [8, 128], strides = [1, 1]} : vector<8x384xf32> to vector<8x128xf32>
    %276 = vector.extract_strided_slice %271 {offsets = [0, 256], sizes = [8, 128], strides = [1, 1]} : vector<8x384xf32> to vector<8x128xf32>
    %277 = arith.mulf %275, %255 : vector<8x128xf32>
    %278 = arith.mulf %274, %273 : vector<8x128xf32>
    %279 = arith.addf %277, %278 : vector<8x128xf32>
    %280 = math.tanh %279 : vector<8x128xf32>
    %281 = arith.mulf %276, %280 : vector<8x128xf32>
    %c2_i32_90 = arith.constant 2 : i32
    %c8_i32_91 = arith.constant 8 : i32
    %282 = arith.muli %c2_i32_90, %c8_i32_91 : i32
    %283 = tpu.assume_multiple %282, 8 : i32
    %284 = arith.index_cast %283 : i32 to index
    %c0_92 = arith.constant 0 : index
    %285 = vector.load %arg12[%284, %c0_92] : memref<64x512xf32, #tpu.memory_space<vmem>>, vector<8x512xf32>
    %286 = arith.truncf %281 : vector<8x128xf32> to vector<8x128xbf16>
    %c0_93 = arith.constant 0 : index
    %c0_94 = arith.constant 0 : index
    %287 = vector.load %arg5[%c0_93, %c0_94] : memref<128x512xbf16, #tpu.memory_space<vmem>>, vector<128x512xbf16>
    %cst_95 = arith.constant dense<0.000000e+00> : vector<8x512xf32>
    %288 = tpu.matmul %286, %287, %cst_95 {dimension_numbers = #tpu.dot_dimension_numbers<[1], [0], [0], [1], [0, 0, 1, 1], [], []>} : vector<8x128xbf16>, vector<128x512xbf16>, vector<8x512xf32> -> vector<8x512xf32>
    %289 = arith.addf %285, %288 : vector<8x512xf32>
    %290 = vector.extract_strided_slice %289 {offsets = [0, 0], sizes = [8, 384], strides = [1, 1]} : vector<8x512xf32> to vector<8x384xf32>
    %291 = arith.negf %290 : vector<8x384xf32>
    %292 = math.exp %291 : vector<8x384xf32>
    %cst_96 = arith.constant 1.000000e+00 : f32
    %293 = vector.broadcast %cst_96 : f32 to vector<8x384xf32>
    %294 = arith.addf %293, %292 : vector<8x384xf32>
    %295 = arith.divf %293, %294 : vector<8x384xf32>
    %296 = vector.extract_strided_slice %289 {offsets = [0, 384], sizes = [8, 128], strides = [1, 1]} : vector<8x512xf32> to vector<8x128xf32>
    %297 = math.tanh %296 : vector<8x128xf32>
    %298 = vector.extract_strided_slice %295 {offsets = [0, 0], sizes = [8, 128], strides = [1, 1]} : vector<8x384xf32> to vector<8x128xf32>
    %299 = vector.extract_strided_slice %295 {offsets = [0, 128], sizes = [8, 128], strides = [1, 1]} : vector<8x384xf32> to vector<8x128xf32>
    %300 = vector.extract_strided_slice %295 {offsets = [0, 256], sizes = [8, 128], strides = [1, 1]} : vector<8x384xf32> to vector<8x128xf32>
    %301 = arith.mulf %299, %279 : vector<8x128xf32>
    %302 = arith.mulf %298, %297 : vector<8x128xf32>
    %303 = arith.addf %301, %302 : vector<8x128xf32>
    %304 = math.tanh %303 : vector<8x128xf32>
    %305 = arith.mulf %300, %304 : vector<8x128xf32>
    %c3_i32_97 = arith.constant 3 : i32
    %c8_i32_98 = arith.constant 8 : i32
    %306 = arith.muli %c3_i32_97, %c8_i32_98 : i32
    %307 = tpu.assume_multiple %306, 8 : i32
    %308 = arith.index_cast %307 : i32 to index
    %c0_99 = arith.constant 0 : index
    %309 = vector.load %arg12[%308, %c0_99] : memref<64x512xf32, #tpu.memory_space<vmem>>, vector<8x512xf32>
    %310 = arith.truncf %305 : vector<8x128xf32> to vector<8x128xbf16>
    %c0_100 = arith.constant 0 : index
    %c0_101 = arith.constant 0 : index
    %311 = vector.load %arg5[%c0_100, %c0_101] : memref<128x512xbf16, #tpu.memory_space<vmem>>, vector<128x512xbf16>
    %cst_102 = arith.constant dense<0.000000e+00> : vector<8x512xf32>
    %312 = tpu.matmul %310, %311, %cst_102 {dimension_numbers = #tpu.dot_dimension_numbers<[1], [0], [0], [1], [0, 0, 1, 1], [], []>} : vector<8x128xbf16>, vector<128x512xbf16>, vector<8x512xf32> -> vector<8x512xf32>
    %313 = arith.addf %309, %312 : vector<8x512xf32>
    %314 = vector.extract_strided_slice %313 {offsets = [0, 0], sizes = [8, 384], strides = [1, 1]} : vector<8x512xf32> to vector<8x384xf32>
    %315 = arith.negf %314 : vector<8x384xf32>
    %316 = math.exp %315 : vector<8x384xf32>
    %cst_103 = arith.constant 1.000000e+00 : f32
    %317 = vector.broadcast %cst_103 : f32 to vector<8x384xf32>
    %318 = arith.addf %317, %316 : vector<8x384xf32>
    %319 = arith.divf %317, %318 : vector<8x384xf32>
    %320 = vector.extract_strided_slice %313 {offsets = [0, 384], sizes = [8, 128], strides = [1, 1]} : vector<8x512xf32> to vector<8x128xf32>
    %321 = math.tanh %320 : vector<8x128xf32>
    %322 = vector.extract_strided_slice %319 {offsets = [0, 0], sizes = [8, 128], strides = [1, 1]} : vector<8x384xf32> to vector<8x128xf32>
    %323 = vector.extract_strided_slice %319 {offsets = [0, 128], sizes = [8, 128], strides = [1, 1]} : vector<8x384xf32> to vector<8x128xf32>
    %324 = vector.extract_strided_slice %319 {offsets = [0, 256], sizes = [8, 128], strides = [1, 1]} : vector<8x384xf32> to vector<8x128xf32>
    %325 = arith.mulf %323, %303 : vector<8x128xf32>
    %326 = arith.mulf %322, %321 : vector<8x128xf32>
    %327 = arith.addf %325, %326 : vector<8x128xf32>
    %328 = math.tanh %327 : vector<8x128xf32>
    %329 = arith.mulf %324, %328 : vector<8x128xf32>
    %c4_i32_104 = arith.constant 4 : i32
    %c8_i32_105 = arith.constant 8 : i32
    %330 = arith.muli %c4_i32_104, %c8_i32_105 : i32
    %331 = tpu.assume_multiple %330, 8 : i32
    %332 = arith.index_cast %331 : i32 to index
    %c0_106 = arith.constant 0 : index
    %333 = vector.load %arg12[%332, %c0_106] : memref<64x512xf32, #tpu.memory_space<vmem>>, vector<8x512xf32>
    %334 = arith.truncf %329 : vector<8x128xf32> to vector<8x128xbf16>
    %c0_107 = arith.constant 0 : index
    %c0_108 = arith.constant 0 : index
    %335 = vector.load %arg5[%c0_107, %c0_108] : memref<128x512xbf16, #tpu.memory_space<vmem>>, vector<128x512xbf16>
    %cst_109 = arith.constant dense<0.000000e+00> : vector<8x512xf32>
    %336 = tpu.matmul %334, %335, %cst_109 {dimension_numbers = #tpu.dot_dimension_numbers<[1], [0], [0], [1], [0, 0, 1, 1], [], []>} : vector<8x128xbf16>, vector<128x512xbf16>, vector<8x512xf32> -> vector<8x512xf32>
    %337 = arith.addf %333, %336 : vector<8x512xf32>
    %338 = vector.extract_strided_slice %337 {offsets = [0, 0], sizes = [8, 384], strides = [1, 1]} : vector<8x512xf32> to vector<8x384xf32>
    %339 = arith.negf %338 : vector<8x384xf32>
    %340 = math.exp %339 : vector<8x384xf32>
    %cst_110 = arith.constant 1.000000e+00 : f32
    %341 = vector.broadcast %cst_110 : f32 to vector<8x384xf32>
    %342 = arith.addf %341, %340 : vector<8x384xf32>
    %343 = arith.divf %341, %342 : vector<8x384xf32>
    %344 = vector.extract_strided_slice %337 {offsets = [0, 384], sizes = [8, 128], strides = [1, 1]} : vector<8x512xf32> to vector<8x128xf32>
    %345 = math.tanh %344 : vector<8x128xf32>
    %346 = vector.extract_strided_slice %343 {offsets = [0, 0], sizes = [8, 128], strides = [1, 1]} : vector<8x384xf32> to vector<8x128xf32>
    %347 = vector.extract_strided_slice %343 {offsets = [0, 128], sizes = [8, 128], strides = [1, 1]} : vector<8x384xf32> to vector<8x128xf32>
    %348 = vector.extract_strided_slice %343 {offsets = [0, 256], sizes = [8, 128], strides = [1, 1]} : vector<8x384xf32> to vector<8x128xf32>
    %349 = arith.mulf %347, %327 : vector<8x128xf32>
    %350 = arith.mulf %346, %345 : vector<8x128xf32>
    %351 = arith.addf %349, %350 : vector<8x128xf32>
    %352 = math.tanh %351 : vector<8x128xf32>
    %353 = arith.mulf %348, %352 : vector<8x128xf32>
    %c5_i32_111 = arith.constant 5 : i32
    %c8_i32_112 = arith.constant 8 : i32
    %354 = arith.muli %c5_i32_111, %c8_i32_112 : i32
    %355 = tpu.assume_multiple %354, 8 : i32
    %356 = arith.index_cast %355 : i32 to index
    %c0_113 = arith.constant 0 : index
    %357 = vector.load %arg12[%356, %c0_113] : memref<64x512xf32, #tpu.memory_space<vmem>>, vector<8x512xf32>
    %358 = arith.truncf %353 : vector<8x128xf32> to vector<8x128xbf16>
    %c0_114 = arith.constant 0 : index
    %c0_115 = arith.constant 0 : index
    %359 = vector.load %arg5[%c0_114, %c0_115] : memref<128x512xbf16, #tpu.memory_space<vmem>>, vector<128x512xbf16>
    %cst_116 = arith.constant dense<0.000000e+00> : vector<8x512xf32>
    %360 = tpu.matmul %358, %359, %cst_116 {dimension_numbers = #tpu.dot_dimension_numbers<[1], [0], [0], [1], [0, 0, 1, 1], [], []>} : vector<8x128xbf16>, vector<128x512xbf16>, vector<8x512xf32> -> vector<8x512xf32>
    %361 = arith.addf %357, %360 : vector<8x512xf32>
    %362 = vector.extract_strided_slice %361 {offsets = [0, 0], sizes = [8, 384], strides = [1, 1]} : vector<8x512xf32> to vector<8x384xf32>
    %363 = arith.negf %362 : vector<8x384xf32>
    %364 = math.exp %363 : vector<8x384xf32>
    %cst_117 = arith.constant 1.000000e+00 : f32
    %365 = vector.broadcast %cst_117 : f32 to vector<8x384xf32>
    %366 = arith.addf %365, %364 : vector<8x384xf32>
    %367 = arith.divf %365, %366 : vector<8x384xf32>
    %368 = vector.extract_strided_slice %361 {offsets = [0, 384], sizes = [8, 128], strides = [1, 1]} : vector<8x512xf32> to vector<8x128xf32>
    %369 = math.tanh %368 : vector<8x128xf32>
    %370 = vector.extract_strided_slice %367 {offsets = [0, 0], sizes = [8, 128], strides = [1, 1]} : vector<8x384xf32> to vector<8x128xf32>
    %371 = vector.extract_strided_slice %367 {offsets = [0, 128], sizes = [8, 128], strides = [1, 1]} : vector<8x384xf32> to vector<8x128xf32>
    %372 = vector.extract_strided_slice %367 {offsets = [0, 256], sizes = [8, 128], strides = [1, 1]} : vector<8x384xf32> to vector<8x128xf32>
    %373 = arith.mulf %371, %351 : vector<8x128xf32>
    %374 = arith.mulf %370, %369 : vector<8x128xf32>
    %375 = arith.addf %373, %374 : vector<8x128xf32>
    %376 = math.tanh %375 : vector<8x128xf32>
    %377 = arith.mulf %372, %376 : vector<8x128xf32>
    %c6_i32_118 = arith.constant 6 : i32
    %c8_i32_119 = arith.constant 8 : i32
    %378 = arith.muli %c6_i32_118, %c8_i32_119 : i32
    %379 = tpu.assume_multiple %378, 8 : i32
    %380 = arith.index_cast %379 : i32 to index
    %c0_120 = arith.constant 0 : index
    %381 = vector.load %arg12[%380, %c0_120] : memref<64x512xf32, #tpu.memory_space<vmem>>, vector<8x512xf32>
    %382 = arith.truncf %377 : vector<8x128xf32> to vector<8x128xbf16>
    %c0_121 = arith.constant 0 : index
    %c0_122 = arith.constant 0 : index
    %383 = vector.load %arg5[%c0_121, %c0_122] : memref<128x512xbf16, #tpu.memory_space<vmem>>, vector<128x512xbf16>
    %cst_123 = arith.constant dense<0.000000e+00> : vector<8x512xf32>
    %384 = tpu.matmul %382, %383, %cst_123 {dimension_numbers = #tpu.dot_dimension_numbers<[1], [0], [0], [1], [0, 0, 1, 1], [], []>} : vector<8x128xbf16>, vector<128x512xbf16>, vector<8x512xf32> -> vector<8x512xf32>
    %385 = arith.addf %381, %384 : vector<8x512xf32>
    %386 = vector.extract_strided_slice %385 {offsets = [0, 0], sizes = [8, 384], strides = [1, 1]} : vector<8x512xf32> to vector<8x384xf32>
    %387 = arith.negf %386 : vector<8x384xf32>
    %388 = math.exp %387 : vector<8x384xf32>
    %cst_124 = arith.constant 1.000000e+00 : f32
    %389 = vector.broadcast %cst_124 : f32 to vector<8x384xf32>
    %390 = arith.addf %389, %388 : vector<8x384xf32>
    %391 = arith.divf %389, %390 : vector<8x384xf32>
    %392 = vector.extract_strided_slice %385 {offsets = [0, 384], sizes = [8, 128], strides = [1, 1]} : vector<8x512xf32> to vector<8x128xf32>
    %393 = math.tanh %392 : vector<8x128xf32>
    %394 = vector.extract_strided_slice %391 {offsets = [0, 0], sizes = [8, 128], strides = [1, 1]} : vector<8x384xf32> to vector<8x128xf32>
    %395 = vector.extract_strided_slice %391 {offsets = [0, 128], sizes = [8, 128], strides = [1, 1]} : vector<8x384xf32> to vector<8x128xf32>
    %396 = vector.extract_strided_slice %391 {offsets = [0, 256], sizes = [8, 128], strides = [1, 1]} : vector<8x384xf32> to vector<8x128xf32>
    %397 = arith.mulf %395, %375 : vector<8x128xf32>
    %398 = arith.mulf %394, %393 : vector<8x128xf32>
    %399 = arith.addf %397, %398 : vector<8x128xf32>
    %400 = math.tanh %399 : vector<8x128xf32>
    %401 = arith.mulf %396, %400 : vector<8x128xf32>
    %c7_i32_125 = arith.constant 7 : i32
    %c8_i32_126 = arith.constant 8 : i32
    %402 = arith.muli %c7_i32_125, %c8_i32_126 : i32
    %403 = tpu.assume_multiple %402, 8 : i32
    %404 = arith.index_cast %403 : i32 to index
    %c0_127 = arith.constant 0 : index
    %405 = vector.load %arg12[%404, %c0_127] : memref<64x512xf32, #tpu.memory_space<vmem>>, vector<8x512xf32>
    %406 = arith.truncf %401 : vector<8x128xf32> to vector<8x128xbf16>
    %c0_128 = arith.constant 0 : index
    %c0_129 = arith.constant 0 : index
    %407 = vector.load %arg5[%c0_128, %c0_129] : memref<128x512xbf16, #tpu.memory_space<vmem>>, vector<128x512xbf16>
    %cst_130 = arith.constant dense<0.000000e+00> : vector<8x512xf32>
    %408 = tpu.matmul %406, %407, %cst_130 {dimension_numbers = #tpu.dot_dimension_numbers<[1], [0], [0], [1], [0, 0, 1, 1], [], []>} : vector<8x128xbf16>, vector<128x512xbf16>, vector<8x512xf32> -> vector<8x512xf32>
    %409 = arith.addf %405, %408 : vector<8x512xf32>
    %410 = vector.extract_strided_slice %409 {offsets = [0, 0], sizes = [8, 384], strides = [1, 1]} : vector<8x512xf32> to vector<8x384xf32>
    %411 = arith.negf %410 : vector<8x384xf32>
    %412 = math.exp %411 : vector<8x384xf32>
    %cst_131 = arith.constant 1.000000e+00 : f32
    %413 = vector.broadcast %cst_131 : f32 to vector<8x384xf32>
    %414 = arith.addf %413, %412 : vector<8x384xf32>
    %415 = arith.divf %413, %414 : vector<8x384xf32>
    %416 = vector.extract_strided_slice %409 {offsets = [0, 384], sizes = [8, 128], strides = [1, 1]} : vector<8x512xf32> to vector<8x128xf32>
    %417 = math.tanh %416 : vector<8x128xf32>
    %418 = vector.extract_strided_slice %415 {offsets = [0, 0], sizes = [8, 128], strides = [1, 1]} : vector<8x384xf32> to vector<8x128xf32>
    %419 = vector.extract_strided_slice %415 {offsets = [0, 128], sizes = [8, 128], strides = [1, 1]} : vector<8x384xf32> to vector<8x128xf32>
    %420 = vector.extract_strided_slice %415 {offsets = [0, 256], sizes = [8, 128], strides = [1, 1]} : vector<8x384xf32> to vector<8x128xf32>
    %421 = arith.mulf %419, %399 : vector<8x128xf32>
    %422 = arith.mulf %418, %417 : vector<8x128xf32>
    %423 = arith.addf %421, %422 : vector<8x128xf32>
    %424 = math.tanh %423 : vector<8x128xf32>
    %425 = arith.mulf %420, %424 : vector<8x128xf32>
    %c8_i32_132 = arith.constant 8 : i32
    %c0_133 = arith.constant 0 : index
    %c0_134 = arith.constant 0 : index
    %426 = vector.load %arg7[%c0_133, %c0_134] : memref<128x128xf32, #tpu.memory_space<vmem>>, vector<128x128xf32>
    %cst_135 = arith.constant dense<0.000000e+00> : vector<8x128xf32>
    %427 = tpu.matmul %425, %426, %cst_135 {dimension_numbers = #tpu.dot_dimension_numbers<[1], [0], [0], [1], [0, 0, 1, 1], [], []>} : vector<8x128xf32>, vector<128x128xf32>, vector<8x128xf32> -> vector<8x128xf32>
    %c0_136 = arith.constant 0 : index
    %c0_137 = arith.constant 0 : index
    %428 = vector.load %arg8[%c0_136, %c0_137] : memref<1x128xf32, #tpu.memory_space<vmem>>, vector<1x128xf32>
    %429 = vector.broadcast %428 : vector<1x128xf32> to vector<8x128xf32>
    %430 = arith.addf %427, %429 : vector<8x128xf32>
    %c0_138 = arith.constant 0 : index
    %c0_139 = arith.constant 0 : index
    %431 = vector.load %arg9[%c0_138, %c0_139] : memref<8x128xf32, #tpu.memory_space<vmem>>, vector<8x128xf32>
    tpu.vector_store %arg9[%c0_138, %c0_139], %430 {strides = array<i32>} : memref<8x128xf32, #tpu.memory_space<vmem>>, vector<8x128xf32>,
    return
  }
}

</mosaic_0001>

<llo_original>
// kernel: forward.1
$region0: #{forward.1}
  #allocation0 [shape = 'u32[]', space=smem, size = 0x4, offset = 0x4, fixed_abs, tag = 'smem constant byte address 0x4 - core index']
  #allocation1 [shape = 'u32[72,128]{1,0:T(1,128)}', space=vmem, size = 0x9000, scoped, tag = 'internal scratch']
  #allocation2 [shape = 'bf16[64,128]{1,0:T(8,128)(2,1)}', space=vmem, size = 0x4000, scoped, tag = 'scratch operand']
  #allocation3 [shape = 'bf16[64,128]{1,0:T(8,128)(2,1)}', space=vmem, size = 0x4000, scoped, tag = 'scratch operand']
  #allocation4 [shape = 'f32[64,512]{1,0:T(8,128)}', space=vmem, size = 0x20000, scoped, tag = 'scratch operand']
  %s0 = inlined_call_operand.vmem [shape: bf16[64,128], index: 0, kind: input, shape index: {}]
  %s1 = inlined_call_operand.hbm [shape: bf16[128,512], index: 1, kind: input, shape index: {}]
  %s2 = inlined_call_operand.hbm [shape: bf16[128,512], index: 2, kind: input, shape index: {}]
  %s3 = inlined_call_operand.vmem [shape: f32[1,512], index: 3, kind: input, shape index: {}]
  %s4 = inlined_call_operand.hbm [shape: bf16[128,512], index: 4, kind: input, shape index: {}]
  %s5 = inlined_call_operand.hbm [shape: bf16[128,512], index: 5, kind: input, shape index: {}]
  %s6 = inlined_call_operand.vmem [shape: f32[1,512], index: 6, kind: input, shape index: {}]
  %s7 = inlined_call_operand.hbm [shape: f32[128,128], index: 7, kind: input, shape index: {}]
  %s8 = inlined_call_operand.vmem [shape: f32[1,128], index: 8, kind: input, shape index: {}]
  %s9 = inlined_call_operand.vmem [shape: f32[8,128], index: 9, kind: output, shape index: {}]
  %s10 = sld [smem:[#allocation0]]
  $region66: #{forward.1} parent=0
    _
  %s12 = ssub.s32 1, %s10
  %s13 = scalar_select 0, %s12, %s10
  $region1: #{forward.1} parent=0
    #allocation5 [shape = 'u8[131072]{0}', space=vmem, size = 0x20000, scoped, tag = 'input window, operand 1, single buffered']
    #allocation6 [shape = 's32[1]{0}', space=sflag, size = 0x4, scoped, tag = 'scoped memory for forward.1']
    #allocation7 [shape = 'u8[131072]{0}', space=vmem, size = 0x20000, scoped, tag = 'input window, operand 2, single buffered']
    #allocation8 [shape = 's32[1]{0}', space=sflag, size = 0x4, scoped, tag = 'scoped memory for forward.1']
    #allocation9 [shape = 'u8[131072]{0}', space=vmem, size = 0x20000, scoped, tag = 'input window, operand 4, single buffered']
    #allocation10 [shape = 'u8[131072]{0}', space=vmem, size = 0x20000, scoped, tag = 'input window, operand 5, single buffered']
    #allocation11 [shape = 's32[1]{0}', space=sflag, size = 0x4, scoped, tag = 'scoped memory for forward.1']
    #allocation12 [shape = 'u8[65536]{0}', space=vmem, size = 0x10000, scoped, tag = 'input window, operand 7, single buffered']
    %14 = vsyncpa [#allocation6], 0
    %15 = vsyncpa [#allocation8], 0
    %16 = vsyncpa [#allocation11], 0
    // Predicated region
    $region2: #{forward.1} parent=1 // pred_check
      _
    $region3: #{forward.1} parent=1 // pred_check_branch
      %18 = sbr.rel (0) target = $region5
    $region4: #{forward.1} parent=1 // pred_region
      _
    $region5: #{forward.1} parent=1 // pred_fallthru
      _
    // Predicated region
    $region6: #{forward.1} parent=1 // pred_check
      _
    $region7: #{forward.1} parent=1 // pred_check_branch
      %20 = sbr.rel (0) target = $region9
    $region8: #{forward.1} parent=1 // pred_region
      %22 = vsyncadd [#allocation6], 0
      %s23 = sshll.u32 %s1, 4
      %s24 = int_to_ptr.hbm [resolvable:$true] %s23
      %s25 = sshll.u32 [#allocation5], 4
      %s26 = int_to_ptr.vmem [resolvable:$true] %s25
      %31 = dma.hbm_to_vmem [thread:$0]  %s24, 4096, %s26, [#allocation6], 256, 256, 16
    $region9: #{forward.1} parent=1 // pred_fallthru
      _
    // Predicated region
    $region10: #{forward.1} parent=1 // pred_check
      _
    $region11: #{forward.1} parent=1 // pred_check_branch
      %33 = sbr.rel (0) target = $region13
    $region12: #{forward.1} parent=1 // pred_region
      %35 = vsyncadd [#allocation8], 0
      %s36 = sshll.u32 %s2, 4
      %s37 = int_to_ptr.hbm [resolvable:$true] %s36
      %s38 = sshll.u32 [#allocation7], 4
      %s39 = int_to_ptr.vmem [resolvable:$true] %s38
      %44 = dma.hbm_to_vmem [thread:$0]  %s37, 4096, %s39, [#allocation8], 256, 256, 16
    $region13: #{forward.1} parent=1 // pred_fallthru
      _
    // Predicated region
    $region14: #{forward.1} parent=1 // pred_check
      _
    $region15: #{forward.1} parent=1 // pred_check_branch
      %46 = sbr.rel (0) target = $region17
    $region16: #{forward.1} parent=1 // pred_region
      _
    $region17: #{forward.1} parent=1 // pred_fallthru
      _
    // Predicated region
    $region18: #{forward.1} parent=1 // pred_check
      _
    $region19: #{forward.1} parent=1 // pred_check_branch
      %48 = sbr.rel (0) target = $region21
    $region20: #{forward.1} parent=1 // pred_region
      %50 = vsyncadd [#allocation8], 0
      %s51 = sshll.u32 %s4, 4
      %s52 = int_to_ptr.hbm [resolvable:$true] %s51
      %s53 = sshll.u32 [#allocation9], 4
      %s54 = int_to_ptr.vmem [resolvable:$true] %s53
      %59 = dma.hbm_to_vmem [thread:$0]  %s52, 4096, %s54, [#allocation8], 256, 256, 16
    $region21: #{forward.1} parent=1 // pred_fallthru
      _
    // Predicated region
    $region22: #{forward.1} parent=1 // pred_check
      _
    $region23: #{forward.1} parent=1 // pred_check_branch
      %61 = sbr.rel (0) target = $region25
    $region24: #{forward.1} parent=1 // pred_region
      %63 = vsyncadd [#allocation11], 0
      %s64 = sshll.u32 %s5, 4
      %s65 = int_to_ptr.hbm [resolvable:$true] %s64
      %s66 = sshll.u32 [#allocation10], 4
      %s67 = int_to_ptr.vmem [resolvable:$true] %s66
      %72 = dma.hbm_to_vmem [thread:$0]  %s65, 4096, %s67, [#allocation11], 256, 256, 16
    $region25: #{forward.1} parent=1 // pred_fallthru
      _
    // Predicated region
    $region26: #{forward.1} parent=1 // pred_check
      _
    $region27: #{forward.1} parent=1 // pred_check_branch
      %74 = sbr.rel (0) target = $region29
    $region28: #{forward.1} parent=1 // pred_region
      _
    $region29: #{forward.1} parent=1 // pred_fallthru
      _
    // Predicated region
    $region30: #{forward.1} parent=1 // pred_check
      _
    $region31: #{forward.1} parent=1 // pred_check_branch
      %76 = sbr.rel (0) target = $region33
    $region32: #{forward.1} parent=1 // pred_region
      %78 = vsyncadd [#allocation11], 0
      %s79 = sshll.u32 %s7, 4
      %s80 = int_to_ptr.hbm [resolvable:$true] %s79
      %s81 = sshll.u32 [#allocation12], 4
      %s82 = int_to_ptr.vmem [resolvable:$true] %s81
      %87 = dma.hbm_to_vmem [thread:$0]  %s80, 2048, %s82, [#allocation11], 128, 128, 8
    $region33: #{forward.1} parent=1 // pred_fallthru
      _
    // Predicated region
    $region34: #{forward.1} parent=1 // pred_check
      _
    $region35: #{forward.1} parent=1 // pred_check_branch
      %89 = sbr.rel (0) target = $region37
    $region36: #{forward.1} parent=1 // pred_region
      _
    $region37: #{forward.1} parent=1 // pred_fallthru
      _
    // Predicated region
    $region38: #{forward.1} parent=1 // pred_check
      _
    $region39: #{forward.1} parent=1 // pred_check_branch
      %91 = sbr.rel (0) target = $region41
    $region40: #{forward.1} parent=1 // pred_region
      %93 = dma.done [#allocation6], 4096
    $region41: #{forward.1} parent=1 // pred_fallthru
      _
    // Predicated region
    $region42: #{forward.1} parent=1 // pred_check
      _
    $region43: #{forward.1} parent=1 // pred_check_branch
      %95 = sbr.rel (0) target = $region45
    $region44: #{forward.1} parent=1 // pred_region
      %97 = dma.done [#allocation8], 4096
    $region45: #{forward.1} parent=1 // pred_fallthru
      _
    // Predicated region
    $region46: #{forward.1} parent=1 // pred_check
      _
    $region47: #{forward.1} parent=1 // pred_check_branch
      %99 = sbr.rel (0) target = $region49
    $region48: #{forward.1} parent=1 // pred_region
      %101 = dma.done [#allocation8], 4096
    $region49: #{forward.1} parent=1 // pred_fallthru
      _
    // Predicated region
    $region50: #{forward.1} parent=1 // pred_check
      _
    $region51: #{forward.1} parent=1 // pred_check_branch
      %103 = sbr.rel (0) target = $region53
    $region52: #{forward.1} parent=1 // pred_region
      %105 = dma.done [#allocation11], 4096
    $region53: #{forward.1} parent=1 // pred_fallthru
      _
    // Predicated region
    $region54: #{forward.1} parent=1 // pred_check
      _
    $region55: #{forward.1} parent=1 // pred_check_branch
      %107 = sbr.rel (0) target = $region57
    $region56: #{forward.1} parent=1 // pred_region
      %109 = dma.done [#allocation11], 2048
    $region57: #{forward.1} parent=1 // pred_fallthru
      _
    %v111 = vld [vmem:[%s0] sm:$0xf]
    %v112 = vld [vmem:[%s0 + $0x4] sm:$0xf]
    %v113 = vld [vmem:[%s0 + $0x8] sm:$0xf]
    %v114 = vld [vmem:[%s0 + $0xc] sm:$0xf]
    %v115 = vld [vmem:[%s0 + $0x10] sm:$0xf]
    %v116 = vld [vmem:[%s0 + $0x14] sm:$0xf]
    %v117 = vld [vmem:[%s0 + $0x18] sm:$0xf]
    %v118 = vld [vmem:[%s0 + $0x1c] sm:$0xf]
    %v119 = vld [vmem:[#allocation5] sm:$0xff]
    %v120 = vld [vmem:[#allocation5 + $0x8] sm:$0xff]
    %v121 = vld [vmem:[#allocation5 + $0x10] sm:$0xff]
    %v122 = vld [vmem:[#allocation5 + $0x18] sm:$0xff]
    %v123 = vld [vmem:[#allocation5 + $0x20] sm:$0xff]
    %v124 = vld [vmem:[#allocation5 + $0x28] sm:$0xff]
    %v125 = vld [vmem:[#allocation5 + $0x30] sm:$0xff]
    %v126 = vld [vmem:[#allocation5 + $0x38] sm:$0xff]
    %v127 = vld [vmem:[#allocation5 + $0x40] sm:$0xff]
    %v128 = vld [vmem:[#allocation5 + $0x48] sm:$0xff]
    %v129 = vld [vmem:[#allocation5 + $0x50] sm:$0xff]
    %v130 = vld [vmem:[#allocation5 + $0x58] sm:$0xff]
    %v131 = vld [vmem:[#allocation5 + $0x60] sm:$0xff]
    %v132 = vld [vmem:[#allocation5 + $0x68] sm:$0xff]
    %v133 = vld [vmem:[#allocation5 + $0x70] sm:$0xff]
    %v134 = vld [vmem:[#allocation5 + $0x78] sm:$0xff]
    %v135 = vld [vmem:[#allocation5 + $0x80] sm:$0xff]
    %v136 = vld [vmem:[#allocation5 + $0x88] sm:$0xff]
    %v137 = vld [vmem:[#allocation5 + $0x90] sm:$0xff]
    %v138 = vld [vmem:[#allocation5 + $0x98] sm:$0xff]
    %v139 = vld [vmem:[#allocation5 + $0xa0] sm:$0xff]
    %v140 = vld [vmem:[#allocation5 + $0xa8] sm:$0xff]
    %v141 = vld [vmem:[#allocation5 + $0xb0] sm:$0xff]
    %v142 = vld [vmem:[#allocation5 + $0xb8] sm:$0xff]
    %v143 = vld [vmem:[#allocation5 + $0xc0] sm:$0xff]
    %v144 = vld [vmem:[#allocation5 + $0xc8] sm:$0xff]
    %v145 = vld [vmem:[#allocation5 + $0xd0] sm:$0xff]
    %v146 = vld [vmem:[#allocation5 + $0xd8] sm:$0xff]
    %v147 = vld [vmem:[#allocation5 + $0xe0] sm:$0xff]
    %v148 = vld [vmem:[#allocation5 + $0xe8] sm:$0xff]
    %v149 = vld [vmem:[#allocation5 + $0xf0] sm:$0xff]
    %v150 = vld [vmem:[#allocation5 + $0xf8] sm:$0xff]
    %v151 = vld [vmem:[%s3] sm:$0xf]
    %v153 = vperm.slane %v151, 0
    %v154 = vperm.slane %v151, 1
    %v155 = vperm.slane %v151, 2
    %v156 = vperm.slane %v151, 3
    %v169 = vunpack.c.l.b16 %v111
    %v170 = vunpack.c.l.b16 %v112
    %v171 = vunpack.c.l.b16 %v113
    %v172 = vunpack.c.l.b16 %v114
    %v173 = vunpack.c.l.b16 %v115
    %v174 = vunpack.c.l.b16 %v116
    %v175 = vunpack.c.l.b16 %v117
    %v176 = vunpack.c.l.b16 %v118
    %v177 = vpack.c.b16 %v170, %v169
    %v178 = vpack.c.b16 %v172, %v171
    %v179 = vpack.c.b16 %v174, %v173
    %v180 = vpack.c.b16 %v176, %v175
    %v217 = vunpack.c.l.b16 %v119
    %v218 = vunpack.c.h.b16 %v119
    %v219 = vunpack.c.l.b16 %v120
    %v220 = vunpack.c.h.b16 %v120
    %v221 = vunpack.c.l.b16 %v121
    %v222 = vunpack.c.h.b16 %v121
    %v223 = vunpack.c.l.b16 %v122
    %v224 = vunpack.c.h.b16 %v122
    %v225 = vunpack.c.l.b16 %v123
    %v226 = vunpack.c.h.b16 %v123
    %v227 = vunpack.c.l.b16 %v124
    %v228 = vunpack.c.h.b16 %v124
    %v229 = vunpack.c.l.b16 %v125
    %v230 = vunpack.c.h.b16 %v125
    %v231 = vunpack.c.l.b16 %v126
    %v232 = vunpack.c.h.b16 %v126
    %v233 = vunpack.c.l.b16 %v127
    %v234 = vunpack.c.h.b16 %v127
    %v235 = vunpack.c.l.b16 %v128
    %v236 = vunpack.c.h.b16 %v128
    %v237 = vunpack.c.l.b16 %v129
    %v238 = vunpack.c.h.b16 %v129
    %v239 = vunpack.c.l.b16 %v130
    %v240 = vunpack.c.h.b16 %v130
    %v241 = vunpack.c.l.b16 %v131
    %v242 = vunpack.c.h.b16 %v131
    %v243 = vunpack.c.l.b16 %v132
    %v244 = vunpack.c.h.b16 %v132
    %v245 = vunpack.c.l.b16 %v133
    %v246 = vunpack.c.h.b16 %v133
    %v247 = vunpack.c.l.b16 %v134
    %v248 = vunpack.c.h.b16 %v134
    %v249 = vunpack.c.l.b16 %v135
    %v250 = vunpack.c.h.b16 %v135
    %v251 = vunpack.c.l.b16 %v136
    %v252 = vunpack.c.h.b16 %v136
    %v253 = vunpack.c.l.b16 %v137
    %v254 = vunpack.c.h.b16 %v137
    %v255 = vunpack.c.l.b16 %v138
    %v256 = vunpack.c.h.b16 %v138
    %v257 = vunpack.c.l.b16 %v139
    %v258 = vunpack.c.h.b16 %v139
    %v259 = vunpack.c.l.b16 %v140
    %v260 = vunpack.c.h.b16 %v140
    %v261 = vunpack.c.l.b16 %v141
    %v262 = vunpack.c.h.b16 %v141
    %v263 = vunpack.c.l.b16 %v142
    %v264 = vunpack.c.h.b16 %v142
    %v265 = vunpack.c.l.b16 %v143
    %v266 = vunpack.c.h.b16 %v143
    %v267 = vunpack.c.l.b16 %v144
    %v268 = vunpack.c.h.b16 %v144
    %v269 = vunpack.c.l.b16 %v145
    %v270 = vunpack.c.h.b16 %v145
    %v271 = vunpack.c.l.b16 %v146
    %v272 = vunpack.c.h.b16 %v146
    %v273 = vunpack.c.l.b16 %v147
    %v274 = vunpack.c.h.b16 %v147
    %v275 = vunpack.c.l.b16 %v148
    %v276 = vunpack.c.h.b16 %v148
    %v277 = vunpack.c.l.b16 %v149
    %v278 = vunpack.c.h.b16 %v149
    %v279 = vunpack.c.l.b16 %v150
    %v280 = vunpack.c.h.b16 %v150
    %v281 = vpack.c.b16 %v221, %v217
    %v282 = vpack.c.b16 %v222, %v218
    %v283 = vpack.c.b16 %v223, %v219
    %v284 = vpack.c.b16 %v224, %v220
    %v285 = vpack.c.b16 %v229, %v225
    %v286 = vpack.c.b16 %v230, %v226
    %v287 = vpack.c.b16 %v231, %v227
    %v288 = vpack.c.b16 %v232, %v228
    %v289 = vpack.c.b16 %v237, %v233
    %v290 = vpack.c.b16 %v238, %v234
    %v291 = vpack.c.b16 %v239, %v235
    %v292 = vpack.c.b16 %v240, %v236
    %v293 = vpack.c.b16 %v245, %v241
    %v294 = vpack.c.b16 %v246, %v242
    %v295 = vpack.c.b16 %v247, %v243
    %v296 = vpack.c.b16 %v248, %v244
    %v297 = vpack.c.b16 %v253, %v249
    %v298 = vpack.c.b16 %v254, %v250
    %v299 = vpack.c.b16 %v255, %v251
    %v300 = vpack.c.b16 %v256, %v252
    %v301 = vpack.c.b16 %v261, %v257
    %v302 = vpack.c.b16 %v262, %v258
    %v303 = vpack.c.b16 %v263, %v259
    %v304 = vpack.c.b16 %v264, %v260
    %v305 = vpack.c.b16 %v269, %v265
    %v306 = vpack.c.b16 %v270, %v266
    %v307 = vpack.c.b16 %v271, %v267
    %v308 = vpack.c.b16 %v272, %v268
    %v309 = vpack.c.b16 %v277, %v273
    %v310 = vpack.c.b16 %v278, %v274
    %v311 = vpack.c.b16 %v279, %v275
    %v312 = vpack.c.b16 %v280, %v276
    %345 = vmatpush.bf16.msra.mxu0 %v309
    %346 = vmatpush.bf16.msra.mxu0 %v305
    %347 = vmatpush.bf16.msra.mxu0 %v301
    %348 = vmatpush.bf16.msra.mxu0 %v297
    %349 = vmatpush.bf16.msra.mxu0 %v293
    %350 = vmatpush.bf16.msra.mxu0 %v289
    %351 = vmatpush.bf16.msra.mxu0 %v285
    %352 = vmatpush.bf16.msra.mxu0 %v281
    %353 = vmatmul.bf16.gmra.mxu0 %v177
    %v354 = vpop.f32.mrf.mxu0
    %v355 = vadd.f32 %v153, %v354
    %v356 = vpop.f32.mrf.mxu0
    %v357 = vadd.f32 %v153, %v356
    %358 = vmatmul.bf16.gmra.mxu0 %v178
    %v359 = vpop.f32.mrf.mxu0
    %v360 = vadd.f32 %v153, %v359
    %v361 = vpop.f32.mrf.mxu0
    %v362 = vadd.f32 %v153, %v361
    %363 = vmatmul.bf16.gmra.mxu0 %v179
    %v364 = vpop.f32.mrf.mxu0
    %v365 = vadd.f32 %v153, %v364
    %v366 = vpop.f32.mrf.mxu0
    %v367 = vadd.f32 %v153, %v366
    %368 = vmatmul.bf16.gmra.mxu0 %v180
    %v369 = vpop.f32.mrf.mxu0
    %v370 = vadd.f32 %v153, %v369
    %v371 = vpop.f32.mrf.mxu0
    %v372 = vadd.f32 %v153, %v371
    %373 = vdwg.mxu0
    %374 = vmatpush.bf16.msra.mxu0 %v310
    %375 = vmatpush.bf16.msra.mxu0 %v306
    %376 = vmatpush.bf16.msra.mxu0 %v302
    %377 = vmatpush.bf16.msra.mxu0 %v298
    %378 = vmatpush.bf16.msra.mxu0 %v294
    %379 = vmatpush.bf16.msra.mxu0 %v290
    %380 = vmatpush.bf16.msra.mxu0 %v286
    %381 = vmatpush.bf16.msra.mxu0 %v282
    %382 = vmatmul.bf16.gmra.mxu0 %v177
    %v383 = vpop.f32.mrf.mxu0
    %v384 = vadd.f32 %v154, %v383
    %v385 = vpop.f32.mrf.mxu0
    %v386 = vadd.f32 %v154, %v385
    %387 = vmatmul.bf16.gmra.mxu0 %v178
    %v388 = vpop.f32.mrf.mxu0
    %v389 = vadd.f32 %v154, %v388
    %v390 = vpop.f32.mrf.mxu0
    %v391 = vadd.f32 %v154, %v390
    %392 = vmatmul.bf16.gmra.mxu0 %v179
    %v393 = vpop.f32.mrf.mxu0
    %v394 = vadd.f32 %v154, %v393
    %v395 = vpop.f32.mrf.mxu0
    %v396 = vadd.f32 %v154, %v395
    %397 = vmatmul.bf16.gmra.mxu0 %v180
    %v398 = vpop.f32.mrf.mxu0
    %v399 = vadd.f32 %v154, %v398
    %v400 = vpop.f32.mrf.mxu0
    %v401 = vadd.f32 %v154, %v400
    %402 = vdwg.mxu0
    %403 = vmatpush.bf16.msra.mxu0 %v311
    %404 = vmatpush.bf16.msra.mxu0 %v307
    %405 = vmatpush.bf16.msra.mxu0 %v303
    %406 = vmatpush.bf16.msra.mxu0 %v299
    %407 = vmatpush.bf16.msra.mxu0 %v295
    %408 = vmatpush.bf16.msra.mxu0 %v291
    %409 = vmatpush.bf16.msra.mxu0 %v287
    %410 = vmatpush.bf16.msra.mxu0 %v283
    %411 = vmatmul.bf16.gmra.mxu0 %v177
    %v412 = vpop.f32.mrf.mxu0
    %v413 = vadd.f32 %v155, %v412
    %v414 = vpop.f32.mrf.mxu0
    %v415 = vadd.f32 %v155, %v414
    %416 = vmatmul.bf16.gmra.mxu0 %v178
    %v417 = vpop.f32.mrf.mxu0
    %v418 = vadd.f32 %v155, %v417
    %v419 = vpop.f32.mrf.mxu0
    %v420 = vadd.f32 %v155, %v419
    %421 = vmatmul.bf16.gmra.mxu0 %v179
    %v422 = vpop.f32.mrf.mxu0
    %v423 = vadd.f32 %v155, %v422
    %v424 = vpop.f32.mrf.mxu0
    %v425 = vadd.f32 %v155, %v424
    %426 = vmatmul.bf16.gmra.mxu0 %v180
    %v427 = vpop.f32.mrf.mxu0
    %v428 = vadd.f32 %v155, %v427
    %v429 = vpop.f32.mrf.mxu0
    %v430 = vadd.f32 %v155, %v429
    %431 = vdwg.mxu0
    %432 = vmatpush.bf16.msra.mxu0 %v312
    %433 = vmatpush.bf16.msra.mxu0 %v308
    %434 = vmatpush.bf16.msra.mxu0 %v304
    %435 = vmatpush.bf16.msra.mxu0 %v300
    %436 = vmatpush.bf16.msra.mxu0 %v296
    %437 = vmatpush.bf16.msra.mxu0 %v292
    %438 = vmatpush.bf16.msra.mxu0 %v288
    %439 = vmatpush.bf16.msra.mxu0 %v284
    %440 = vmatmul.bf16.gmra.mxu0 %v177
    %v441 = vpop.f32.mrf.mxu0
    %v442 = vadd.f32 %v156, %v441
    %v443 = vpop.f32.mrf.mxu0
    %v444 = vadd.f32 %v156, %v443
    %445 = vmatmul.bf16.gmra.mxu0 %v178
    %v446 = vpop.f32.mrf.mxu0
    %v447 = vadd.f32 %v156, %v446
    %v448 = vpop.f32.mrf.mxu0
    %v449 = vadd.f32 %v156, %v448
    %450 = vmatmul.bf16.gmra.mxu0 %v179
    %v451 = vpop.f32.mrf.mxu0
    %v452 = vadd.f32 %v156, %v451
    %v453 = vpop.f32.mrf.mxu0
    %v454 = vadd.f32 %v156, %v453
    %455 = vmatmul.bf16.gmra.mxu0 %v180
    %v456 = vpop.f32.mrf.mxu0
    %v457 = vadd.f32 %v156, %v456
    %v458 = vpop.f32.mrf.mxu0
    %v459 = vadd.f32 %v156, %v458
    %460 = vdwg.mxu0
    %461 = vst [vmem:[#allocation4] sm:$0xff] %v355
    %462 = vst [vmem:[#allocation4 + $0x8] sm:$0xff] %v384
    %463 = vst [vmem:[#allocation4 + $0x10] sm:$0xff] %v413
    %464 = vst [vmem:[#allocation4 + $0x18] sm:$0xff] %v442
    %465 = vst [vmem:[#allocation4 + $0x20] sm:$0xff] %v357
    %466 = vst [vmem:[#allocation4 + $0x28] sm:$0xff] %v386
    %467 = vst [vmem:[#allocation4 + $0x30] sm:$0xff] %v415
    %468 = vst [vmem:[#allocation4 + $0x38] sm:$0xff] %v444
    %469 = vst [vmem:[#allocation4 + $0x40] sm:$0xff] %v360
    %470 = vst [vmem:[#allocation4 + $0x48] sm:$0xff] %v389
    %471 = vst [vmem:[#allocation4 + $0x50] sm:$0xff] %v418
    %472 = vst [vmem:[#allocation4 + $0x58] sm:$0xff] %v447
    %473 = vst [vmem:[#allocation4 + $0x60] sm:$0xff] %v362
    %474 = vst [vmem:[#allocation4 + $0x68] sm:$0xff] %v391
    %475 = vst [vmem:[#allocation4 + $0x70] sm:$0xff] %v420
    %476 = vst [vmem:[#allocation4 + $0x78] sm:$0xff] %v449
    %477 = vst [vmem:[#allocation4 + $0x80] sm:$0xff] %v365
    %478 = vst [vmem:[#allocation4 + $0x88] sm:$0xff] %v394
    %479 = vst [vmem:[#allocation4 + $0x90] sm:$0xff] %v423
    %480 = vst [vmem:[#allocation4 + $0x98] sm:$0xff] %v452
    %481 = vst [vmem:[#allocation4 + $0xa0] sm:$0xff] %v367
    %482 = vst [vmem:[#allocation4 + $0xa8] sm:$0xff] %v396
    %483 = vst [vmem:[#allocation4 + $0xb0] sm:$0xff] %v425
    %484 = vst [vmem:[#allocation4 + $0xb8] sm:$0xff] %v454
    %485 = vst [vmem:[#allocation4 + $0xc0] sm:$0xff] %v370
    %486 = vst [vmem:[#allocation4 + $0xc8] sm:$0xff] %v399
    %487 = vst [vmem:[#allocation4 + $0xd0] sm:$0xff] %v428
    %488 = vst [vmem:[#allocation4 + $0xd8] sm:$0xff] %v457
    %489 = vst [vmem:[#allocation4 + $0xe0] sm:$0xff] %v372
    %490 = vst [vmem:[#allocation4 + $0xe8] sm:$0xff] %v401
    %491 = vst [vmem:[#allocation4 + $0xf0] sm:$0xff] %v430
    %492 = vst [vmem:[#allocation4 + $0xf8] sm:$0xff] %v459
    %s493 = smul.u32 0, 4
    %s494 = smul.addr %s493, 8
    %s495 = scalar_lea.vmem [#allocation4], %s494
    %v496 = vld [vmem:[%s495] sm:$0xff]
    %v497 = vld [vmem:[%s495 + $0x8] sm:$0xff]
    %v498 = vld [vmem:[%s495 + $0x10] sm:$0xff]
    %v499 = vld [vmem:[%s495 + $0x18] sm:$0xff]
    %v500 = vld [vmem:[#allocation7] sm:$0xff]
    %v501 = vld [vmem:[#allocation7 + $0x8] sm:$0xff]
    %v502 = vld [vmem:[#allocation7 + $0x10] sm:$0xff]
    %v503 = vld [vmem:[#allocation7 + $0x18] sm:$0xff]
    %v504 = vld [vmem:[#allocation7 + $0x20] sm:$0xff]
    %v505 = vld [vmem:[#allocation7 + $0x28] sm:$0xff]
    %v506 = vld [vmem:[#allocation7 + $0x30] sm:$0xff]
    %v507 = vld [vmem:[#allocation7 + $0x38] sm:$0xff]
    %v508 = vld [vmem:[#allocation7 + $0x40] sm:$0xff]
    %v509 = vld [vmem:[#allocation7 + $0x48] sm:$0xff]
    %v510 = vld [vmem:[#allocation7 + $0x50] sm:$0xff]
    %v511 = vld [vmem:[#allocation7 + $0x58] sm:$0xff]
    %v512 = vld [vmem:[#allocation7 + $0x60] sm:$0xff]
    %v513 = vld [vmem:[#allocation7 + $0x68] sm:$0xff]
    %v514 = vld [vmem:[#allocation7 + $0x70] sm:$0xff]
    %v515 = vld [vmem:[#allocation7 + $0x78] sm:$0xff]
    %v516 = vld [vmem:[#allocation7 + $0x80] sm:$0xff]
    %v517 = vld [vmem:[#allocation7 + $0x88] sm:$0xff]
    %v518 = vld [vmem:[#allocation7 + $0x90] sm:$0xff]
    %v519 = vld [vmem:[#allocation7 + $0x98] sm:$0xff]
    %v520 = vld [vmem:[#allocation7 + $0xa0] sm:$0xff]
    %v521 = vld [vmem:[#allocation7 + $0xa8] sm:$0xff]
    %v522 = vld [vmem:[#allocation7 + $0xb0] sm:$0xff]
    %v523 = vld [vmem:[#allocation7 + $0xb8] sm:$0xff]
    %v524 = vld [vmem:[#allocation7 + $0xc0] sm:$0xff]
    %v525 = vld [vmem:[#allocation7 + $0xc8] sm:$0xff]
    %v526 = vld [vmem:[#allocation7 + $0xd0] sm:$0xff]
    %v527 = vld [vmem:[#allocation7 + $0xd8] sm:$0xff]
    %v528 = vld [vmem:[#allocation7 + $0xe0] sm:$0xff]
    %v529 = vld [vmem:[#allocation7 + $0xe8] sm:$0xff]
    %v530 = vld [vmem:[#allocation7 + $0xf0] sm:$0xff]
    %v531 = vld [vmem:[#allocation7 + $0xf8] sm:$0xff]
    %v564 = vunpack.c.l.b16 %v500
    %v565 = vunpack.c.h.b16 %v500
    %v566 = vunpack.c.l.b16 %v501
    %v567 = vunpack.c.h.b16 %v501
    %v568 = vunpack.c.l.b16 %v502
    %v569 = vunpack.c.h.b16 %v502
    %v570 = vunpack.c.l.b16 %v503
    %v571 = vunpack.c.h.b16 %v503
    %v572 = vunpack.c.l.b16 %v504
    %v573 = vunpack.c.h.b16 %v504
    %v574 = vunpack.c.l.b16 %v505
    %v575 = vunpack.c.h.b16 %v505
    %v576 = vunpack.c.l.b16 %v506
    %v577 = vunpack.c.h.b16 %v506
    %v578 = vunpack.c.l.b16 %v507
    %v579 = vunpack.c.h.b16 %v507
    %v580 = vunpack.c.l.b16 %v508
    %v581 = vunpack.c.h.b16 %v508
    %v582 = vunpack.c.l.b16 %v509
    %v583 = vunpack.c.h.b16 %v509
    %v584 = vunpack.c.l.b16 %v510
    %v585 = vunpack.c.h.b16 %v510
    %v586 = vunpack.c.l.b16 %v511
    %v587 = vunpack.c.h.b16 %v511
    %v588 = vunpack.c.l.b16 %v512
    %v589 = vunpack.c.h.b16 %v512
    %v590 = vunpack.c.l.b16 %v513
    %v591 = vunpack.c.h.b16 %v513
    %v592 = vunpack.c.l.b16 %v514
    %v593 = vunpack.c.h.b16 %v514
    %v594 = vunpack.c.l.b16 %v515
    %v595 = vunpack.c.h.b16 %v515
    %v596 = vunpack.c.l.b16 %v516
    %v597 = vunpack.c.h.b16 %v516
    %v598 = vunpack.c.l.b16 %v517
    %v599 = vunpack.c.h.b16 %v517
    %v600 = vunpack.c.l.b16 %v518
    %v601 = vunpack.c.h.b16 %v518
    %v602 = vunpack.c.l.b16 %v519
    %v603 = vunpack.c.h.b16 %v519
    %v604 = vunpack.c.l.b16 %v520
    %v605 = vunpack.c.h.b16 %v520
    %v606 = vunpack.c.l.b16 %v521
    %v607 = vunpack.c.h.b16 %v521
    %v608 = vunpack.c.l.b16 %v522
    %v609 = vunpack.c.h.b16 %v522
    %v610 = vunpack.c.l.b16 %v523
    %v611 = vunpack.c.h.b16 %v523
    %v612 = vunpack.c.l.b16 %v524
    %v613 = vunpack.c.h.b16 %v524
    %v614 = vunpack.c.l.b16 %v525
    %v615 = vunpack.c.h.b16 %v525
    %v616 = vunpack.c.l.b16 %v526
    %v617 = vunpack.c.h.b16 %v526
    %v618 = vunpack.c.l.b16 %v527
    %v619 = vunpack.c.h.b16 %v527
    %v620 = vunpack.c.l.b16 %v528
    %v621 = vunpack.c.h.b16 %v528
    %v622 = vunpack.c.l.b16 %v529
    %v623 = vunpack.c.h.b16 %v529
    %v624 = vunpack.c.l.b16 %v530
    %v625 = vunpack.c.h.b16 %v530
    %v626 = vunpack.c.l.b16 %v531
    %v627 = vunpack.c.h.b16 %v531
    %v628 = vpack.c.b16 %v568, %v564
    %v629 = vpack.c.b16 %v569, %v565
    %v630 = vpack.c.b16 %v570, %v566
    %v631 = vpack.c.b16 %v571, %v567
    %v632 = vpack.c.b16 %v576, %v572
    %v633 = vpack.c.b16 %v577, %v573
    %v634 = vpack.c.b16 %v578, %v574
    %v635 = vpack.c.b16 %v579, %v575
    %v636 = vpack.c.b16 %v584, %v580
    %v637 = vpack.c.b16 %v585, %v581
    %v638 = vpack.c.b16 %v586, %v582
    %v639 = vpack.c.b16 %v587, %v583
    %v640 = vpack.c.b16 %v592, %v588
    %v641 = vpack.c.b16 %v593, %v589
    %v642 = vpack.c.b16 %v594, %v590
    %v643 = vpack.c.b16 %v595, %v591
    %v644 = vpack.c.b16 %v600, %v596
    %v645 = vpack.c.b16 %v601, %v597
    %v646 = vpack.c.b16 %v602, %v598
    %v647 = vpack.c.b16 %v603, %v599
    %v648 = vpack.c.b16 %v608, %v604
    %v649 = vpack.c.b16 %v609, %v605
    %v650 = vpack.c.b16 %v610, %v606
    %v651 = vpack.c.b16 %v611, %v607
    %v652 = vpack.c.b16 %v616, %v612
    %v653 = vpack.c.b16 %v617, %v613
    %v654 = vpack.c.b16 %v618, %v614
    %v655 = vpack.c.b16 %v619, %v615
    %v656 = vpack.c.b16 %v624, %v620
    %v657 = vpack.c.b16 %v625, %v621
    %v658 = vpack.c.b16 %v626, %v622
    %v659 = vpack.c.b16 %v627, %v623
    %692 = vmatpush.bf16.msra.mxu0 %v656
    %693 = vmatpush.bf16.msra.mxu0 %v652
    %694 = vmatpush.bf16.msra.mxu0 %v648
    %695 = vmatpush.bf16.msra.mxu0 %v644
    %696 = vmatpush.bf16.msra.mxu0 %v640
    %697 = vmatpush.bf16.msra.mxu0 %v636
    %698 = vmatpush.bf16.msra.mxu0 %v632
    %699 = vmatpush.bf16.msra.mxu0 %v628
    %700 = vmatmul.bf16.gmra.mxu0 0
    %v701 = vpop.f32.mrf.mxu0
    %v702 = vadd.f32 0.0, %v701
    %v703 = vpop.f32.mrf.mxu0
    %704 = vdwg.mxu0
    %705 = vmatpush.bf16.msra.mxu0 %v657
    %706 = vmatpush.bf16.msra.mxu0 %v653
    %707 = vmatpush.bf16.msra.mxu0 %v649
    %708 = vmatpush.bf16.msra.mxu0 %v645
    %709 = vmatpush.bf16.msra.mxu0 %v641
    %710 = vmatpush.bf16.msra.mxu0 %v637
    %711 = vmatpush.bf16.msra.mxu0 %v633
    %712 = vmatpush.bf16.msra.mxu0 %v629
    %713 = vmatmul.bf16.gmra.mxu0 0
    %v714 = vpop.f32.mrf.mxu0
    %v715 = vadd.f32 0.0, %v714
    %v716 = vpop.f32.mrf.mxu0
    %717 = vdwg.mxu0
    %718 = vmatpush.bf16.msra.mxu0 %v658
    %719 = vmatpush.bf16.msra.mxu0 %v654
    %720 = vmatpush.bf16.msra.mxu0 %v650
    %721 = vmatpush.bf16.msra.mxu0 %v646
    %722 = vmatpush.bf16.msra.mxu0 %v642
    %723 = vmatpush.bf16.msra.mxu0 %v638
    %724 = vmatpush.bf16.msra.mxu0 %v634
    %725 = vmatpush.bf16.msra.mxu0 %v630
    %726 = vmatmul.bf16.gmra.mxu0 0
    %v727 = vpop.f32.mrf.mxu0
    %v728 = vadd.f32 0.0, %v727
    %v729 = vpop.f32.mrf.mxu0
    %730 = vdwg.mxu0
    %731 = vmatpush.bf16.msra.mxu0 %v659
    %732 = vmatpush.bf16.msra.mxu0 %v655
    %733 = vmatpush.bf16.msra.mxu0 %v651
    %734 = vmatpush.bf16.msra.mxu0 %v647
    %735 = vmatpush.bf16.msra.mxu0 %v643
    %736 = vmatpush.bf16.msra.mxu0 %v639
    %737 = vmatpush.bf16.msra.mxu0 %v635
    %738 = vmatpush.bf16.msra.mxu0 %v631
    %739 = vmatmul.bf16.gmra.mxu0 0
    %v740 = vpop.f32.mrf.mxu0
    %v741 = vadd.f32 0.0, %v740
    %v742 = vpop.f32.mrf.mxu0
    %743 = vdwg.mxu0
    %v744 = vadd.f32 %v496, %v702
    %v745 = vadd.f32 %v497, %v715
    %v746 = vadd.f32 %v498, %v728
    %v747 = vadd.f32 %v499, %v741
    %v748 = vxor.u32 %v744, 2147483648
    %v749 = vxor.u32 %v745, 2147483648
    %v750 = vxor.u32 %v746, 2147483648
    %v751 = vmul.f32 %v748, 1.442695
    %v752 = vpow.pop %v751
    %v753 = vmul.f32 %v749, 1.442695
    %v754 = vpow.pop %v753
    %v755 = vmul.f32 %v750, 1.442695
    %v756 = vpow.pop %v755
    %v757 = vadd.f32 %v752, 1.0
    %v758 = vadd.f32 %v754, 1.0
    %v759 = vadd.f32 %v756, 1.0
    %v760 = vrcp.pop %v757
    %v761 = vmul.f32 %v757, %v760
    %v762 = vsub.f32 1.0, %v761
    %v763 = vmul.f32 %v760, %v762
    %v764 = vadd.f32 %v760, %v763
    %vm765 = vweird.f32 %v757
    %vm766 = vweird.f32 %v760
    %vm767 = vmor %vm765, %vm766
    %v768 = vsel %vm767, %v760, %v764
    %v769 = vand.u32 2147483647, %v757
    %vm770 = vcmp.eq.f32.partialorder %v769, 8.507059e+37
    %v771 = vand.u32 %v757, 2147483648
    %v772 = vor.u32 1.1754944e-38, %v771
    %v773 = vsel %vm770, %v772, %v768
    %v774 = vmul.f32 1.0, %v773
    %v775 = vrcp.pop %v758
    %v776 = vmul.f32 %v758, %v775
    %v777 = vsub.f32 1.0, %v776
    %v778 = vmul.f32 %v775, %v777
    %v779 = vadd.f32 %v775, %v778
    %vm780 = vweird.f32 %v758
    %vm781 = vweird.f32 %v775
    %vm782 = vmor %vm780, %vm781
    %v783 = vsel %vm782, %v775, %v779
    %v784 = vand.u32 2147483647, %v758
    %vm785 = vcmp.eq.f32.partialorder %v784, 8.507059e+37
    %v786 = vand.u32 %v758, 2147483648
    %v787 = vor.u32 1.1754944e-38, %v786
    %v788 = vsel %vm785, %v787, %v783
    %v789 = vmul.f32 1.0, %v788
    %v790 = vrcp.pop %v759
    %v791 = vmul.f32 %v759, %v790
    %v792 = vsub.f32 1.0, %v791
    %v793 = vmul.f32 %v790, %v792
    %v794 = vadd.f32 %v790, %v793
    %vm795 = vweird.f32 %v759
    %vm796 = vweird.f32 %v790
    %vm797 = vmor %vm795, %vm796
    %v798 = vsel %vm797, %v790, %v794
    %v799 = vand.u32 2147483647, %v759
    %vm800 = vcmp.eq.f32.partialorder %v799, 8.507059e+37
    %v801 = vand.u32 %v759, 2147483648
    %v802 = vor.u32 1.1754944e-38, %v801
    %v803 = vsel %vm800, %v802, %v798
    %v804 = vmul.f32 1.0, %v803
    %v805 = vtanh.pop %v747
    %v806 = vmul.f32 %v789, 0.0
    %v807 = vmul.f32 %v774, %v805
    %v808 = vadd.f32 %v806, %v807
    %v809 = vtanh.pop %v808
    %v810 = vmul.f32 %v804, %v809
    %v811 = vpack.c.bf16 %v810, %v810
    %812 = vst [vmem:[#allocation2] sm:$0xf] %v811
    %s813 = smul.u32 1, 4
    %s814 = smul.addr %s813, 8
    %s815 = scalar_lea.vmem [#allocation4], %s814
    %v816 = vld [vmem:[%s815] sm:$0xff]
    %v817 = vld [vmem:[%s815 + $0x8] sm:$0xff]
    %v818 = vld [vmem:[%s815 + $0x10] sm:$0xff]
    %v819 = vld [vmem:[%s815 + $0x18] sm:$0xff]
    %v820 = vld [vmem:[#allocation7] sm:$0xff]
    %v821 = vld [vmem:[#allocation7 + $0x8] sm:$0xff]
    %v822 = vld [vmem:[#allocation7 + $0x10] sm:$0xff]
    %v823 = vld [vmem:[#allocation7 + $0x18] sm:$0xff]
    %v824 = vld [vmem:[#allocation7 + $0x20] sm:$0xff]
    %v825 = vld [vmem:[#allocation7 + $0x28] sm:$0xff]
    %v826 = vld [vmem:[#allocation7 + $0x30] sm:$0xff]
    %v827 = vld [vmem:[#allocation7 + $0x38] sm:$0xff]
    %v828 = vld [vmem:[#allocation7 + $0x40] sm:$0xff]
    %v829 = vld [vmem:[#allocation7 + $0x48] sm:$0xff]
    %v830 = vld [vmem:[#allocation7 + $0x50] sm:$0xff]
    %v831 = vld [vmem:[#allocation7 + $0x58] sm:$0xff]
    %v832 = vld [vmem:[#allocation7 + $0x60] sm:$0xff]
    %v833 = vld [vmem:[#allocation7 + $0x68] sm:$0xff]
    %v834 = vld [vmem:[#allocation7 + $0x70] sm:$0xff]
    %v835 = vld [vmem:[#allocation7 + $0x78] sm:$0xff]
    %v836 = vld [vmem:[#allocation7 + $0x80] sm:$0xff]
    %v837 = vld [vmem:[#allocation7 + $0x88] sm:$0xff]
    %v838 = vld [vmem:[#allocation7 + $0x90] sm:$0xff]
    %v839 = vld [vmem:[#allocation7 + $0x98] sm:$0xff]
    %v840 = vld [vmem:[#allocation7 + $0xa0] sm:$0xff]
    %v841 = vld [vmem:[#allocation7 + $0xa8] sm:$0xff]
    %v842 = vld [vmem:[#allocation7 + $0xb0] sm:$0xff]
    %v843 = vld [vmem:[#allocation7 + $0xb8] sm:$0xff]
    %v844 = vld [vmem:[#allocation7 + $0xc0] sm:$0xff]
    %v845 = vld [vmem:[#allocation7 + $0xc8] sm:$0xff]
    %v846 = vld [vmem:[#allocation7 + $0xd0] sm:$0xff]
    %v847 = vld [vmem:[#allocation7 + $0xd8] sm:$0xff]
    %v848 = vld [vmem:[#allocation7 + $0xe0] sm:$0xff]
    %v849 = vld [vmem:[#allocation7 + $0xe8] sm:$0xff]
    %v850 = vld [vmem:[#allocation7 + $0xf0] sm:$0xff]
    %v851 = vld [vmem:[#allocation7 + $0xf8] sm:$0xff]
    %v884 = vunpack.c.l.b16 %v820
    %v885 = vunpack.c.h.b16 %v820
    %v886 = vunpack.c.l.b16 %v821
    %v887 = vunpack.c.h.b16 %v821
    %v888 = vunpack.c.l.b16 %v822
    %v889 = vunpack.c.h.b16 %v822
    %v890 = vunpack.c.l.b16 %v823
    %v891 = vunpack.c.h.b16 %v823
    %v892 = vunpack.c.l.b16 %v824
    %v893 = vunpack.c.h.b16 %v824
    %v894 = vunpack.c.l.b16 %v825
    %v895 = vunpack.c.h.b16 %v825
    %v896 = vunpack.c.l.b16 %v826
    %v897 = vunpack.c.h.b16 %v826
    %v898 = vunpack.c.l.b16 %v827
    %v899 = vunpack.c.h.b16 %v827
    %v900 = vunpack.c.l.b16 %v828
    %v901 = vunpack.c.h.b16 %v828
    %v902 = vunpack.c.l.b16 %v829
    %v903 = vunpack.c.h.b16 %v829
    %v904 = vunpack.c.l.b16 %v830
    %v905 = vunpack.c.h.b16 %v830
    %v906 = vunpack.c.l.b16 %v831
    %v907 = vunpack.c.h.b16 %v831
    %v908 = vunpack.c.l.b16 %v832
    %v909 = vunpack.c.h.b16 %v832
    %v910 = vunpack.c.l.b16 %v833
    %v911 = vunpack.c.h.b16 %v833
    %v912 = vunpack.c.l.b16 %v834
    %v913 = vunpack.c.h.b16 %v834
    %v914 = vunpack.c.l.b16 %v835
    %v915 = vunpack.c.h.b16 %v835
    %v916 = vunpack.c.l.b16 %v836
    %v917 = vunpack.c.h.b16 %v836
    %v918 = vunpack.c.l.b16 %v837
    %v919 = vunpack.c.h.b16 %v837
    %v920 = vunpack.c.l.b16 %v838
    %v921 = vunpack.c.h.b16 %v838
    %v922 = vunpack.c.l.b16 %v839
    %v923 = vunpack.c.h.b16 %v839
    %v924 = vunpack.c.l.b16 %v840
    %v925 = vunpack.c.h.b16 %v840
    %v926 = vunpack.c.l.b16 %v841
    %v927 = vunpack.c.h.b16 %v841
    %v928 = vunpack.c.l.b16 %v842
    %v929 = vunpack.c.h.b16 %v842
    %v930 = vunpack.c.l.b16 %v843
    %v931 = vunpack.c.h.b16 %v843
    %v932 = vunpack.c.l.b16 %v844
    %v933 = vunpack.c.h.b16 %v844
    %v934 = vunpack.c.l.b16 %v845
    %v935 = vunpack.c.h.b16 %v845
    %v936 = vunpack.c.l.b16 %v846
    %v937 = vunpack.c.h.b16 %v846
    %v938 = vunpack.c.l.b16 %v847
    %v939 = vunpack.c.h.b16 %v847
    %v940 = vunpack.c.l.b16 %v848
    %v941 = vunpack.c.h.b16 %v848
    %v942 = vunpack.c.l.b16 %v849
    %v943 = vunpack.c.h.b16 %v849
    %v944 = vunpack.c.l.b16 %v850
    %v945 = vunpack.c.h.b16 %v850
    %v946 = vunpack.c.l.b16 %v851
    %v947 = vunpack.c.h.b16 %v851
    %v948 = vpack.c.b16 %v888, %v884
    %v949 = vpack.c.b16 %v889, %v885
    %v950 = vpack.c.b16 %v890, %v886
    %v951 = vpack.c.b16 %v891, %v887
    %v952 = vpack.c.b16 %v896, %v892
    %v953 = vpack.c.b16 %v897, %v893
    %v954 = vpack.c.b16 %v898, %v894
    %v955 = vpack.c.b16 %v899, %v895
    %v956 = vpack.c.b16 %v904, %v900
    %v957 = vpack.c.b16 %v905, %v901
    %v958 = vpack.c.b16 %v906, %v902
    %v959 = vpack.c.b16 %v907, %v903
    %v960 = vpack.c.b16 %v912, %v908
    %v961 = vpack.c.b16 %v913, %v909
    %v962 = vpack.c.b16 %v914, %v910
    %v963 = vpack.c.b16 %v915, %v911
    %v964 = vpack.c.b16 %v920, %v916
    %v965 = vpack.c.b16 %v921, %v917
    %v966 = vpack.c.b16 %v922, %v918
    %v967 = vpack.c.b16 %v923, %v919
    %v968 = vpack.c.b16 %v928, %v924
    %v969 = vpack.c.b16 %v929, %v925
    %v970 = vpack.c.b16 %v930, %v926
    %v971 = vpack.c.b16 %v931, %v927
    %v972 = vpack.c.b16 %v936, %v932
    %v973 = vpack.c.b16 %v937, %v933
    %v974 = vpack.c.b16 %v938, %v934
    %v975 = vpack.c.b16 %v939, %v935
    %v976 = vpack.c.b16 %v944, %v940
    %v977 = vpack.c.b16 %v945, %v941
    %v978 = vpack.c.b16 %v946, %v942
    %v979 = vpack.c.b16 %v947, %v943
    %1012 = vmatpush.bf16.msra.mxu0 %v976
    %1013 = vmatpush.bf16.msra.mxu0 %v972
    %1014 = vmatpush.bf16.msra.mxu0 %v968
    %1015 = vmatpush.bf16.msra.mxu0 %v964
    %1016 = vmatpush.bf16.msra.mxu0 %v960
    %1017 = vmatpush.bf16.msra.mxu0 %v956
    %1018 = vmatpush.bf16.msra.mxu0 %v952
    %1019 = vmatpush.bf16.msra.mxu0 %v948
    %1020 = vmatmul.bf16.gmra.mxu0 %v811
    %v1021 = vpop.f32.mrf.mxu0
    %v1022 = vadd.f32 0.0, %v1021
    %v1023 = vpop.f32.mrf.mxu0
    %1024 = vdwg.mxu0
    %1025 = vmatpush.bf16.msra.mxu0 %v977
    %1026 = vmatpush.bf16.msra.mxu0 %v973
    %1027 = vmatpush.bf16.msra.mxu0 %v969
    %1028 = vmatpush.bf16.msra.mxu0 %v965
    %1029 = vmatpush.bf16.msra.mxu0 %v961
    %1030 = vmatpush.bf16.msra.mxu0 %v957
    %1031 = vmatpush.bf16.msra.mxu0 %v953
    %1032 = vmatpush.bf16.msra.mxu0 %v949
    %1033 = vmatmul.bf16.gmra.mxu0 %v811
    %v1034 = vpop.f32.mrf.mxu0
    %v1035 = vadd.f32 0.0, %v1034
    %v1036 = vpop.f32.mrf.mxu0
    %1037 = vdwg.mxu0
    %1038 = vmatpush.bf16.msra.mxu0 %v978
    %1039 = vmatpush.bf16.msra.mxu0 %v974
    %1040 = vmatpush.bf16.msra.mxu0 %v970
    %1041 = vmatpush.bf16.msra.mxu0 %v966
    %1042 = vmatpush.bf16.msra.mxu0 %v962
    %1043 = vmatpush.bf16.msra.mxu0 %v958
    %1044 = vmatpush.bf16.msra.mxu0 %v954
    %1045 = vmatpush.bf16.msra.mxu0 %v950
    %1046 = vmatmul.bf16.gmra.mxu0 %v811
    %v1047 = vpop.f32.mrf.mxu0
    %v1048 = vadd.f32 0.0, %v1047
    %v1049 = vpop.f32.mrf.mxu0
    %1050 = vdwg.mxu0
    %1051 = vmatpush.bf16.msra.mxu0 %v979
    %1052 = vmatpush.bf16.msra.mxu0 %v975
    %1053 = vmatpush.bf16.msra.mxu0 %v971
    %1054 = vmatpush.bf16.msra.mxu0 %v967
    %1055 = vmatpush.bf16.msra.mxu0 %v963
    %1056 = vmatpush.bf16.msra.mxu0 %v959
    %1057 = vmatpush.bf16.msra.mxu0 %v955
    %1058 = vmatpush.bf16.msra.mxu0 %v951
    %1059 = vmatmul.bf16.gmra.mxu0 %v811
    %v1060 = vpop.f32.mrf.mxu0
    %v1061 = vadd.f32 0.0, %v1060
    %v1062 = vpop.f32.mrf.mxu0
    %1063 = vdwg.mxu0
    %v1064 = vadd.f32 %v816, %v1022
    %v1065 = vadd.f32 %v817, %v1035
    %v1066 = vadd.f32 %v818, %v1048
    %v1067 = vadd.f32 %v819, %v1061
    %v1068 = vxor.u32 %v1064, 2147483648
    %v1069 = vxor.u32 %v1065, 2147483648
    %v1070 = vxor.u32 %v1066, 2147483648
    %v1071 = vmul.f32 %v1068, 1.442695
    %v1072 = vpow.pop %v1071
    %v1073 = vmul.f32 %v1069, 1.442695
    %v1074 = vpow.pop %v1073
    %v1075 = vmul.f32 %v1070, 1.442695
    %v1076 = vpow.pop %v1075
    %v1077 = vadd.f32 %v1072, 1.0
    %v1078 = vadd.f32 %v1074, 1.0
    %v1079 = vadd.f32 %v1076, 1.0
    %v1080 = vrcp.pop %v1077
    %v1081 = vmul.f32 %v1077, %v1080
    %v1082 = vsub.f32 1.0, %v1081
    %v1083 = vmul.f32 %v1080, %v1082
    %v1084 = vadd.f32 %v1080, %v1083
    %vm1085 = vweird.f32 %v1077
    %vm1086 = vweird.f32 %v1080
    %vm1087 = vmor %vm1085, %vm1086
    %v1088 = vsel %vm1087, %v1080, %v1084
    %v1089 = vand.u32 2147483647, %v1077
    %vm1090 = vcmp.eq.f32.partialorder %v1089, 8.507059e+37
    %v1091 = vand.u32 %v1077, 2147483648
    %v1092 = vor.u32 1.1754944e-38, %v1091
    %v1093 = vsel %vm1090, %v1092, %v1088
    %v1094 = vmul.f32 1.0, %v1093
    %v1095 = vrcp.pop %v1078
    %v1096 = vmul.f32 %v1078, %v1095
    %v1097 = vsub.f32 1.0, %v1096
    %v1098 = vmul.f32 %v1095, %v1097
    %v1099 = vadd.f32 %v1095, %v1098
    %vm1100 = vweird.f32 %v1078
    %vm1101 = vweird.f32 %v1095
    %vm1102 = vmor %vm1100, %vm1101
    %v1103 = vsel %vm1102, %v1095, %v1099
    %v1104 = vand.u32 2147483647, %v1078
    %vm1105 = vcmp.eq.f32.partialorder %v1104, 8.507059e+37
    %v1106 = vand.u32 %v1078, 2147483648
    %v1107 = vor.u32 1.1754944e-38, %v1106
    %v1108 = vsel %vm1105, %v1107, %v1103
    %v1109 = vmul.f32 1.0, %v1108
    %v1110 = vrcp.pop %v1079
    %v1111 = vmul.f32 %v1079, %v1110
    %v1112 = vsub.f32 1.0, %v1111
    %v1113 = vmul.f32 %v1110, %v1112
    %v1114 = vadd.f32 %v1110, %v1113
    %vm1115 = vweird.f32 %v1079
    %vm1116 = vweird.f32 %v1110
    %vm1117 = vmor %vm1115, %vm1116
    %v1118 = vsel %vm1117, %v1110, %v1114
    %v1119 = vand.u32 2147483647, %v1079
    %vm1120 = vcmp.eq.f32.partialorder %v1119, 8.507059e+37
    %v1121 = vand.u32 %v1079, 2147483648
    %v1122 = vor.u32 1.1754944e-38, %v1121
    %v1123 = vsel %vm1120, %v1122, %v1118
    %v1124 = vmul.f32 1.0, %v1123
    %v1125 = vtanh.pop %v1067
    %v1126 = vmul.f32 %v1109, %v808
    %v1127 = vmul.f32 %v1094, %v1125
    %v1128 = vadd.f32 %v1126, %v1127
    %v1129 = vtanh.pop %v1128
    %v1130 = vmul.f32 %v1124, %v1129
    %v1131 = vpack.c.bf16 %v1130, %v1130
    %s1132 = scalar_lea.vmem [#allocation2], 4
    %1133 = vst [vmem:[%s1132] sm:$0xf] %v1131
    %s1134 = smul.u32 2, 4
    %s1135 = smul.addr %s1134, 8
    %s1136 = scalar_lea.vmem [#allocation4], %s1135
    %v1137 = vld [vmem:[%s1136] sm:$0xff]
    %v1138 = vld [vmem:[%s1136 + $0x8] sm:$0xff]
    %v1139 = vld [vmem:[%s1136 + $0x10] sm:$0xff]
    %v1140 = vld [vmem:[%s1136 + $0x18] sm:$0xff]
    %v1141 = vld [vmem:[#allocation7] sm:$0xff]
    %v1142 = vld [vmem:[#allocation7 + $0x8] sm:$0xff]
    %v1143 = vld [vmem:[#allocation7 + $0x10] sm:$0xff]
    %v1144 = vld [vmem:[#allocation7 + $0x18] sm:$0xff]
    %v1145 = vld [vmem:[#allocation7 + $0x20] sm:$0xff]
    %v1146 = vld [vmem:[#allocation7 + $0x28] sm:$0xff]
    %v1147 = vld [vmem:[#allocation7 + $0x30] sm:$0xff]
    %v1148 = vld [vmem:[#allocation7 + $0x38] sm:$0xff]
    %v1149 = vld [vmem:[#allocation7 + $0x40] sm:$0xff]
    %v1150 = vld [vmem:[#allocation7 + $0x48] sm:$0xff]
    %v1151 = vld [vmem:[#allocation7 + $0x50] sm:$0xff]
    %v1152 = vld [vmem:[#allocation7 + $0x58] sm:$0xff]
    %v1153 = vld [vmem:[#allocation7 + $0x60] sm:$0xff]
    %v1154 = vld [vmem:[#allocation7 + $0x68] sm:$0xff]
    %v1155 = vld [vmem:[#allocation7 + $0x70] sm:$0xff]
    %v1156 = vld [vmem:[#allocation7 + $0x78] sm:$0xff]
    %v1157 = vld [vmem:[#allocation7 + $0x80] sm:$0xff]
    %v1158 = vld [vmem:[#allocation7 + $0x88] sm:$0xff]
    %v1159 = vld [vmem:[#allocation7 + $0x90] sm:$0xff]
    %v1160 = vld [vmem:[#allocation7 + $0x98] sm:$0xff]
    %v1161 = vld [vmem:[#allocation7 + $0xa0] sm:$0xff]
    %v1162 = vld [vmem:[#allocation7 + $0xa8] sm:$0xff]
    %v1163 = vld [vmem:[#allocation7 + $0xb0] sm:$0xff]
    %v1164 = vld [vmem:[#allocation7 + $0xb8] sm:$0xff]
    %v1165 = vld [vmem:[#allocation7 + $0xc0] sm:$0xff]
    %v1166 = vld [vmem:[#allocation7 + $0xc8] sm:$0xff]
    %v1167 = vld [vmem:[#allocation7 + $0xd0] sm:$0xff]
    %v1168 = vld [vmem:[#allocation7 + $0xd8] sm:$0xff]
    %v1169 = vld [vmem:[#allocation7 + $0xe0] sm:$0xff]
    %v1170 = vld [vmem:[#allocation7 + $0xe8] sm:$0xff]
    %v1171 = vld [vmem:[#allocation7 + $0xf0] sm:$0xff]
    %v1172 = vld [vmem:[#allocation7 + $0xf8] sm:$0xff]
    %v1205 = vunpack.c.l.b16 %v1141
    %v1206 = vunpack.c.h.b16 %v1141
    %v1207 = vunpack.c.l.b16 %v1142
    %v1208 = vunpack.c.h.b16 %v1142
    %v1209 = vunpack.c.l.b16 %v1143
    %v1210 = vunpack.c.h.b16 %v1143
    %v1211 = vunpack.c.l.b16 %v1144
    %v1212 = vunpack.c.h.b16 %v1144
    %v1213 = vunpack.c.l.b16 %v1145
    %v1214 = vunpack.c.h.b16 %v1145
    %v1215 = vunpack.c.l.b16 %v1146
    %v1216 = vunpack.c.h.b16 %v1146
    %v1217 = vunpack.c.l.b16 %v1147
    %v1218 = vunpack.c.h.b16 %v1147
    %v1219 = vunpack.c.l.b16 %v1148
    %v1220 = vunpack.c.h.b16 %v1148
    %v1221 = vunpack.c.l.b16 %v1149
    %v1222 = vunpack.c.h.b16 %v1149
    %v1223 = vunpack.c.l.b16 %v1150
    %v1224 = vunpack.c.h.b16 %v1150
    %v1225 = vunpack.c.l.b16 %v1151
    %v1226 = vunpack.c.h.b16 %v1151
    %v1227 = vunpack.c.l.b16 %v1152
    %v1228 = vunpack.c.h.b16 %v1152
    %v1229 = vunpack.c.l.b16 %v1153
    %v1230 = vunpack.c.h.b16 %v1153
    %v1231 = vunpack.c.l.b16 %v1154
    %v1232 = vunpack.c.h.b16 %v1154
    %v1233 = vunpack.c.l.b16 %v1155
    %v1234 = vunpack.c.h.b16 %v1155
    %v1235 = vunpack.c.l.b16 %v1156
    %v1236 = vunpack.c.h.b16 %v1156
    %v1237 = vunpack.c.l.b16 %v1157
    %v1238 = vunpack.c.h.b16 %v1157
    %v1239 = vunpack.c.l.b16 %v1158
    %v1240 = vunpack.c.h.b16 %v1158
    %v1241 = vunpack.c.l.b16 %v1159
    %v1242 = vunpack.c.h.b16 %v1159
    %v1243 = vunpack.c.l.b16 %v1160
    %v1244 = vunpack.c.h.b16 %v1160
    %v1245 = vunpack.c.l.b16 %v1161
    %v1246 = vunpack.c.h.b16 %v1161
    %v1247 = vunpack.c.l.b16 %v1162
    %v1248 = vunpack.c.h.b16 %v1162
    %v1249 = vunpack.c.l.b16 %v1163
    %v1250 = vunpack.c.h.b16 %v1163
    %v1251 = vunpack.c.l.b16 %v1164
    %v1252 = vunpack.c.h.b16 %v1164
    %v1253 = vunpack.c.l.b16 %v1165
    %v1254 = vunpack.c.h.b16 %v1165
    %v1255 = vunpack.c.l.b16 %v1166
    %v1256 = vunpack.c.h.b16 %v1166
    %v1257 = vunpack.c.l.b16 %v1167
    %v1258 = vunpack.c.h.b16 %v1167
    %v1259 = vunpack.c.l.b16 %v1168
    %v1260 = vunpack.c.h.b16 %v1168
    %v1261 = vunpack.c.l.b16 %v1169
    %v1262 = vunpack.c.h.b16 %v1169
    %v1263 = vunpack.c.l.b16 %v1170
    %v1264 = vunpack.c.h.b16 %v1170
    %v1265 = vunpack.c.l.b16 %v1171
    %v1266 = vunpack.c.h.b16 %v1171
    %v1267 = vunpack.c.l.b16 %v1172
    %v1268 = vunpack.c.h.b16 %v1172
    %v1269 = vpack.c.b16 %v1209, %v1205
    %v1270 = vpack.c.b16 %v1210, %v1206
    %v1271 = vpack.c.b16 %v1211, %v1207
    %v1272 = vpack.c.b16 %v1212, %v1208
    %v1273 = vpack.c.b16 %v1217, %v1213
    %v1274 = vpack.c.b16 %v1218, %v1214
    %v1275 = vpack.c.b16 %v1219, %v1215
    %v1276 = vpack.c.b16 %v1220, %v1216
    %v1277 = vpack.c.b16 %v1225, %v1221
    %v1278 = vpack.c.b16 %v1226, %v1222
    %v1279 = vpack.c.b16 %v1227, %v1223
    %v1280 = vpack.c.b16 %v1228, %v1224
    %v1281 = vpack.c.b16 %v1233, %v1229
    %v1282 = vpack.c.b16 %v1234, %v1230
    %v1283 = vpack.c.b16 %v1235, %v1231
    %v1284 = vpack.c.b16 %v1236, %v1232
    %v1285 = vpack.c.b16 %v1241, %v1237
    %v1286 = vpack.c.b16 %v1242, %v1238
    %v1287 = vpack.c.b16 %v1243, %v1239
    %v1288 = vpack.c.b16 %v1244, %v1240
    %v1289 = vpack.c.b16 %v1249, %v1245
    %v1290 = vpack.c.b16 %v1250, %v1246
    %v1291 = vpack.c.b16 %v1251, %v1247
    %v1292 = vpack.c.b16 %v1252, %v1248
    %v1293 = vpack.c.b16 %v1257, %v1253
    %v1294 = vpack.c.b16 %v1258, %v1254
    %v1295 = vpack.c.b16 %v1259, %v1255
    %v1296 = vpack.c.b16 %v1260, %v1256
    %v1297 = vpack.c.b16 %v1265, %v1261
    %v1298 = vpack.c.b16 %v1266, %v1262
    %v1299 = vpack.c.b16 %v1267, %v1263
    %v1300 = vpack.c.b16 %v1268, %v1264
    %1333 = vmatpush.bf16.msra.mxu0 %v1297
    %1334 = vmatpush.bf16.msra.mxu0 %v1293
    %1335 = vmatpush.bf16.msra.mxu0 %v1289
    %1336 = vmatpush.bf16.msra.mxu0 %v1285
    %1337 = vmatpush.bf16.msra.mxu0 %v1281
    %1338 = vmatpush.bf16.msra.mxu0 %v1277
    %1339 = vmatpush.bf16.msra.mxu0 %v1273
    %1340 = vmatpush.bf16.msra.mxu0 %v1269
    %1341 = vmatmul.bf16.gmra.mxu0 %v1131
    %v1342 = vpop.f32.mrf.mxu0
    %v1343 = vadd.f32 0.0, %v1342
    %v1344 = vpop.f32.mrf.mxu0
    %1345 = vdwg.mxu0
    %1346 = vmatpush.bf16.msra.mxu0 %v1298
    %1347 = vmatpush.bf16.msra.mxu0 %v1294
    %1348 = vmatpush.bf16.msra.mxu0 %v1290
    %1349 = vmatpush.bf16.msra.mxu0 %v1286
    %1350 = vmatpush.bf16.msra.mxu0 %v1282
    %1351 = vmatpush.bf16.msra.mxu0 %v1278
    %1352 = vmatpush.bf16.msra.mxu0 %v1274
    %1353 = vmatpush.bf16.msra.mxu0 %v1270
    %1354 = vmatmul.bf16.gmra.mxu0 %v1131
    %v1355 = vpop.f32.mrf.mxu0
    %v1356 = vadd.f32 0.0, %v1355
    %v1357 = vpop.f32.mrf.mxu0
    %1358 = vdwg.mxu0
    %1359 = vmatpush.bf16.msra.mxu0 %v1299
    %1360 = vmatpush.bf16.msra.mxu0 %v1295
    %1361 = vmatpush.bf16.msra.mxu0 %v1291
    %1362 = vmatpush.bf16.msra.mxu0 %v1287
    %1363 = vmatpush.bf16.msra.mxu0 %v1283
    %1364 = vmatpush.bf16.msra.mxu0 %v1279
    %1365 = vmatpush.bf16.msra.mxu0 %v1275
    %1366 = vmatpush.bf16.msra.mxu0 %v1271
    %1367 = vmatmul.bf16.gmra.mxu0 %v1131
    %v1368 = vpop.f32.mrf.mxu0
    %v1369 = vadd.f32 0.0, %v1368
    %v1370 = vpop.f32.mrf.mxu0
    %1371 = vdwg.mxu0
    %1372 = vmatpush.bf16.msra.mxu0 %v1300
    %1373 = vmatpush.bf16.msra.mxu0 %v1296
    %1374 = vmatpush.bf16.msra.mxu0 %v1292
    %1375 = vmatpush.bf16.msra.mxu0 %v1288
    %1376 = vmatpush.bf16.msra.mxu0 %v1284
    %1377 = vmatpush.bf16.msra.mxu0 %v1280
    %1378 = vmatpush.bf16.msra.mxu0 %v1276
    %1379 = vmatpush.bf16.msra.mxu0 %v1272
    %1380 = vmatmul.bf16.gmra.mxu0 %v1131
    %v1381 = vpop.f32.mrf.mxu0
    %v1382 = vadd.f32 0.0, %v1381
    %v1383 = vpop.f32.mrf.mxu0
    %1384 = vdwg.mxu0
    %v1385 = vadd.f32 %v1137, %v1343
    %v1386 = vadd.f32 %v1138, %v1356
    %v1387 = vadd.f32 %v1139, %v1369
    %v1388 = vadd.f32 %v1140, %v1382
    %v1389 = vxor.u32 %v1385, 2147483648
    %v1390 = vxor.u32 %v1386, 2147483648
    %v1391 = vxor.u32 %v1387, 2147483648
    %v1392 = vmul.f32 %v1389, 1.442695
    %v1393 = vpow.pop %v1392
    %v1394 = vmul.f32 %v1390, 1.442695
    %v1395 = vpow.pop %v1394
    %v1396 = vmul.f32 %v1391, 1.442695
    %v1397 = vpow.pop %v1396
    %v1398 = vadd.f32 %v1393, 1.0
    %v1399 = vadd.f32 %v1395, 1.0
    %v1400 = vadd.f32 %v1397, 1.0
    %v1401 = vrcp.pop %v1398
    %v1402 = vmul.f32 %v1398, %v1401
    %v1403 = vsub.f32 1.0, %v1402
    %v1404 = vmul.f32 %v1401, %v1403
    %v1405 = vadd.f32 %v1401, %v1404
    %vm1406 = vweird.f32 %v1398
    %vm1407 = vweird.f32 %v1401
    %vm1408 = vmor %vm1406, %vm1407
    %v1409 = vsel %vm1408, %v1401, %v1405
    %v1410 = vand.u32 2147483647, %v1398
    %vm1411 = vcmp.eq.f32.partialorder %v1410, 8.507059e+37
    %v1412 = vand.u32 %v1398, 2147483648
    %v1413 = vor.u32 1.1754944e-38, %v1412
    %v1414 = vsel %vm1411, %v1413, %v1409
    %v1415 = vmul.f32 1.0, %v1414
    %v1416 = vrcp.pop %v1399
    %v1417 = vmul.f32 %v1399, %v1416
    %v1418 = vsub.f32 1.0, %v1417
    %v1419 = vmul.f32 %v1416, %v1418
    %v1420 = vadd.f32 %v1416, %v1419
    %vm1421 = vweird.f32 %v1399
    %vm1422 = vweird.f32 %v1416
    %vm1423 = vmor %vm1421, %vm1422
    %v1424 = vsel %vm1423, %v1416, %v1420
    %v1425 = vand.u32 2147483647, %v1399
    %vm1426 = vcmp.eq.f32.partialorder %v1425, 8.507059e+37
    %v1427 = vand.u32 %v1399, 2147483648
    %v1428 = vor.u32 1.1754944e-38, %v1427
    %v1429 = vsel %vm1426, %v1428, %v1424
    %v1430 = vmul.f32 1.0, %v1429
    %v1431 = vrcp.pop %v1400
    %v1432 = vmul.f32 %v1400, %v1431
    %v1433 = vsub.f32 1.0, %v1432
    %v1434 = vmul.f32 %v1431, %v1433
    %v1435 = vadd.f32 %v1431, %v1434
    %vm1436 = vweird.f32 %v1400
    %vm1437 = vweird.f32 %v1431
    %vm1438 = vmor %vm1436, %vm1437
    %v1439 = vsel %vm1438, %v1431, %v1435
    %v1440 = vand.u32 2147483647, %v1400
    %vm1441 = vcmp.eq.f32.partialorder %v1440, 8.507059e+37
    %v1442 = vand.u32 %v1400, 2147483648
    %v1443 = vor.u32 1.1754944e-38, %v1442
    %v1444 = vsel %vm1441, %v1443, %v1439
    %v1445 = vmul.f32 1.0, %v1444
    %v1446 = vtanh.pop %v1388
    %v1447 = vmul.f32 %v1430, %v1128
    %v1448 = vmul.f32 %v1415, %v1446
    %v1449 = vadd.f32 %v1447, %v1448
    %v1450 = vtanh.pop %v1449
    %v1451 = vmul.f32 %v1445, %v1450
    %v1452 = vpack.c.bf16 %v1451, %v1451
    %s1453 = scalar_lea.vmem [#allocation2], 8
    %1454 = vst [vmem:[%s1453] sm:$0xf] %v1452
    %s1455 = smul.u32 3, 4
    %s1456 = smul.addr %s1455, 8
    %s1457 = scalar_lea.vmem [#allocation4], %s1456
    %v1458 = vld [vmem:[%s1457] sm:$0xff]
    %v1459 = vld [vmem:[%s1457 + $0x8] sm:$0xff]
    %v1460 = vld [vmem:[%s1457 + $0x10] sm:$0xff]
    %v1461 = vld [vmem:[%s1457 + $0x18] sm:$0xff]
    %v1462 = vld [vmem:[#allocation7] sm:$0xff]
    %v1463 = vld [vmem:[#allocation7 + $0x8] sm:$0xff]
    %v1464 = vld [vmem:[#allocation7 + $0x10] sm:$0xff]
    %v1465 = vld [vmem:[#allocation7 + $0x18] sm:$0xff]
    %v1466 = vld [vmem:[#allocation7 + $0x20] sm:$0xff]
    %v1467 = vld [vmem:[#allocation7 + $0x28] sm:$0xff]
    %v1468 = vld [vmem:[#allocation7 + $0x30] sm:$0xff]
    %v1469 = vld [vmem:[#allocation7 + $0x38] sm:$0xff]
    %v1470 = vld [vmem:[#allocation7 + $0x40] sm:$0xff]
    %v1471 = vld [vmem:[#allocation7 + $0x48] sm:$0xff]
    %v1472 = vld [vmem:[#allocation7 + $0x50] sm:$0xff]
    %v1473 = vld [vmem:[#allocation7 + $0x58] sm:$0xff]
    %v1474 = vld [vmem:[#allocation7 + $0x60] sm:$0xff]
    %v1475 = vld [vmem:[#allocation7 + $0x68] sm:$0xff]
    %v1476 = vld [vmem:[#allocation7 + $0x70] sm:$0xff]
    %v1477 = vld [vmem:[#allocation7 + $0x78] sm:$0xff]
    %v1478 = vld [vmem:[#allocation7 + $0x80] sm:$0xff]
    %v1479 = vld [vmem:[#allocation7 + $0x88] sm:$0xff]
    %v1480 = vld [vmem:[#allocation7 + $0x90] sm:$0xff]
    %v1481 = vld [vmem:[#allocation7 + $0x98] sm:$0xff]
    %v1482 = vld [vmem:[#allocation7 + $0xa0] sm:$0xff]
    %v1483 = vld [vmem:[#allocation7 + $0xa8] sm:$0xff]
    %v1484 = vld [vmem:[#allocation7 + $0xb0] sm:$0xff]
    %v1485 = vld [vmem:[#allocation7 + $0xb8] sm:$0xff]
    %v1486 = vld [vmem:[#allocation7 + $0xc0] sm:$0xff]
    %v1487 = vld [vmem:[#allocation7 + $0xc8] sm:$0xff]
    %v1488 = vld [vmem:[#allocation7 + $0xd0] sm:$0xff]
    %v1489 = vld [vmem:[#allocation7 + $0xd8] sm:$0xff]
    %v1490 = vld [vmem:[#allocation7 + $0xe0] sm:$0xff]
    %v1491 = vld [vmem:[#allocation7 + $0xe8] sm:$0xff]
    %v1492 = vld [vmem:[#allocation7 + $0xf0] sm:$0xff]
    %v1493 = vld [vmem:[#allocation7 + $0xf8] sm:$0xff]
    %v1526 = vunpack.c.l.b16 %v1462
    %v1527 = vunpack.c.h.b16 %v1462
    %v1528 = vunpack.c.l.b16 %v1463
    %v1529 = vunpack.c.h.b16 %v1463
    %v1530 = vunpack.c.l.b16 %v1464
    %v1531 = vunpack.c.h.b16 %v1464
    %v1532 = vunpack.c.l.b16 %v1465
    %v1533 = vunpack.c.h.b16 %v1465
    %v1534 = vunpack.c.l.b16 %v1466
    %v1535 = vunpack.c.h.b16 %v1466
    %v1536 = vunpack.c.l.b16 %v1467
    %v1537 = vunpack.c.h.b16 %v1467
    %v1538 = vunpack.c.l.b16 %v1468
    %v1539 = vunpack.c.h.b16 %v1468
    %v1540 = vunpack.c.l.b16 %v1469
    %v1541 = vunpack.c.h.b16 %v1469
    %v1542 = vunpack.c.l.b16 %v1470
    %v1543 = vunpack.c.h.b16 %v1470
    %v1544 = vunpack.c.l.b16 %v1471
    %v1545 = vunpack.c.h.b16 %v1471
    %v1546 = vunpack.c.l.b16 %v1472
    %v1547 = vunpack.c.h.b16 %v1472
    %v1548 = vunpack.c.l.b16 %v1473
    %v1549 = vunpack.c.h.b16 %v1473
    %v1550 = vunpack.c.l.b16 %v1474
    %v1551 = vunpack.c.h.b16 %v1474
    %v1552 = vunpack.c.l.b16 %v1475
    %v1553 = vunpack.c.h.b16 %v1475
    %v1554 = vunpack.c.l.b16 %v1476
    %v1555 = vunpack.c.h.b16 %v1476
    %v1556 = vunpack.c.l.b16 %v1477
    %v1557 = vunpack.c.h.b16 %v1477
    %v1558 = vunpack.c.l.b16 %v1478
    %v1559 = vunpack.c.h.b16 %v1478
    %v1560 = vunpack.c.l.b16 %v1479
    %v1561 = vunpack.c.h.b16 %v1479
    %v1562 = vunpack.c.l.b16 %v1480
    %v1563 = vunpack.c.h.b16 %v1480
    %v1564 = vunpack.c.l.b16 %v1481
    %v1565 = vunpack.c.h.b16 %v1481
    %v1566 = vunpack.c.l.b16 %v1482
    %v1567 = vunpack.c.h.b16 %v1482
    %v1568 = vunpack.c.l.b16 %v1483
    %v1569 = vunpack.c.h.b16 %v1483
    %v1570 = vunpack.c.l.b16 %v1484
    %v1571 = vunpack.c.h.b16 %v1484
    %v1572 = vunpack.c.l.b16 %v1485
    %v1573 = vunpack.c.h.b16 %v1485
    %v1574 = vunpack.c.l.b16 %v1486
    %v1575 = vunpack.c.h.b16 %v1486
    %v1576 = vunpack.c.l.b16 %v1487
    %v1577 = vunpack.c.h.b16 %v1487
    %v1578 = vunpack.c.l.b16 %v1488
    %v1579 = vunpack.c.h.b16 %v1488
    %v1580 = vunpack.c.l.b16 %v1489
    %v1581 = vunpack.c.h.b16 %v1489
    %v1582 = vunpack.c.l.b16 %v1490
    %v1583 = vunpack.c.h.b16 %v1490
    %v1584 = vunpack.c.l.b16 %v1491
    %v1585 = vunpack.c.h.b16 %v1491
    %v1586 = vunpack.c.l.b16 %v1492
    %v1587 = vunpack.c.h.b16 %v1492
    %v1588 = vunpack.c.l.b16 %v1493
    %v1589 = vunpack.c.h.b16 %v1493
    %v1590 = vpack.c.b16 %v1530, %v1526
    %v1591 = vpack.c.b16 %v1531, %v1527
    %v1592 = vpack.c.b16 %v1532, %v1528
    %v1593 = vpack.c.b16 %v1533, %v1529
    %v1594 = vpack.c.b16 %v1538, %v1534
    %v1595 = vpack.c.b16 %v1539, %v1535
    %v1596 = vpack.c.b16 %v1540, %v1536
    %v1597 = vpack.c.b16 %v1541, %v1537
    %v1598 = vpack.c.b16 %v1546, %v1542
    %v1599 = vpack.c.b16 %v1547, %v1543
    %v1600 = vpack.c.b16 %v1548, %v1544
    %v1601 = vpack.c.b16 %v1549, %v1545
    %v1602 = vpack.c.b16 %v1554, %v1550
    %v1603 = vpack.c.b16 %v1555, %v1551
    %v1604 = vpack.c.b16 %v1556, %v1552
    %v1605 = vpack.c.b16 %v1557, %v1553
    %v1606 = vpack.c.b16 %v1562, %v1558
    %v1607 = vpack.c.b16 %v1563, %v1559
    %v1608 = vpack.c.b16 %v1564, %v1560
    %v1609 = vpack.c.b16 %v1565, %v1561
    %v1610 = vpack.c.b16 %v1570, %v1566
    %v1611 = vpack.c.b16 %v1571, %v1567
    %v1612 = vpack.c.b16 %v1572, %v1568
    %v1613 = vpack.c.b16 %v1573, %v1569
    %v1614 = vpack.c.b16 %v1578, %v1574
    %v1615 = vpack.c.b16 %v1579, %v1575
    %v1616 = vpack.c.b16 %v1580, %v1576
    %v1617 = vpack.c.b16 %v1581, %v1577
    %v1618 = vpack.c.b16 %v1586, %v1582
    %v1619 = vpack.c.b16 %v1587, %v1583
    %v1620 = vpack.c.b16 %v1588, %v1584
    %v1621 = vpack.c.b16 %v1589, %v1585
    %1654 = vmatpush.bf16.msra.mxu0 %v1618
    %1655 = vmatpush.bf16.msra.mxu0 %v1614
    %1656 = vmatpush.bf16.msra.mxu0 %v1610
    %1657 = vmatpush.bf16.msra.mxu0 %v1606
    %1658 = vmatpush.bf16.msra.mxu0 %v1602
    %1659 = vmatpush.bf16.msra.mxu0 %v1598
    %1660 = vmatpush.bf16.msra.mxu0 %v1594
    %1661 = vmatpush.bf16.msra.mxu0 %v1590
    %1662 = vmatmul.bf16.gmra.mxu0 %v1452
    %v1663 = vpop.f32.mrf.mxu0
    %v1664 = vadd.f32 0.0, %v1663
    %v1665 = vpop.f32.mrf.mxu0
    %1666 = vdwg.mxu0
    %1667 = vmatpush.bf16.msra.mxu0 %v1619
    %1668 = vmatpush.bf16.msra.mxu0 %v1615
    %1669 = vmatpush.bf16.msra.mxu0 %v1611
    %1670 = vmatpush.bf16.msra.mxu0 %v1607
    %1671 = vmatpush.bf16.msra.mxu0 %v1603
    %1672 = vmatpush.bf16.msra.mxu0 %v1599
    %1673 = vmatpush.bf16.msra.mxu0 %v1595
    %1674 = vmatpush.bf16.msra.mxu0 %v1591
    %1675 = vmatmul.bf16.gmra.mxu0 %v1452
    %v1676 = vpop.f32.mrf.mxu0
    %v1677 = vadd.f32 0.0, %v1676
    %v1678 = vpop.f32.mrf.mxu0
    %1679 = vdwg.mxu0
    %1680 = vmatpush.bf16.msra.mxu0 %v1620
    %1681 = vmatpush.bf16.msra.mxu0 %v1616
    %1682 = vmatpush.bf16.msra.mxu0 %v1612
    %1683 = vmatpush.bf16.msra.mxu0 %v1608
    %1684 = vmatpush.bf16.msra.mxu0 %v1604
    %1685 = vmatpush.bf16.msra.mxu0 %v1600
    %1686 = vmatpush.bf16.msra.mxu0 %v1596
    %1687 = vmatpush.bf16.msra.mxu0 %v1592
    %1688 = vmatmul.bf16.gmra.mxu0 %v1452
    %v1689 = vpop.f32.mrf.mxu0
    %v1690 = vadd.f32 0.0, %v1689
    %v1691 = vpop.f32.mrf.mxu0
    %1692 = vdwg.mxu0
    %1693 = vmatpush.bf16.msra.mxu0 %v1621
    %1694 = vmatpush.bf16.msra.mxu0 %v1617
    %1695 = vmatpush.bf16.msra.mxu0 %v1613
    %1696 = vmatpush.bf16.msra.mxu0 %v1609
    %1697 = vmatpush.bf16.msra.mxu0 %v1605
    %1698 = vmatpush.bf16.msra.mxu0 %v1601
    %1699 = vmatpush.bf16.msra.mxu0 %v1597
    %1700 = vmatpush.bf16.msra.mxu0 %v1593
    %1701 = vmatmul.bf16.gmra.mxu0 %v1452
    %v1702 = vpop.f32.mrf.mxu0
    %v1703 = vadd.f32 0.0, %v1702
    %v1704 = vpop.f32.mrf.mxu0
    %1705 = vdwg.mxu0
    %v1706 = vadd.f32 %v1458, %v1664
    %v1707 = vadd.f32 %v1459, %v1677
    %v1708 = vadd.f32 %v1460, %v1690
    %v1709 = vadd.f32 %v1461, %v1703
    %v1710 = vxor.u32 %v1706, 2147483648
    %v1711 = vxor.u32 %v1707, 2147483648
    %v1712 = vxor.u32 %v1708, 2147483648
    %v1713 = vmul.f32 %v1710, 1.442695
    %v1714 = vpow.pop %v1713
    %v1715 = vmul.f32 %v1711, 1.442695
    %v1716 = vpow.pop %v1715
    %v1717 = vmul.f32 %v1712, 1.442695
    %v1718 = vpow.pop %v1717
    %v1719 = vadd.f32 %v1714, 1.0
    %v1720 = vadd.f32 %v1716, 1.0
    %v1721 = vadd.f32 %v1718, 1.0
    %v1722 = vrcp.pop %v1719
    %v1723 = vmul.f32 %v1719, %v1722
    %v1724 = vsub.f32 1.0, %v1723
    %v1725 = vmul.f32 %v1722, %v1724
    %v1726 = vadd.f32 %v1722, %v1725
    %vm1727 = vweird.f32 %v1719
    %vm1728 = vweird.f32 %v1722
    %vm1729 = vmor %vm1727, %vm1728
    %v1730 = vsel %vm1729, %v1722, %v1726
    %v1731 = vand.u32 2147483647, %v1719
    %vm1732 = vcmp.eq.f32.partialorder %v1731, 8.507059e+37
    %v1733 = vand.u32 %v1719, 2147483648
    %v1734 = vor.u32 1.1754944e-38, %v1733
    %v1735 = vsel %vm1732, %v1734, %v1730
    %v1736 = vmul.f32 1.0, %v1735
    %v1737 = vrcp.pop %v1720
    %v1738 = vmul.f32 %v1720, %v1737
    %v1739 = vsub.f32 1.0, %v1738
    %v1740 = vmul.f32 %v1737, %v1739
    %v1741 = vadd.f32 %v1737, %v1740
    %vm1742 = vweird.f32 %v1720
    %vm1743 = vweird.f32 %v1737
    %vm1744 = vmor %vm1742, %vm1743
    %v1745 = vsel %vm1744, %v1737, %v1741
    %v1746 = vand.u32 2147483647, %v1720
    %vm1747 = vcmp.eq.f32.partialorder %v1746, 8.507059e+37
    %v1748 = vand.u32 %v1720, 2147483648
    %v1749 = vor.u32 1.1754944e-38, %v1748
    %v1750 = vsel %vm1747, %v1749, %v1745
    %v1751 = vmul.f32 1.0, %v1750
    %v1752 = vrcp.pop %v1721
    %v1753 = vmul.f32 %v1721, %v1752
    %v1754 = vsub.f32 1.0, %v1753
    %v1755 = vmul.f32 %v1752, %v1754
    %v1756 = vadd.f32 %v1752, %v1755
    %vm1757 = vweird.f32 %v1721
    %vm1758 = vweird.f32 %v1752
    %vm1759 = vmor %vm1757, %vm1758
    %v1760 = vsel %vm1759, %v1752, %v1756
    %v1761 = vand.u32 2147483647, %v1721
    %vm1762 = vcmp.eq.f32.partialorder %v1761, 8.507059e+37
    %v1763 = vand.u32 %v1721, 2147483648
    %v1764 = vor.u32 1.1754944e-38, %v1763
    %v1765 = vsel %vm1762, %v1764, %v1760
    %v1766 = vmul.f32 1.0, %v1765
    %v1767 = vtanh.pop %v1709
    %v1768 = vmul.f32 %v1751, %v1449
    %v1769 = vmul.f32 %v1736, %v1767
    %v1770 = vadd.f32 %v1768, %v1769
    %v1771 = vtanh.pop %v1770
    %v1772 = vmul.f32 %v1766, %v1771
    %v1773 = vpack.c.bf16 %v1772, %v1772
    %s1774 = scalar_lea.vmem [#allocation2], 12
    %1775 = vst [vmem:[%s1774] sm:$0xf] %v1773
    %s1776 = smul.u32 4, 4
    %s1777 = smul.addr %s1776, 8
    %s1778 = scalar_lea.vmem [#allocation4], %s1777
    %v1779 = vld [vmem:[%s1778] sm:$0xff]
    %v1780 = vld [vmem:[%s1778 + $0x8] sm:$0xff]
    %v1781 = vld [vmem:[%s1778 + $0x10] sm:$0xff]
    %v1782 = vld [vmem:[%s1778 + $0x18] sm:$0xff]
    %v1783 = vld [vmem:[#allocation7] sm:$0xff]
    %v1784 = vld [vmem:[#allocation7 + $0x8] sm:$0xff]
    %v1785 = vld [vmem:[#allocation7 + $0x10] sm:$0xff]
    %v1786 = vld [vmem:[#allocation7 + $0x18] sm:$0xff]
    %v1787 = vld [vmem:[#allocation7 + $0x20] sm:$0xff]
    %v1788 = vld [vmem:[#allocation7 + $0x28] sm:$0xff]
    %v1789 = vld [vmem:[#allocation7 + $0x30] sm:$0xff]
    %v1790 = vld [vmem:[#allocation7 + $0x38] sm:$0xff]
    %v1791 = vld [vmem:[#allocation7 + $0x40] sm:$0xff]
    %v1792 = vld [vmem:[#allocation7 + $0x48] sm:$0xff]
    %v1793 = vld [vmem:[#allocation7 + $0x50] sm:$0xff]
    %v1794 = vld [vmem:[#allocation7 + $0x58] sm:$0xff]
    %v1795 = vld [vmem:[#allocation7 + $0x60] sm:$0xff]
    %v1796 = vld [vmem:[#allocation7 + $0x68] sm:$0xff]
    %v1797 = vld [vmem:[#allocation7 + $0x70] sm:$0xff]
    %v1798 = vld [vmem:[#allocation7 + $0x78] sm:$0xff]
    %v1799 = vld [vmem:[#allocation7 + $0x80] sm:$0xff]
    %v1800 = vld [vmem:[#allocation7 + $0x88] sm:$0xff]
    %v1801 = vld [vmem:[#allocation7 + $0x90] sm:$0xff]
    %v1802 = vld [vmem:[#allocation7 + $0x98] sm:$0xff]
    %v1803 = vld [vmem:[#allocation7 + $0xa0] sm:$0xff]
    %v1804 = vld [vmem:[#allocation7 + $0xa8] sm:$0xff]
    %v1805 = vld [vmem:[#allocation7 + $0xb0] sm:$0xff]
    %v1806 = vld [vmem:[#allocation7 + $0xb8] sm:$0xff]
    %v1807 = vld [vmem:[#allocation7 + $0xc0] sm:$0xff]
    %v1808 = vld [vmem:[#allocation7 + $0xc8] sm:$0xff]
    %v1809 = vld [vmem:[#allocation7 + $0xd0] sm:$0xff]
    %v1810 = vld [vmem:[#allocation7 + $0xd8] sm:$0xff]
    %v1811 = vld [vmem:[#allocation7 + $0xe0] sm:$0xff]
    %v1812 = vld [vmem:[#allocation7 + $0xe8] sm:$0xff]
    %v1813 = vld [vmem:[#allocation7 + $0xf0] sm:$0xff]
    %v1814 = vld [vmem:[#allocation7 + $0xf8] sm:$0xff]
    %v1847 = vunpack.c.l.b16 %v1783
    %v1848 = vunpack.c.h.b16 %v1783
    %v1849 = vunpack.c.l.b16 %v1784
    %v1850 = vunpack.c.h.b16 %v1784
    %v1851 = vunpack.c.l.b16 %v1785
    %v1852 = vunpack.c.h.b16 %v1785
    %v1853 = vunpack.c.l.b16 %v1786
    %v1854 = vunpack.c.h.b16 %v1786
    %v1855 = vunpack.c.l.b16 %v1787
    %v1856 = vunpack.c.h.b16 %v1787
    %v1857 = vunpack.c.l.b16 %v1788
    %v1858 = vunpack.c.h.b16 %v1788
    %v1859 = vunpack.c.l.b16 %v1789
    %v1860 = vunpack.c.h.b16 %v1789
    %v1861 = vunpack.c.l.b16 %v1790
    %v1862 = vunpack.c.h.b16 %v1790
    %v1863 = vunpack.c.l.b16 %v1791
    %v1864 = vunpack.c.h.b16 %v1791
    %v1865 = vunpack.c.l.b16 %v1792
    %v1866 = vunpack.c.h.b16 %v1792
    %v1867 = vunpack.c.l.b16 %v1793
    %v1868 = vunpack.c.h.b16 %v1793
    %v1869 = vunpack.c.l.b16 %v1794
    %v1870 = vunpack.c.h.b16 %v1794
    %v1871 = vunpack.c.l.b16 %v1795
    %v1872 = vunpack.c.h.b16 %v1795
    %v1873 = vunpack.c.l.b16 %v1796
    %v1874 = vunpack.c.h.b16 %v1796
    %v1875 = vunpack.c.l.b16 %v1797
    %v1876 = vunpack.c.h.b16 %v1797
    %v1877 = vunpack.c.l.b16 %v1798
    %v1878 = vunpack.c.h.b16 %v1798
    %v1879 = vunpack.c.l.b16 %v1799
    %v1880 = vunpack.c.h.b16 %v1799
    %v1881 = vunpack.c.l.b16 %v1800
    %v1882 = vunpack.c.h.b16 %v1800
    %v1883 = vunpack.c.l.b16 %v1801
    %v1884 = vunpack.c.h.b16 %v1801
    %v1885 = vunpack.c.l.b16 %v1802
    %v1886 = vunpack.c.h.b16 %v1802
    %v1887 = vunpack.c.l.b16 %v1803
    %v1888 = vunpack.c.h.b16 %v1803
    %v1889 = vunpack.c.l.b16 %v1804
    %v1890 = vunpack.c.h.b16 %v1804
    %v1891 = vunpack.c.l.b16 %v1805
    %v1892 = vunpack.c.h.b16 %v1805
    %v1893 = vunpack.c.l.b16 %v1806
    %v1894 = vunpack.c.h.b16 %v1806
    %v1895 = vunpack.c.l.b16 %v1807
    %v1896 = vunpack.c.h.b16 %v1807
    %v1897 = vunpack.c.l.b16 %v1808
    %v1898 = vunpack.c.h.b16 %v1808
    %v1899 = vunpack.c.l.b16 %v1809
    %v1900 = vunpack.c.h.b16 %v1809
    %v1901 = vunpack.c.l.b16 %v1810
    %v1902 = vunpack.c.h.b16 %v1810
    %v1903 = vunpack.c.l.b16 %v1811
    %v1904 = vunpack.c.h.b16 %v1811
    %v1905 = vunpack.c.l.b16 %v1812
    %v1906 = vunpack.c.h.b16 %v1812
    %v1907 = vunpack.c.l.b16 %v1813
    %v1908 = vunpack.c.h.b16 %v1813
    %v1909 = vunpack.c.l.b16 %v1814
    %v1910 = vunpack.c.h.b16 %v1814
    %v1911 = vpack.c.b16 %v1851, %v1847
    %v1912 = vpack.c.b16 %v1852, %v1848
    %v1913 = vpack.c.b16 %v1853, %v1849
    %v1914 = vpack.c.b16 %v1854, %v1850
    %v1915 = vpack.c.b16 %v1859, %v1855
    %v1916 = vpack.c.b16 %v1860, %v1856
    %v1917 = vpack.c.b16 %v1861, %v1857
    %v1918 = vpack.c.b16 %v1862, %v1858
    %v1919 = vpack.c.b16 %v1867, %v1863
    %v1920 = vpack.c.b16 %v1868, %v1864
    %v1921 = vpack.c.b16 %v1869, %v1865
    %v1922 = vpack.c.b16 %v1870, %v1866
    %v1923 = vpack.c.b16 %v1875, %v1871
    %v1924 = vpack.c.b16 %v1876, %v1872
    %v1925 = vpack.c.b16 %v1877, %v1873
    %v1926 = vpack.c.b16 %v1878, %v1874
    %v1927 = vpack.c.b16 %v1883, %v1879
    %v1928 = vpack.c.b16 %v1884, %v1880
    %v1929 = vpack.c.b16 %v1885, %v1881
    %v1930 = vpack.c.b16 %v1886, %v1882
    %v1931 = vpack.c.b16 %v1891, %v1887
    %v1932 = vpack.c.b16 %v1892, %v1888
    %v1933 = vpack.c.b16 %v1893, %v1889
    %v1934 = vpack.c.b16 %v1894, %v1890
    %v1935 = vpack.c.b16 %v1899, %v1895
    %v1936 = vpack.c.b16 %v1900, %v1896
    %v1937 = vpack.c.b16 %v1901, %v1897
    %v1938 = vpack.c.b16 %v1902, %v1898
    %v1939 = vpack.c.b16 %v1907, %v1903
    %v1940 = vpack.c.b16 %v1908, %v1904
    %v1941 = vpack.c.b16 %v1909, %v1905
    %v1942 = vpack.c.b16 %v1910, %v1906
    %1975 = vmatpush.bf16.msra.mxu0 %v1939
    %1976 = vmatpush.bf16.msra.mxu0 %v1935
    %1977 = vmatpush.bf16.msra.mxu0 %v1931
    %1978 = vmatpush.bf16.msra.mxu0 %v1927
    %1979 = vmatpush.bf16.msra.mxu0 %v1923
    %1980 = vmatpush.bf16.msra.mxu0 %v1919
    %1981 = vmatpush.bf16.msra.mxu0 %v1915
    %1982 = vmatpush.bf16.msra.mxu0 %v1911
    %1983 = vmatmul.bf16.gmra.mxu0 %v1773
    %v1984 = vpop.f32.mrf.mxu0
    %v1985 = vadd.f32 0.0, %v1984
    %v1986 = vpop.f32.mrf.mxu0
    %1987 = vdwg.mxu0
    %1988 = vmatpush.bf16.msra.mxu0 %v1940
    %1989 = vmatpush.bf16.msra.mxu0 %v1936
    %1990 = vmatpush.bf16.msra.mxu0 %v1932
    %1991 = vmatpush.bf16.msra.mxu0 %v1928
    %1992 = vmatpush.bf16.msra.mxu0 %v1924
    %1993 = vmatpush.bf16.msra.mxu0 %v1920
    %1994 = vmatpush.bf16.msra.mxu0 %v1916
    %1995 = vmatpush.bf16.msra.mxu0 %v1912
    %1996 = vmatmul.bf16.gmra.mxu0 %v1773
    %v1997 = vpop.f32.mrf.mxu0
    %v1998 = vadd.f32 0.0, %v1997
    %v1999 = vpop.f32.mrf.mxu0
    %2000 = vdwg.mxu0
    %2001 = vmatpush.bf16.msra.mxu0 %v1941
    %2002 = vmatpush.bf16.msra.mxu0 %v1937
    %2003 = vmatpush.bf16.msra.mxu0 %v1933
    %2004 = vmatpush.bf16.msra.mxu0 %v1929
    %2005 = vmatpush.bf16.msra.mxu0 %v1925
    %2006 = vmatpush.bf16.msra.mxu0 %v1921
    %2007 = vmatpush.bf16.msra.mxu0 %v1917
    %2008 = vmatpush.bf16.msra.mxu0 %v1913
    %2009 = vmatmul.bf16.gmra.mxu0 %v1773
    %v2010 = vpop.f32.mrf.mxu0
    %v2011 = vadd.f32 0.0, %v2010
    %v2012 = vpop.f32.mrf.mxu0
    %2013 = vdwg.mxu0
    %2014 = vmatpush.bf16.msra.mxu0 %v1942
    %2015 = vmatpush.bf16.msra.mxu0 %v1938
    %2016 = vmatpush.bf16.msra.mxu0 %v1934
    %2017 = vmatpush.bf16.msra.mxu0 %v1930
    %2018 = vmatpush.bf16.msra.mxu0 %v1926
    %2019 = vmatpush.bf16.msra.mxu0 %v1922
    %2020 = vmatpush.bf16.msra.mxu0 %v1918
    %2021 = vmatpush.bf16.msra.mxu0 %v1914
    %2022 = vmatmul.bf16.gmra.mxu0 %v1773
    %v2023 = vpop.f32.mrf.mxu0
    %v2024 = vadd.f32 0.0, %v2023
    %v2025 = vpop.f32.mrf.mxu0
    %2026 = vdwg.mxu0
    %v2027 = vadd.f32 %v1779, %v1985
    %v2028 = vadd.f32 %v1780, %v1998
    %v2029 = vadd.f32 %v1781, %v2011
    %v2030 = vadd.f32 %v1782, %v2024
    %v2031 = vxor.u32 %v2027, 2147483648
    %v2032 = vxor.u32 %v2028, 2147483648
    %v2033 = vxor.u32 %v2029, 2147483648
    %v2034 = vmul.f32 %v2031, 1.442695
    %v2035 = vpow.pop %v2034
    %v2036 = vmul.f32 %v2032, 1.442695
    %v2037 = vpow.pop %v2036
    %v2038 = vmul.f32 %v2033, 1.442695
    %v2039 = vpow.pop %v2038
    %v2040 = vadd.f32 %v2035, 1.0
    %v2041 = vadd.f32 %v2037, 1.0
    %v2042 = vadd.f32 %v2039, 1.0
    %v2043 = vrcp.pop %v2040
    %v2044 = vmul.f32 %v2040, %v2043
    %v2045 = vsub.f32 1.0, %v2044
    %v2046 = vmul.f32 %v2043, %v2045
    %v2047 = vadd.f32 %v2043, %v2046
    %vm2048 = vweird.f32 %v2040
    %vm2049 = vweird.f32 %v2043
    %vm2050 = vmor %vm2048, %vm2049
    %v2051 = vsel %vm2050, %v2043, %v2047
    %v2052 = vand.u32 2147483647, %v2040
    %vm2053 = vcmp.eq.f32.partialorder %v2052, 8.507059e+37
    %v2054 = vand.u32 %v2040, 2147483648
    %v2055 = vor.u32 1.1754944e-38, %v2054
    %v2056 = vsel %vm2053, %v2055, %v2051
    %v2057 = vmul.f32 1.0, %v2056
    %v2058 = vrcp.pop %v2041
    %v2059 = vmul.f32 %v2041, %v2058
    %v2060 = vsub.f32 1.0, %v2059
    %v2061 = vmul.f32 %v2058, %v2060
    %v2062 = vadd.f32 %v2058, %v2061
    %vm2063 = vweird.f32 %v2041
    %vm2064 = vweird.f32 %v2058
    %vm2065 = vmor %vm2063, %vm2064
    %v2066 = vsel %vm2065, %v2058, %v2062
    %v2067 = vand.u32 2147483647, %v2041
    %vm2068 = vcmp.eq.f32.partialorder %v2067, 8.507059e+37
    %v2069 = vand.u32 %v2041, 2147483648
    %v2070 = vor.u32 1.1754944e-38, %v2069
    %v2071 = vsel %vm2068, %v2070, %v2066
    %v2072 = vmul.f32 1.0, %v2071
    %v2073 = vrcp.pop %v2042
    %v2074 = vmul.f32 %v2042, %v2073
    %v2075 = vsub.f32 1.0, %v2074
    %v2076 = vmul.f32 %v2073, %v2075
    %v2077 = vadd.f32 %v2073, %v2076
    %vm2078 = vweird.f32 %v2042
    %vm2079 = vweird.f32 %v2073
    %vm2080 = vmor %vm2078, %vm2079
    %v2081 = vsel %vm2080, %v2073, %v2077
    %v2082 = vand.u32 2147483647, %v2042
    %vm2083 = vcmp.eq.f32.partialorder %v2082, 8.507059e+37
    %v2084 = vand.u32 %v2042, 2147483648
    %v2085 = vor.u32 1.1754944e-38, %v2084
    %v2086 = vsel %vm2083, %v2085, %v2081
    %v2087 = vmul.f32 1.0, %v2086
    %v2088 = vtanh.pop %v2030
    %v2089 = vmul.f32 %v2072, %v1770
    %v2090 = vmul.f32 %v2057, %v2088
    %v2091 = vadd.f32 %v2089, %v2090
    %v2092 = vtanh.pop %v2091
    %v2093 = vmul.f32 %v2087, %v2092
    %v2094 = vpack.c.bf16 %v2093, %v2093
    %s2095 = scalar_lea.vmem [#allocation2], 16
    %2096 = vst [vmem:[%s2095] sm:$0xf] %v2094
    %s2097 = smul.u32 5, 4
    %s2098 = smul.addr %s2097, 8
    %s2099 = scalar_lea.vmem [#allocation4], %s2098
    %v2100 = vld [vmem:[%s2099] sm:$0xff]
    %v2101 = vld [vmem:[%s2099 + $0x8] sm:$0xff]
    %v2102 = vld [vmem:[%s2099 + $0x10] sm:$0xff]
    %v2103 = vld [vmem:[%s2099 + $0x18] sm:$0xff]
    %v2104 = vld [vmem:[#allocation7] sm:$0xff]
    %v2105 = vld [vmem:[#allocation7 + $0x8] sm:$0xff]
    %v2106 = vld [vmem:[#allocation7 + $0x10] sm:$0xff]
    %v2107 = vld [vmem:[#allocation7 + $0x18] sm:$0xff]
    %v2108 = vld [vmem:[#allocation7 + $0x20] sm:$0xff]
    %v2109 = vld [vmem:[#allocation7 + $0x28] sm:$0xff]
    %v2110 = vld [vmem:[#allocation7 + $0x30] sm:$0xff]
    %v2111 = vld [vmem:[#allocation7 + $0x38] sm:$0xff]
    %v2112 = vld [vmem:[#allocation7 + $0x40] sm:$0xff]
    %v2113 = vld [vmem:[#allocation7 + $0x48] sm:$0xff]
    %v2114 = vld [vmem:[#allocation7 + $0x50] sm:$0xff]
    %v2115 = vld [vmem:[#allocation7 + $0x58] sm:$0xff]
    %v2116 = vld [vmem:[#allocation7 + $0x60] sm:$0xff]
    %v2117 = vld [vmem:[#allocation7 + $0x68] sm:$0xff]
    %v2118 = vld [vmem:[#allocation7 + $0x70] sm:$0xff]
    %v2119 = vld [vmem:[#allocation7 + $0x78] sm:$0xff]
    %v2120 = vld [vmem:[#allocation7 + $0x80] sm:$0xff]
    %v2121 = vld [vmem:[#allocation7 + $0x88] sm:$0xff]
    %v2122 = vld [vmem:[#allocation7 + $0x90] sm:$0xff]
    %v2123 = vld [vmem:[#allocation7 + $0x98] sm:$0xff]
    %v2124 = vld [vmem:[#allocation7 + $0xa0] sm:$0xff]
    %v2125 = vld [vmem:[#allocation7 + $0xa8] sm:$0xff]
    %v2126 = vld [vmem:[#allocation7 + $0xb0] sm:$0xff]
    %v2127 = vld [vmem:[#allocation7 + $0xb8] sm:$0xff]
    %v2128 = vld [vmem:[#allocation7 + $0xc0] sm:$0xff]
    %v2129 = vld [vmem:[#allocation7 + $0xc8] sm:$0xff]
    %v2130 = vld [vmem:[#allocation7 + $0xd0] sm:$0xff]
    %v2131 = vld [vmem:[#allocation7 + $0xd8] sm:$0xff]
    %v2132 = vld [vmem:[#allocation7 + $0xe0] sm:$0xff]
    %v2133 = vld [vmem:[#allocation7 + $0xe8] sm:$0xff]
    %v2134 = vld [vmem:[#allocation7 + $0xf0] sm:$0xff]
    %v2135 = vld [vmem:[#allocation7 + $0xf8] sm:$0xff]
    %v2168 = vunpack.c.l.b16 %v2104
    %v2169 = vunpack.c.h.b16 %v2104
    %v2170 = vunpack.c.l.b16 %v2105
    %v2171 = vunpack.c.h.b16 %v2105
    %v2172 = vunpack.c.l.b16 %v2106
    %v2173 = vunpack.c.h.b16 %v2106
    %v2174 = vunpack.c.l.b16 %v2107
    %v2175 = vunpack.c.h.b16 %v2107
    %v2176 = vunpack.c.l.b16 %v2108
    %v2177 = vunpack.c.h.b16 %v2108
    %v2178 = vunpack.c.l.b16 %v2109
    %v2179 = vunpack.c.h.b16 %v2109
    %v2180 = vunpack.c.l.b16 %v2110
    %v2181 = vunpack.c.h.b16 %v2110
    %v2182 = vunpack.c.l.b16 %v2111
    %v2183 = vunpack.c.h.b16 %v2111
    %v2184 = vunpack.c.l.b16 %v2112
    %v2185 = vunpack.c.h.b16 %v2112
    %v2186 = vunpack.c.l.b16 %v2113
    %v2187 = vunpack.c.h.b16 %v2113
    %v2188 = vunpack.c.l.b16 %v2114
    %v2189 = vunpack.c.h.b16 %v2114
    %v2190 = vunpack.c.l.b16 %v2115
    %v2191 = vunpack.c.h.b16 %v2115
    %v2192 = vunpack.c.l.b16 %v2116
    %v2193 = vunpack.c.h.b16 %v2116
    %v2194 = vunpack.c.l.b16 %v2117
    %v2195 = vunpack.c.h.b16 %v2117
    %v2196 = vunpack.c.l.b16 %v2118
    %v2197 = vunpack.c.h.b16 %v2118
    %v2198 = vunpack.c.l.b16 %v2119
    %v2199 = vunpack.c.h.b16 %v2119
    %v2200 = vunpack.c.l.b16 %v2120
    %v2201 = vunpack.c.h.b16 %v2120
    %v2202 = vunpack.c.l.b16 %v2121
    %v2203 = vunpack.c.h.b16 %v2121
    %v2204 = vunpack.c.l.b16 %v2122
    %v2205 = vunpack.c.h.b16 %v2122
    %v2206 = vunpack.c.l.b16 %v2123
    %v2207 = vunpack.c.h.b16 %v2123
    %v2208 = vunpack.c.l.b16 %v2124
    %v2209 = vunpack.c.h.b16 %v2124
    %v2210 = vunpack.c.l.b16 %v2125
    %v2211 = vunpack.c.h.b16 %v2125
    %v2212 = vunpack.c.l.b16 %v2126
    %v2213 = vunpack.c.h.b16 %v2126
    %v2214 = vunpack.c.l.b16 %v2127
    %v2215 = vunpack.c.h.b16 %v2127
    %v2216 = vunpack.c.l.b16 %v2128
    %v2217 = vunpack.c.h.b16 %v2128
    %v2218 = vunpack.c.l.b16 %v2129
    %v2219 = vunpack.c.h.b16 %v2129
    %v2220 = vunpack.c.l.b16 %v2130
    %v2221 = vunpack.c.h.b16 %v2130
    %v2222 = vunpack.c.l.b16 %v2131
    %v2223 = vunpack.c.h.b16 %v2131
    %v2224 = vunpack.c.l.b16 %v2132
    %v2225 = vunpack.c.h.b16 %v2132
    %v2226 = vunpack.c.l.b16 %v2133
    %v2227 = vunpack.c.h.b16 %v2133
    %v2228 = vunpack.c.l.b16 %v2134
    %v2229 = vunpack.c.h.b16 %v2134
    %v2230 = vunpack.c.l.b16 %v2135
    %v2231 = vunpack.c.h.b16 %v2135
    %v2232 = vpack.c.b16 %v2172, %v2168
    %v2233 = vpack.c.b16 %v2173, %v2169
    %v2234 = vpack.c.b16 %v2174, %v2170
    %v2235 = vpack.c.b16 %v2175, %v2171
    %v2236 = vpack.c.b16 %v2180, %v2176
    %v2237 = vpack.c.b16 %v2181, %v2177
    %v2238 = vpack.c.b16 %v2182, %v2178
    %v2239 = vpack.c.b16 %v2183, %v2179
    %v2240 = vpack.c.b16 %v2188, %v2184
    %v2241 = vpack.c.b16 %v2189, %v2185
    %v2242 = vpack.c.b16 %v2190, %v2186
    %v2243 = vpack.c.b16 %v2191, %v2187
    %v2244 = vpack.c.b16 %v2196, %v2192
    %v2245 = vpack.c.b16 %v2197, %v2193
    %v2246 = vpack.c.b16 %v2198, %v2194
    %v2247 = vpack.c.b16 %v2199, %v2195
    %v2248 = vpack.c.b16 %v2204, %v2200
    %v2249 = vpack.c.b16 %v2205, %v2201
    %v2250 = vpack.c.b16 %v2206, %v2202
    %v2251 = vpack.c.b16 %v2207, %v2203
    %v2252 = vpack.c.b16 %v2212, %v2208
    %v2253 = vpack.c.b16 %v2213, %v2209
    %v2254 = vpack.c.b16 %v2214, %v2210
    %v2255 = vpack.c.b16 %v2215, %v2211
    %v2256 = vpack.c.b16 %v2220, %v2216
    %v2257 = vpack.c.b16 %v2221, %v2217
    %v2258 = vpack.c.b16 %v2222, %v2218
    %v2259 = vpack.c.b16 %v2223, %v2219
    %v2260 = vpack.c.b16 %v2228, %v2224
    %v2261 = vpack.c.b16 %v2229, %v2225
    %v2262 = vpack.c.b16 %v2230, %v2226
    %v2263 = vpack.c.b16 %v2231, %v2227
    %2296 = vmatpush.bf16.msra.mxu0 %v2260
    %2297 = vmatpush.bf16.msra.mxu0 %v2256
    %2298 = vmatpush.bf16.msra.mxu0 %v2252
    %2299 = vmatpush.bf16.msra.mxu0 %v2248
    %2300 = vmatpush.bf16.msra.mxu0 %v2244
    %2301 = vmatpush.bf16.msra.mxu0 %v2240
    %2302 = vmatpush.bf16.msra.mxu0 %v2236
    %2303 = vmatpush.bf16.msra.mxu0 %v2232
    %2304 = vmatmul.bf16.gmra.mxu0 %v2094
    %v2305 = vpop.f32.mrf.mxu0
    %v2306 = vadd.f32 0.0, %v2305
    %v2307 = vpop.f32.mrf.mxu0
    %2308 = vdwg.mxu0
    %2309 = vmatpush.bf16.msra.mxu0 %v2261
    %2310 = vmatpush.bf16.msra.mxu0 %v2257
    %2311 = vmatpush.bf16.msra.mxu0 %v2253
    %2312 = vmatpush.bf16.msra.mxu0 %v2249
    %2313 = vmatpush.bf16.msra.mxu0 %v2245
    %2314 = vmatpush.bf16.msra.mxu0 %v2241
    %2315 = vmatpush.bf16.msra.mxu0 %v2237
    %2316 = vmatpush.bf16.msra.mxu0 %v2233
    %2317 = vmatmul.bf16.gmra.mxu0 %v2094
    %v2318 = vpop.f32.mrf.mxu0
    %v2319 = vadd.f32 0.0, %v2318
    %v2320 = vpop.f32.mrf.mxu0
    %2321 = vdwg.mxu0
    %2322 = vmatpush.bf16.msra.mxu0 %v2262
    %2323 = vmatpush.bf16.msra.mxu0 %v2258
    %2324 = vmatpush.bf16.msra.mxu0 %v2254
    %2325 = vmatpush.bf16.msra.mxu0 %v2250
    %2326 = vmatpush.bf16.msra.mxu0 %v2246
    %2327 = vmatpush.bf16.msra.mxu0 %v2242
    %2328 = vmatpush.bf16.msra.mxu0 %v2238
    %2329 = vmatpush.bf16.msra.mxu0 %v2234
    %2330 = vmatmul.bf16.gmra.mxu0 %v2094
    %v2331 = vpop.f32.mrf.mxu0
    %v2332 = vadd.f32 0.0, %v2331
    %v2333 = vpop.f32.mrf.mxu0
    %2334 = vdwg.mxu0
    %2335 = vmatpush.bf16.msra.mxu0 %v2263
    %2336 = vmatpush.bf16.msra.mxu0 %v2259
    %2337 = vmatpush.bf16.msra.mxu0 %v2255
    %2338 = vmatpush.bf16.msra.mxu0 %v2251
    %2339 = vmatpush.bf16.msra.mxu0 %v2247
    %2340 = vmatpush.bf16.msra.mxu0 %v2243
    %2341 = vmatpush.bf16.msra.mxu0 %v2239
    %2342 = vmatpush.bf16.msra.mxu0 %v2235
    %2343 = vmatmul.bf16.gmra.mxu0 %v2094
    %v2344 = vpop.f32.mrf.mxu0
    %v2345 = vadd.f32 0.0, %v2344
    %v2346 = vpop.f32.mrf.mxu0
    %2347 = vdwg.mxu0
    %v2348 = vadd.f32 %v2100, %v2306
    %v2349 = vadd.f32 %v2101, %v2319
    %v2350 = vadd.f32 %v2102, %v2332
    %v2351 = vadd.f32 %v2103, %v2345
    %v2352 = vxor.u32 %v2348, 2147483648
    %v2353 = vxor.u32 %v2349, 2147483648
    %v2354 = vxor.u32 %v2350, 2147483648
    %v2355 = vmul.f32 %v2352, 1.442695
    %v2356 = vpow.pop %v2355
    %v2357 = vmul.f32 %v2353, 1.442695
    %v2358 = vpow.pop %v2357
    %v2359 = vmul.f32 %v2354, 1.442695
    %v2360 = vpow.pop %v2359
    %v2361 = vadd.f32 %v2356, 1.0
    %v2362 = vadd.f32 %v2358, 1.0
    %v2363 = vadd.f32 %v2360, 1.0
    %v2364 = vrcp.pop %v2361
    %v2365 = vmul.f32 %v2361, %v2364
    %v2366 = vsub.f32 1.0, %v2365
    %v2367 = vmul.f32 %v2364, %v2366
    %v2368 = vadd.f32 %v2364, %v2367
    %vm2369 = vweird.f32 %v2361
    %vm2370 = vweird.f32 %v2364
    %vm2371 = vmor %vm2369, %vm2370
    %v2372 = vsel %vm2371, %v2364, %v2368
    %v2373 = vand.u32 2147483647, %v2361
    %vm2374 = vcmp.eq.f32.partialorder %v2373, 8.507059e+37
    %v2375 = vand.u32 %v2361, 2147483648
    %v2376 = vor.u32 1.1754944e-38, %v2375
    %v2377 = vsel %vm2374, %v2376, %v2372
    %v2378 = vmul.f32 1.0, %v2377
    %v2379 = vrcp.pop %v2362
    %v2380 = vmul.f32 %v2362, %v2379
    %v2381 = vsub.f32 1.0, %v2380
    %v2382 = vmul.f32 %v2379, %v2381
    %v2383 = vadd.f32 %v2379, %v2382
    %vm2384 = vweird.f32 %v2362
    %vm2385 = vweird.f32 %v2379
    %vm2386 = vmor %vm2384, %vm2385
    %v2387 = vsel %vm2386, %v2379, %v2383
    %v2388 = vand.u32 2147483647, %v2362
    %vm2389 = vcmp.eq.f32.partialorder %v2388, 8.507059e+37
    %v2390 = vand.u32 %v2362, 2147483648
    %v2391 = vor.u32 1.1754944e-38, %v2390
    %v2392 = vsel %vm2389, %v2391, %v2387
    %v2393 = vmul.f32 1.0, %v2392
    %v2394 = vrcp.pop %v2363
    %v2395 = vmul.f32 %v2363, %v2394
    %v2396 = vsub.f32 1.0, %v2395
    %v2397 = vmul.f32 %v2394, %v2396
    %v2398 = vadd.f32 %v2394, %v2397
    %vm2399 = vweird.f32 %v2363
    %vm2400 = vweird.f32 %v2394
    %vm2401 = vmor %vm2399, %vm2400
    %v2402 = vsel %vm2401, %v2394, %v2398
    %v2403 = vand.u32 2147483647, %v2363
    %vm2404 = vcmp.eq.f32.partialorder %v2403, 8.507059e+37
    %v2405 = vand.u32 %v2363, 2147483648
    %v2406 = vor.u32 1.1754944e-38, %v2405
    %v2407 = vsel %vm2404, %v2406, %v2402
    %v2408 = vmul.f32 1.0, %v2407
    %v2409 = vtanh.pop %v2351
    %v2410 = vmul.f32 %v2393, %v2091
    %v2411 = vmul.f32 %v2378, %v2409
    %v2412 = vadd.f32 %v2410, %v2411
    %v2413 = vtanh.pop %v2412
    %v2414 = vmul.f32 %v2408, %v2413
    %v2415 = vpack.c.bf16 %v2414, %v2414
    %s2416 = scalar_lea.vmem [#allocation2], 20
    %2417 = vst [vmem:[%s2416] sm:$0xf] %v2415
    %s2418 = smul.u32 6, 4
    %s2419 = smul.addr %s2418, 8
    %s2420 = scalar_lea.vmem [#allocation4], %s2419
    %v2421 = vld [vmem:[%s2420] sm:$0xff]
    %v2422 = vld [vmem:[%s2420 + $0x8] sm:$0xff]
    %v2423 = vld [vmem:[%s2420 + $0x10] sm:$0xff]
    %v2424 = vld [vmem:[%s2420 + $0x18] sm:$0xff]
    %v2425 = vld [vmem:[#allocation7] sm:$0xff]
    %v2426 = vld [vmem:[#allocation7 + $0x8] sm:$0xff]
    %v2427 = vld [vmem:[#allocation7 + $0x10] sm:$0xff]
    %v2428 = vld [vmem:[#allocation7 + $0x18] sm:$0xff]
    %v2429 = vld [vmem:[#allocation7 + $0x20] sm:$0xff]
    %v2430 = vld [vmem:[#allocation7 + $0x28] sm:$0xff]
    %v2431 = vld [vmem:[#allocation7 + $0x30] sm:$0xff]
    %v2432 = vld [vmem:[#allocation7 + $0x38] sm:$0xff]
    %v2433 = vld [vmem:[#allocation7 + $0x40] sm:$0xff]
    %v2434 = vld [vmem:[#allocation7 + $0x48] sm:$0xff]
    %v2435 = vld [vmem:[#allocation7 + $0x50] sm:$0xff]
    %v2436 = vld [vmem:[#allocation7 + $0x58] sm:$0xff]
    %v2437 = vld [vmem:[#allocation7 + $0x60] sm:$0xff]
    %v2438 = vld [vmem:[#allocation7 + $0x68] sm:$0xff]
    %v2439 = vld [vmem:[#allocation7 + $0x70] sm:$0xff]
    %v2440 = vld [vmem:[#allocation7 + $0x78] sm:$0xff]
    %v2441 = vld [vmem:[#allocation7 + $0x80] sm:$0xff]
    %v2442 = vld [vmem:[#allocation7 + $0x88] sm:$0xff]
    %v2443 = vld [vmem:[#allocation7 + $0x90] sm:$0xff]
    %v2444 = vld [vmem:[#allocation7 + $0x98] sm:$0xff]
    %v2445 = vld [vmem:[#allocation7 + $0xa0] sm:$0xff]
    %v2446 = vld [vmem:[#allocation7 + $0xa8] sm:$0xff]
    %v2447 = vld [vmem:[#allocation7 + $0xb0] sm:$0xff]
    %v2448 = vld [vmem:[#allocation7 + $0xb8] sm:$0xff]
    %v2449 = vld [vmem:[#allocation7 + $0xc0] sm:$0xff]
    %v2450 = vld [vmem:[#allocation7 + $0xc8] sm:$0xff]
    %v2451 = vld [vmem:[#allocation7 + $0xd0] sm:$0xff]
    %v2452 = vld [vmem:[#allocation7 + $0xd8] sm:$0xff]
    %v2453 = vld [vmem:[#allocation7 + $0xe0] sm:$0xff]
    %v2454 = vld [vmem:[#allocation7 + $0xe8] sm:$0xff]
    %v2455 = vld [vmem:[#allocation7 + $0xf0] sm:$0xff]
    %v2456 = vld [vmem:[#allocation7 + $0xf8] sm:$0xff]
    %v2489 = vunpack.c.l.b16 %v2425
    %v2490 = vunpack.c.h.b16 %v2425
    %v2491 = vunpack.c.l.b16 %v2426
    %v2492 = vunpack.c.h.b16 %v2426
    %v2493 = vunpack.c.l.b16 %v2427
    %v2494 = vunpack.c.h.b16 %v2427
    %v2495 = vunpack.c.l.b16 %v2428
    %v2496 = vunpack.c.h.b16 %v2428
    %v2497 = vunpack.c.l.b16 %v2429
    %v2498 = vunpack.c.h.b16 %v2429
    %v2499 = vunpack.c.l.b16 %v2430
    %v2500 = vunpack.c.h.b16 %v2430
    %v2501 = vunpack.c.l.b16 %v2431
    %v2502 = vunpack.c.h.b16 %v2431
    %v2503 = vunpack.c.l.b16 %v2432
    %v2504 = vunpack.c.h.b16 %v2432
    %v2505 = vunpack.c.l.b16 %v2433
    %v2506 = vunpack.c.h.b16 %v2433
    %v2507 = vunpack.c.l.b16 %v2434
    %v2508 = vunpack.c.h.b16 %v2434
    %v2509 = vunpack.c.l.b16 %v2435
    %v2510 = vunpack.c.h.b16 %v2435
    %v2511 = vunpack.c.l.b16 %v2436
    %v2512 = vunpack.c.h.b16 %v2436
    %v2513 = vunpack.c.l.b16 %v2437
    %v2514 = vunpack.c.h.b16 %v2437
    %v2515 = vunpack.c.l.b16 %v2438
    %v2516 = vunpack.c.h.b16 %v2438
    %v2517 = vunpack.c.l.b16 %v2439
    %v2518 = vunpack.c.h.b16 %v2439
    %v2519 = vunpack.c.l.b16 %v2440
    %v2520 = vunpack.c.h.b16 %v2440
    %v2521 = vunpack.c.l.b16 %v2441
    %v2522 = vunpack.c.h.b16 %v2441
    %v2523 = vunpack.c.l.b16 %v2442
    %v2524 = vunpack.c.h.b16 %v2442
    %v2525 = vunpack.c.l.b16 %v2443
    %v2526 = vunpack.c.h.b16 %v2443
    %v2527 = vunpack.c.l.b16 %v2444
    %v2528 = vunpack.c.h.b16 %v2444
    %v2529 = vunpack.c.l.b16 %v2445
    %v2530 = vunpack.c.h.b16 %v2445
    %v2531 = vunpack.c.l.b16 %v2446
    %v2532 = vunpack.c.h.b16 %v2446
    %v2533 = vunpack.c.l.b16 %v2447
    %v2534 = vunpack.c.h.b16 %v2447
    %v2535 = vunpack.c.l.b16 %v2448
    %v2536 = vunpack.c.h.b16 %v2448
    %v2537 = vunpack.c.l.b16 %v2449
    %v2538 = vunpack.c.h.b16 %v2449
    %v2539 = vunpack.c.l.b16 %v2450
    %v2540 = vunpack.c.h.b16 %v2450
    %v2541 = vunpack.c.l.b16 %v2451
    %v2542 = vunpack.c.h.b16 %v2451
    %v2543 = vunpack.c.l.b16 %v2452
    %v2544 = vunpack.c.h.b16 %v2452
    %v2545 = vunpack.c.l.b16 %v2453
    %v2546 = vunpack.c.h.b16 %v2453
    %v2547 = vunpack.c.l.b16 %v2454
    %v2548 = vunpack.c.h.b16 %v2454
    %v2549 = vunpack.c.l.b16 %v2455
    %v2550 = vunpack.c.h.b16 %v2455
    %v2551 = vunpack.c.l.b16 %v2456
    %v2552 = vunpack.c.h.b16 %v2456
    %v2553 = vpack.c.b16 %v2493, %v2489
    %v2554 = vpack.c.b16 %v2494, %v2490
    %v2555 = vpack.c.b16 %v2495, %v2491
    %v2556 = vpack.c.b16 %v2496, %v2492
    %v2557 = vpack.c.b16 %v2501, %v2497
    %v2558 = vpack.c.b16 %v2502, %v2498
    %v2559 = vpack.c.b16 %v2503, %v2499
    %v2560 = vpack.c.b16 %v2504, %v2500
    %v2561 = vpack.c.b16 %v2509, %v2505
    %v2562 = vpack.c.b16 %v2510, %v2506
    %v2563 = vpack.c.b16 %v2511, %v2507
    %v2564 = vpack.c.b16 %v2512, %v2508
    %v2565 = vpack.c.b16 %v2517, %v2513
    %v2566 = vpack.c.b16 %v2518, %v2514
    %v2567 = vpack.c.b16 %v2519, %v2515
    %v2568 = vpack.c.b16 %v2520, %v2516
    %v2569 = vpack.c.b16 %v2525, %v2521
    %v2570 = vpack.c.b16 %v2526, %v2522
    %v2571 = vpack.c.b16 %v2527, %v2523
    %v2572 = vpack.c.b16 %v2528, %v2524
    %v2573 = vpack.c.b16 %v2533, %v2529
    %v2574 = vpack.c.b16 %v2534, %v2530
    %v2575 = vpack.c.b16 %v2535, %v2531
    %v2576 = vpack.c.b16 %v2536, %v2532
    %v2577 = vpack.c.b16 %v2541, %v2537
    %v2578 = vpack.c.b16 %v2542, %v2538
    %v2579 = vpack.c.b16 %v2543, %v2539
    %v2580 = vpack.c.b16 %v2544, %v2540
    %v2581 = vpack.c.b16 %v2549, %v2545
    %v2582 = vpack.c.b16 %v2550, %v2546
    %v2583 = vpack.c.b16 %v2551, %v2547
    %v2584 = vpack.c.b16 %v2552, %v2548
    %2617 = vmatpush.bf16.msra.mxu0 %v2581
    %2618 = vmatpush.bf16.msra.mxu0 %v2577
    %2619 = vmatpush.bf16.msra.mxu0 %v2573
    %2620 = vmatpush.bf16.msra.mxu0 %v2569
    %2621 = vmatpush.bf16.msra.mxu0 %v2565
    %2622 = vmatpush.bf16.msra.mxu0 %v2561
    %2623 = vmatpush.bf16.msra.mxu0 %v2557
    %2624 = vmatpush.bf16.msra.mxu0 %v2553
    %2625 = vmatmul.bf16.gmra.mxu0 %v2415
    %v2626 = vpop.f32.mrf.mxu0
    %v2627 = vadd.f32 0.0, %v2626
    %v2628 = vpop.f32.mrf.mxu0
    %2629 = vdwg.mxu0
    %2630 = vmatpush.bf16.msra.mxu0 %v2582
    %2631 = vmatpush.bf16.msra.mxu0 %v2578
    %2632 = vmatpush.bf16.msra.mxu0 %v2574
    %2633 = vmatpush.bf16.msra.mxu0 %v2570
    %2634 = vmatpush.bf16.msra.mxu0 %v2566
    %2635 = vmatpush.bf16.msra.mxu0 %v2562
    %2636 = vmatpush.bf16.msra.mxu0 %v2558
    %2637 = vmatpush.bf16.msra.mxu0 %v2554
    %2638 = vmatmul.bf16.gmra.mxu0 %v2415
    %v2639 = vpop.f32.mrf.mxu0
    %v2640 = vadd.f32 0.0, %v2639
    %v2641 = vpop.f32.mrf.mxu0
    %2642 = vdwg.mxu0
    %2643 = vmatpush.bf16.msra.mxu0 %v2583
    %2644 = vmatpush.bf16.msra.mxu0 %v2579
    %2645 = vmatpush.bf16.msra.mxu0 %v2575
    %2646 = vmatpush.bf16.msra.mxu0 %v2571
    %2647 = vmatpush.bf16.msra.mxu0 %v2567
    %2648 = vmatpush.bf16.msra.mxu0 %v2563
    %2649 = vmatpush.bf16.msra.mxu0 %v2559
    %2650 = vmatpush.bf16.msra.mxu0 %v2555
    %2651 = vmatmul.bf16.gmra.mxu0 %v2415
    %v2652 = vpop.f32.mrf.mxu0
    %v2653 = vadd.f32 0.0, %v2652
    %v2654 = vpop.f32.mrf.mxu0
    %2655 = vdwg.mxu0
    %2656 = vmatpush.bf16.msra.mxu0 %v2584
    %2657 = vmatpush.bf16.msra.mxu0 %v2580
    %2658 = vmatpush.bf16.msra.mxu0 %v2576
    %2659 = vmatpush.bf16.msra.mxu0 %v2572
    %2660 = vmatpush.bf16.msra.mxu0 %v2568
    %2661 = vmatpush.bf16.msra.mxu0 %v2564
    %2662 = vmatpush.bf16.msra.mxu0 %v2560
    %2663 = vmatpush.bf16.msra.mxu0 %v2556
    %2664 = vmatmul.bf16.gmra.mxu0 %v2415
    %v2665 = vpop.f32.mrf.mxu0
    %v2666 = vadd.f32 0.0, %v2665
    %v2667 = vpop.f32.mrf.mxu0
    %2668 = vdwg.mxu0
    %v2669 = vadd.f32 %v2421, %v2627
    %v2670 = vadd.f32 %v2422, %v2640
    %v2671 = vadd.f32 %v2423, %v2653
    %v2672 = vadd.f32 %v2424, %v2666
    %v2673 = vxor.u32 %v2669, 2147483648
    %v2674 = vxor.u32 %v2670, 2147483648
    %v2675 = vxor.u32 %v2671, 2147483648
    %v2676 = vmul.f32 %v2673, 1.442695
    %v2677 = vpow.pop %v2676
    %v2678 = vmul.f32 %v2674, 1.442695
    %v2679 = vpow.pop %v2678
    %v2680 = vmul.f32 %v2675, 1.442695
    %v2681 = vpow.pop %v2680
    %v2682 = vadd.f32 %v2677, 1.0
    %v2683 = vadd.f32 %v2679, 1.0
    %v2684 = vadd.f32 %v2681, 1.0
    %v2685 = vrcp.pop %v2682
    %v2686 = vmul.f32 %v2682, %v2685
    %v2687 = vsub.f32 1.0, %v2686
    %v2688 = vmul.f32 %v2685, %v2687
    %v2689 = vadd.f32 %v2685, %v2688
    %vm2690 = vweird.f32 %v2682
    %vm2691 = vweird.f32 %v2685
    %vm2692 = vmor %vm2690, %vm2691
    %v2693 = vsel %vm2692, %v2685, %v2689
    %v2694 = vand.u32 2147483647, %v2682
    %vm2695 = vcmp.eq.f32.partialorder %v2694, 8.507059e+37
    %v2696 = vand.u32 %v2682, 2147483648
    %v2697 = vor.u32 1.1754944e-38, %v2696
    %v2698 = vsel %vm2695, %v2697, %v2693
    %v2699 = vmul.f32 1.0, %v2698
    %v2700 = vrcp.pop %v2683
    %v2701 = vmul.f32 %v2683, %v2700
    %v2702 = vsub.f32 1.0, %v2701
    %v2703 = vmul.f32 %v2700, %v2702
    %v2704 = vadd.f32 %v2700, %v2703
    %vm2705 = vweird.f32 %v2683
    %vm2706 = vweird.f32 %v2700
    %vm2707 = vmor %vm2705, %vm2706
    %v2708 = vsel %vm2707, %v2700, %v2704
    %v2709 = vand.u32 2147483647, %v2683
    %vm2710 = vcmp.eq.f32.partialorder %v2709, 8.507059e+37
    %v2711 = vand.u32 %v2683, 2147483648
    %v2712 = vor.u32 1.1754944e-38, %v2711
    %v2713 = vsel %vm2710, %v2712, %v2708
    %v2714 = vmul.f32 1.0, %v2713
    %v2715 = vrcp.pop %v2684
    %v2716 = vmul.f32 %v2684, %v2715
    %v2717 = vsub.f32 1.0, %v2716
    %v2718 = vmul.f32 %v2715, %v2717
    %v2719 = vadd.f32 %v2715, %v2718
    %vm2720 = vweird.f32 %v2684
    %vm2721 = vweird.f32 %v2715
    %vm2722 = vmor %vm2720, %vm2721
    %v2723 = vsel %vm2722, %v2715, %v2719
    %v2724 = vand.u32 2147483647, %v2684
    %vm2725 = vcmp.eq.f32.partialorder %v2724, 8.507059e+37
    %v2726 = vand.u32 %v2684, 2147483648
    %v2727 = vor.u32 1.1754944e-38, %v2726
    %v2728 = vsel %vm2725, %v2727, %v2723
    %v2729 = vmul.f32 1.0, %v2728
    %v2730 = vtanh.pop %v2672
    %v2731 = vmul.f32 %v2714, %v2412
    %v2732 = vmul.f32 %v2699, %v2730
    %v2733 = vadd.f32 %v2731, %v2732
    %v2734 = vtanh.pop %v2733
    %v2735 = vmul.f32 %v2729, %v2734
    %v2736 = vpack.c.bf16 %v2735, %v2735
    %s2737 = scalar_lea.vmem [#allocation2], 24
    %2738 = vst [vmem:[%s2737] sm:$0xf] %v2736
    %s2739 = smul.u32 7, 4
    %s2740 = smul.addr %s2739, 8
    %s2741 = scalar_lea.vmem [#allocation4], %s2740
    %v2742 = vld [vmem:[%s2741] sm:$0xff]
    %v2743 = vld [vmem:[%s2741 + $0x8] sm:$0xff]
    %v2744 = vld [vmem:[%s2741 + $0x10] sm:$0xff]
    %v2745 = vld [vmem:[%s2741 + $0x18] sm:$0xff]
    %v2746 = vld [vmem:[#allocation7] sm:$0xff]
    %v2747 = vld [vmem:[#allocation7 + $0x8] sm:$0xff]
    %v2748 = vld [vmem:[#allocation7 + $0x10] sm:$0xff]
    %v2749 = vld [vmem:[#allocation7 + $0x18] sm:$0xff]
    %v2750 = vld [vmem:[#allocation7 + $0x20] sm:$0xff]
    %v2751 = vld [vmem:[#allocation7 + $0x28] sm:$0xff]
    %v2752 = vld [vmem:[#allocation7 + $0x30] sm:$0xff]
    %v2753 = vld [vmem:[#allocation7 + $0x38] sm:$0xff]
    %v2754 = vld [vmem:[#allocation7 + $0x40] sm:$0xff]
    %v2755 = vld [vmem:[#allocation7 + $0x48] sm:$0xff]
    %v2756 = vld [vmem:[#allocation7 + $0x50] sm:$0xff]
    %v2757 = vld [vmem:[#allocation7 + $0x58] sm:$0xff]
    %v2758 = vld [vmem:[#allocation7 + $0x60] sm:$0xff]
    %v2759 = vld [vmem:[#allocation7 + $0x68] sm:$0xff]
    %v2760 = vld [vmem:[#allocation7 + $0x70] sm:$0xff]
    %v2761 = vld [vmem:[#allocation7 + $0x78] sm:$0xff]
    %v2762 = vld [vmem:[#allocation7 + $0x80] sm:$0xff]
    %v2763 = vld [vmem:[#allocation7 + $0x88] sm:$0xff]
    %v2764 = vld [vmem:[#allocation7 + $0x90] sm:$0xff]
    %v2765 = vld [vmem:[#allocation7 + $0x98] sm:$0xff]
    %v2766 = vld [vmem:[#allocation7 + $0xa0] sm:$0xff]
    %v2767 = vld [vmem:[#allocation7 + $0xa8] sm:$0xff]
    %v2768 = vld [vmem:[#allocation7 + $0xb0] sm:$0xff]
    %v2769 = vld [vmem:[#allocation7 + $0xb8] sm:$0xff]
    %v2770 = vld [vmem:[#allocation7 + $0xc0] sm:$0xff]
    %v2771 = vld [vmem:[#allocation7 + $0xc8] sm:$0xff]
    %v2772 = vld [vmem:[#allocation7 + $0xd0] sm:$0xff]
    %v2773 = vld [vmem:[#allocation7 + $0xd8] sm:$0xff]
    %v2774 = vld [vmem:[#allocation7 + $0xe0] sm:$0xff]
    %v2775 = vld [vmem:[#allocation7 + $0xe8] sm:$0xff]
    %v2776 = vld [vmem:[#allocation7 + $0xf0] sm:$0xff]
    %v2777 = vld [vmem:[#allocation7 + $0xf8] sm:$0xff]
    %v2810 = vunpack.c.l.b16 %v2746
    %v2811 = vunpack.c.h.b16 %v2746
    %v2812 = vunpack.c.l.b16 %v2747
    %v2813 = vunpack.c.h.b16 %v2747
    %v2814 = vunpack.c.l.b16 %v2748
    %v2815 = vunpack.c.h.b16 %v2748
    %v2816 = vunpack.c.l.b16 %v2749
    %v2817 = vunpack.c.h.b16 %v2749
    %v2818 = vunpack.c.l.b16 %v2750
    %v2819 = vunpack.c.h.b16 %v2750
    %v2820 = vunpack.c.l.b16 %v2751
    %v2821 = vunpack.c.h.b16 %v2751
    %v2822 = vunpack.c.l.b16 %v2752
    %v2823 = vunpack.c.h.b16 %v2752
    %v2824 = vunpack.c.l.b16 %v2753
    %v2825 = vunpack.c.h.b16 %v2753
    %v2826 = vunpack.c.l.b16 %v2754
    %v2827 = vunpack.c.h.b16 %v2754
    %v2828 = vunpack.c.l.b16 %v2755
    %v2829 = vunpack.c.h.b16 %v2755
    %v2830 = vunpack.c.l.b16 %v2756
    %v2831 = vunpack.c.h.b16 %v2756
    %v2832 = vunpack.c.l.b16 %v2757
    %v2833 = vunpack.c.h.b16 %v2757
    %v2834 = vunpack.c.l.b16 %v2758
    %v2835 = vunpack.c.h.b16 %v2758
    %v2836 = vunpack.c.l.b16 %v2759
    %v2837 = vunpack.c.h.b16 %v2759
    %v2838 = vunpack.c.l.b16 %v2760
    %v2839 = vunpack.c.h.b16 %v2760
    %v2840 = vunpack.c.l.b16 %v2761
    %v2841 = vunpack.c.h.b16 %v2761
    %v2842 = vunpack.c.l.b16 %v2762
    %v2843 = vunpack.c.h.b16 %v2762
    %v2844 = vunpack.c.l.b16 %v2763
    %v2845 = vunpack.c.h.b16 %v2763
    %v2846 = vunpack.c.l.b16 %v2764
    %v2847 = vunpack.c.h.b16 %v2764
    %v2848 = vunpack.c.l.b16 %v2765
    %v2849 = vunpack.c.h.b16 %v2765
    %v2850 = vunpack.c.l.b16 %v2766
    %v2851 = vunpack.c.h.b16 %v2766
    %v2852 = vunpack.c.l.b16 %v2767
    %v2853 = vunpack.c.h.b16 %v2767
    %v2854 = vunpack.c.l.b16 %v2768
    %v2855 = vunpack.c.h.b16 %v2768
    %v2856 = vunpack.c.l.b16 %v2769
    %v2857 = vunpack.c.h.b16 %v2769
    %v2858 = vunpack.c.l.b16 %v2770
    %v2859 = vunpack.c.h.b16 %v2770
    %v2860 = vunpack.c.l.b16 %v2771
    %v2861 = vunpack.c.h.b16 %v2771
    %v2862 = vunpack.c.l.b16 %v2772
    %v2863 = vunpack.c.h.b16 %v2772
    %v2864 = vunpack.c.l.b16 %v2773
    %v2865 = vunpack.c.h.b16 %v2773
    %v2866 = vunpack.c.l.b16 %v2774
    %v2867 = vunpack.c.h.b16 %v2774
    %v2868 = vunpack.c.l.b16 %v2775
    %v2869 = vunpack.c.h.b16 %v2775
    %v2870 = vunpack.c.l.b16 %v2776
    %v2871 = vunpack.c.h.b16 %v2776
    %v2872 = vunpack.c.l.b16 %v2777
    %v2873 = vunpack.c.h.b16 %v2777
    %v2874 = vpack.c.b16 %v2814, %v2810
    %v2875 = vpack.c.b16 %v2815, %v2811
    %v2876 = vpack.c.b16 %v2816, %v2812
    %v2877 = vpack.c.b16 %v2817, %v2813
    %v2878 = vpack.c.b16 %v2822, %v2818
    %v2879 = vpack.c.b16 %v2823, %v2819
    %v2880 = vpack.c.b16 %v2824, %v2820
    %v2881 = vpack.c.b16 %v2825, %v2821
    %v2882 = vpack.c.b16 %v2830, %v2826
    %v2883 = vpack.c.b16 %v2831, %v2827
    %v2884 = vpack.c.b16 %v2832, %v2828
    %v2885 = vpack.c.b16 %v2833, %v2829
    %v2886 = vpack.c.b16 %v2838, %v2834
    %v2887 = vpack.c.b16 %v2839, %v2835
    %v2888 = vpack.c.b16 %v2840, %v2836
    %v2889 = vpack.c.b16 %v2841, %v2837
    %v2890 = vpack.c.b16 %v2846, %v2842
    %v2891 = vpack.c.b16 %v2847, %v2843
    %v2892 = vpack.c.b16 %v2848, %v2844
    %v2893 = vpack.c.b16 %v2849, %v2845
    %v2894 = vpack.c.b16 %v2854, %v2850
    %v2895 = vpack.c.b16 %v2855, %v2851
    %v2896 = vpack.c.b16 %v2856, %v2852
    %v2897 = vpack.c.b16 %v2857, %v2853
    %v2898 = vpack.c.b16 %v2862, %v2858
    %v2899 = vpack.c.b16 %v2863, %v2859
    %v2900 = vpack.c.b16 %v2864, %v2860
    %v2901 = vpack.c.b16 %v2865, %v2861
    %v2902 = vpack.c.b16 %v2870, %v2866
    %v2903 = vpack.c.b16 %v2871, %v2867
    %v2904 = vpack.c.b16 %v2872, %v2868
    %v2905 = vpack.c.b16 %v2873, %v2869
    %2938 = vmatpush.bf16.msra.mxu0 %v2902
    %2939 = vmatpush.bf16.msra.mxu0 %v2898
    %2940 = vmatpush.bf16.msra.mxu0 %v2894
    %2941 = vmatpush.bf16.msra.mxu0 %v2890
    %2942 = vmatpush.bf16.msra.mxu0 %v2886
    %2943 = vmatpush.bf16.msra.mxu0 %v2882
    %2944 = vmatpush.bf16.msra.mxu0 %v2878
    %2945 = vmatpush.bf16.msra.mxu0 %v2874
    %2946 = vmatmul.bf16.gmra.mxu0 %v2736
    %v2947 = vpop.f32.mrf.mxu0
    %v2948 = vadd.f32 0.0, %v2947
    %v2949 = vpop.f32.mrf.mxu0
    %2950 = vdwg.mxu0
    %2951 = vmatpush.bf16.msra.mxu0 %v2903
    %2952 = vmatpush.bf16.msra.mxu0 %v2899
    %2953 = vmatpush.bf16.msra.mxu0 %v2895
    %2954 = vmatpush.bf16.msra.mxu0 %v2891
    %2955 = vmatpush.bf16.msra.mxu0 %v2887
    %2956 = vmatpush.bf16.msra.mxu0 %v2883
    %2957 = vmatpush.bf16.msra.mxu0 %v2879
    %2958 = vmatpush.bf16.msra.mxu0 %v2875
    %2959 = vmatmul.bf16.gmra.mxu0 %v2736
    %v2960 = vpop.f32.mrf.mxu0
    %v2961 = vadd.f32 0.0, %v2960
    %v2962 = vpop.f32.mrf.mxu0
    %2963 = vdwg.mxu0
    %2964 = vmatpush.bf16.msra.mxu0 %v2904
    %2965 = vmatpush.bf16.msra.mxu0 %v2900
    %2966 = vmatpush.bf16.msra.mxu0 %v2896
    %2967 = vmatpush.bf16.msra.mxu0 %v2892
    %2968 = vmatpush.bf16.msra.mxu0 %v2888
    %2969 = vmatpush.bf16.msra.mxu0 %v2884
    %2970 = vmatpush.bf16.msra.mxu0 %v2880
    %2971 = vmatpush.bf16.msra.mxu0 %v2876
    %2972 = vmatmul.bf16.gmra.mxu0 %v2736
    %v2973 = vpop.f32.mrf.mxu0
    %v2974 = vadd.f32 0.0, %v2973
    %v2975 = vpop.f32.mrf.mxu0
    %2976 = vdwg.mxu0
    %2977 = vmatpush.bf16.msra.mxu0 %v2905
    %2978 = vmatpush.bf16.msra.mxu0 %v2901
    %2979 = vmatpush.bf16.msra.mxu0 %v2897
    %2980 = vmatpush.bf16.msra.mxu0 %v2893
    %2981 = vmatpush.bf16.msra.mxu0 %v2889
    %2982 = vmatpush.bf16.msra.mxu0 %v2885
    %2983 = vmatpush.bf16.msra.mxu0 %v2881
    %2984 = vmatpush.bf16.msra.mxu0 %v2877
    %2985 = vmatmul.bf16.gmra.mxu0 %v2736
    %v2986 = vpop.f32.mrf.mxu0
    %v2987 = vadd.f32 0.0, %v2986
    %v2988 = vpop.f32.mrf.mxu0
    %2989 = vdwg.mxu0
    %v2990 = vadd.f32 %v2742, %v2948
    %v2991 = vadd.f32 %v2743, %v2961
    %v2992 = vadd.f32 %v2744, %v2974
    %v2993 = vadd.f32 %v2745, %v2987
    %v2994 = vxor.u32 %v2990, 2147483648
    %v2995 = vxor.u32 %v2991, 2147483648
    %v2996 = vxor.u32 %v2992, 2147483648
    %v2997 = vmul.f32 %v2994, 1.442695
    %v2998 = vpow.pop %v2997
    %v2999 = vmul.f32 %v2995, 1.442695
    %v3000 = vpow.pop %v2999
    %v3001 = vmul.f32 %v2996, 1.442695
    %v3002 = vpow.pop %v3001
    %v3003 = vadd.f32 %v2998, 1.0
    %v3004 = vadd.f32 %v3000, 1.0
    %v3005 = vadd.f32 %v3002, 1.0
    %v3006 = vrcp.pop %v3003
    %v3007 = vmul.f32 %v3003, %v3006
    %v3008 = vsub.f32 1.0, %v3007
    %v3009 = vmul.f32 %v3006, %v3008
    %v3010 = vadd.f32 %v3006, %v3009
    %vm3011 = vweird.f32 %v3003
    %vm3012 = vweird.f32 %v3006
    %vm3013 = vmor %vm3011, %vm3012
    %v3014 = vsel %vm3013, %v3006, %v3010
    %v3015 = vand.u32 2147483647, %v3003
    %vm3016 = vcmp.eq.f32.partialorder %v3015, 8.507059e+37
    %v3017 = vand.u32 %v3003, 2147483648
    %v3018 = vor.u32 1.1754944e-38, %v3017
    %v3019 = vsel %vm3016, %v3018, %v3014
    %v3020 = vmul.f32 1.0, %v3019
    %v3021 = vrcp.pop %v3004
    %v3022 = vmul.f32 %v3004, %v3021
    %v3023 = vsub.f32 1.0, %v3022
    %v3024 = vmul.f32 %v3021, %v3023
    %v3025 = vadd.f32 %v3021, %v3024
    %vm3026 = vweird.f32 %v3004
    %vm3027 = vweird.f32 %v3021
    %vm3028 = vmor %vm3026, %vm3027
    %v3029 = vsel %vm3028, %v3021, %v3025
    %v3030 = vand.u32 2147483647, %v3004
    %vm3031 = vcmp.eq.f32.partialorder %v3030, 8.507059e+37
    %v3032 = vand.u32 %v3004, 2147483648
    %v3033 = vor.u32 1.1754944e-38, %v3032
    %v3034 = vsel %vm3031, %v3033, %v3029
    %v3035 = vmul.f32 1.0, %v3034
    %v3036 = vrcp.pop %v3005
    %v3037 = vmul.f32 %v3005, %v3036
    %v3038 = vsub.f32 1.0, %v3037
    %v3039 = vmul.f32 %v3036, %v3038
    %v3040 = vadd.f32 %v3036, %v3039
    %vm3041 = vweird.f32 %v3005
    %vm3042 = vweird.f32 %v3036
    %vm3043 = vmor %vm3041, %vm3042
    %v3044 = vsel %vm3043, %v3036, %v3040
    %v3045 = vand.u32 2147483647, %v3005
    %vm3046 = vcmp.eq.f32.partialorder %v3045, 8.507059e+37
    %v3047 = vand.u32 %v3005, 2147483648
    %v3048 = vor.u32 1.1754944e-38, %v3047
    %v3049 = vsel %vm3046, %v3048, %v3044
    %v3050 = vmul.f32 1.0, %v3049
    %v3051 = vtanh.pop %v2993
    %v3052 = vmul.f32 %v3035, %v2733
    %v3053 = vmul.f32 %v3020, %v3051
    %v3054 = vadd.f32 %v3052, %v3053
    %v3055 = vtanh.pop %v3054
    %v3056 = vmul.f32 %v3050, %v3055
    %v3057 = vpack.c.bf16 %v3056, %v3056
    %s3058 = scalar_lea.vmem [#allocation2], 28
    %3059 = vst [vmem:[%s3058] sm:$0xf] %v3057
    %v3060 = vld [vmem:[#allocation2] sm:$0xf]
    %v3061 = vld [vmem:[#allocation2 + $0x4] sm:$0xf]
    %v3062 = vld [vmem:[#allocation2 + $0x8] sm:$0xf]
    %v3063 = vld [vmem:[#allocation2 + $0xc] sm:$0xf]
    %v3064 = vld [vmem:[#allocation2 + $0x10] sm:$0xf]
    %v3065 = vld [vmem:[#allocation2 + $0x14] sm:$0xf]
    %v3066 = vld [vmem:[#allocation2 + $0x18] sm:$0xf]
    %v3067 = vld [vmem:[#allocation2 + $0x1c] sm:$0xf]
    %v3068 = vld [vmem:[#allocation9] sm:$0xff]
    %v3069 = vld [vmem:[#allocation9 + $0x8] sm:$0xff]
    %v3070 = vld [vmem:[#allocation9 + $0x10] sm:$0xff]
    %v3071 = vld [vmem:[#allocation9 + $0x18] sm:$0xff]
    %v3072 = vld [vmem:[#allocation9 + $0x20] sm:$0xff]
    %v3073 = vld [vmem:[#allocation9 + $0x28] sm:$0xff]
    %v3074 = vld [vmem:[#allocation9 + $0x30] sm:$0xff]
    %v3075 = vld [vmem:[#allocation9 + $0x38] sm:$0xff]
    %v3076 = vld [vmem:[#allocation9 + $0x40] sm:$0xff]
    %v3077 = vld [vmem:[#allocation9 + $0x48] sm:$0xff]
    %v3078 = vld [vmem:[#allocation9 + $0x50] sm:$0xff]
    %v3079 = vld [vmem:[#allocation9 + $0x58] sm:$0xff]
    %v3080 = vld [vmem:[#allocation9 + $0x60] sm:$0xff]
    %v3081 = vld [vmem:[#allocation9 + $0x68] sm:$0xff]
    %v3082 = vld [vmem:[#allocation9 + $0x70] sm:$0xff]
    %v3083 = vld [vmem:[#allocation9 + $0x78] sm:$0xff]
    %v3084 = vld [vmem:[#allocation9 + $0x80] sm:$0xff]
    %v3085 = vld [vmem:[#allocation9 + $0x88] sm:$0xff]
    %v3086 = vld [vmem:[#allocation9 + $0x90] sm:$0xff]
    %v3087 = vld [vmem:[#allocation9 + $0x98] sm:$0xff]
    %v3088 = vld [vmem:[#allocation9 + $0xa0] sm:$0xff]
    %v3089 = vld [vmem:[#allocation9 + $0xa8] sm:$0xff]
    %v3090 = vld [vmem:[#allocation9 + $0xb0] sm:$0xff]
    %v3091 = vld [vmem:[#allocation9 + $0xb8] sm:$0xff]
    %v3092 = vld [vmem:[#allocation9 + $0xc0] sm:$0xff]
    %v3093 = vld [vmem:[#allocation9 + $0xc8] sm:$0xff]
    %v3094 = vld [vmem:[#allocation9 + $0xd0] sm:$0xff]
    %v3095 = vld [vmem:[#allocation9 + $0xd8] sm:$0xff]
    %v3096 = vld [vmem:[#allocation9 + $0xe0] sm:$0xff]
    %v3097 = vld [vmem:[#allocation9 + $0xe8] sm:$0xff]
    %v3098 = vld [vmem:[#allocation9 + $0xf0] sm:$0xff]
    %v3099 = vld [vmem:[#allocation9 + $0xf8] sm:$0xff]
    %v3100 = vld [vmem:[%s6] sm:$0xf]
    %v3102 = vperm.slane %v3100, 0
    %v3103 = vperm.slane %v3100, 1
    %v3104 = vperm.slane %v3100, 2
    %v3105 = vperm.slane %v3100, 3
    %v3118 = vunpack.c.l.b16 %v3060
    %v3119 = vunpack.c.l.b16 %v3061
    %v3120 = vunpack.c.l.b16 %v3062
    %v3121 = vunpack.c.l.b16 %v3063
    %v3122 = vunpack.c.l.b16 %v3064
    %v3123 = vunpack.c.l.b16 %v3065
    %v3124 = vunpack.c.l.b16 %v3066
    %v3125 = vunpack.c.l.b16 %v3067
    %v3126 = vpack.c.b16 %v3119, %v3118
    %v3127 = vpack.c.b16 %v3121, %v3120
    %v3128 = vpack.c.b16 %v3123, %v3122
    %v3129 = vpack.c.b16 %v3125, %v3124
    %v3166 = vunpack.c.l.b16 %v3068
    %v3167 = vunpack.c.h.b16 %v3068
    %v3168 = vunpack.c.l.b16 %v3069
    %v3169 = vunpack.c.h.b16 %v3069
    %v3170 = vunpack.c.l.b16 %v3070
    %v3171 = vunpack.c.h.b16 %v3070
    %v3172 = vunpack.c.l.b16 %v3071
    %v3173 = vunpack.c.h.b16 %v3071
    %v3174 = vunpack.c.l.b16 %v3072
    %v3175 = vunpack.c.h.b16 %v3072
    %v3176 = vunpack.c.l.b16 %v3073
    %v3177 = vunpack.c.h.b16 %v3073
    %v3178 = vunpack.c.l.b16 %v3074
    %v3179 = vunpack.c.h.b16 %v3074
    %v3180 = vunpack.c.l.b16 %v3075
    %v3181 = vunpack.c.h.b16 %v3075
    %v3182 = vunpack.c.l.b16 %v3076
    %v3183 = vunpack.c.h.b16 %v3076
    %v3184 = vunpack.c.l.b16 %v3077
    %v3185 = vunpack.c.h.b16 %v3077
    %v3186 = vunpack.c.l.b16 %v3078
    %v3187 = vunpack.c.h.b16 %v3078
    %v3188 = vunpack.c.l.b16 %v3079
    %v3189 = vunpack.c.h.b16 %v3079
    %v3190 = vunpack.c.l.b16 %v3080
    %v3191 = vunpack.c.h.b16 %v3080
    %v3192 = vunpack.c.l.b16 %v3081
    %v3193 = vunpack.c.h.b16 %v3081
    %v3194 = vunpack.c.l.b16 %v3082
    %v3195 = vunpack.c.h.b16 %v3082
    %v3196 = vunpack.c.l.b16 %v3083
    %v3197 = vunpack.c.h.b16 %v3083
    %v3198 = vunpack.c.l.b16 %v3084
    %v3199 = vunpack.c.h.b16 %v3084
    %v3200 = vunpack.c.l.b16 %v3085
    %v3201 = vunpack.c.h.b16 %v3085
    %v3202 = vunpack.c.l.b16 %v3086
    %v3203 = vunpack.c.h.b16 %v3086
    %v3204 = vunpack.c.l.b16 %v3087
    %v3205 = vunpack.c.h.b16 %v3087
    %v3206 = vunpack.c.l.b16 %v3088
    %v3207 = vunpack.c.h.b16 %v3088
    %v3208 = vunpack.c.l.b16 %v3089
    %v3209 = vunpack.c.h.b16 %v3089
    %v3210 = vunpack.c.l.b16 %v3090
    %v3211 = vunpack.c.h.b16 %v3090
    %v3212 = vunpack.c.l.b16 %v3091
    %v3213 = vunpack.c.h.b16 %v3091
    %v3214 = vunpack.c.l.b16 %v3092
    %v3215 = vunpack.c.h.b16 %v3092
    %v3216 = vunpack.c.l.b16 %v3093
    %v3217 = vunpack.c.h.b16 %v3093
    %v3218 = vunpack.c.l.b16 %v3094
    %v3219 = vunpack.c.h.b16 %v3094
    %v3220 = vunpack.c.l.b16 %v3095
    %v3221 = vunpack.c.h.b16 %v3095
    %v3222 = vunpack.c.l.b16 %v3096
    %v3223 = vunpack.c.h.b16 %v3096
    %v3224 = vunpack.c.l.b16 %v3097
    %v3225 = vunpack.c.h.b16 %v3097
    %v3226 = vunpack.c.l.b16 %v3098
    %v3227 = vunpack.c.h.b16 %v3098
    %v3228 = vunpack.c.l.b16 %v3099
    %v3229 = vunpack.c.h.b16 %v3099
    %v3230 = vpack.c.b16 %v3170, %v3166
    %v3231 = vpack.c.b16 %v3171, %v3167
    %v3232 = vpack.c.b16 %v3172, %v3168
    %v3233 = vpack.c.b16 %v3173, %v3169
    %v3234 = vpack.c.b16 %v3178, %v3174
    %v3235 = vpack.c.b16 %v3179, %v3175
    %v3236 = vpack.c.b16 %v3180, %v3176
    %v3237 = vpack.c.b16 %v3181, %v3177
    %v3238 = vpack.c.b16 %v3186, %v3182
    %v3239 = vpack.c.b16 %v3187, %v3183
    %v3240 = vpack.c.b16 %v3188, %v3184
    %v3241 = vpack.c.b16 %v3189, %v3185
    %v3242 = vpack.c.b16 %v3194, %v3190
    %v3243 = vpack.c.b16 %v3195, %v3191
    %v3244 = vpack.c.b16 %v3196, %v3192
    %v3245 = vpack.c.b16 %v3197, %v3193
    %v3246 = vpack.c.b16 %v3202, %v3198
    %v3247 = vpack.c.b16 %v3203, %v3199
    %v3248 = vpack.c.b16 %v3204, %v3200
    %v3249 = vpack.c.b16 %v3205, %v3201
    %v3250 = vpack.c.b16 %v3210, %v3206
    %v3251 = vpack.c.b16 %v3211, %v3207
    %v3252 = vpack.c.b16 %v3212, %v3208
    %v3253 = vpack.c.b16 %v3213, %v3209
    %v3254 = vpack.c.b16 %v3218, %v3214
    %v3255 = vpack.c.b16 %v3219, %v3215
    %v3256 = vpack.c.b16 %v3220, %v3216
    %v3257 = vpack.c.b16 %v3221, %v3217
    %v3258 = vpack.c.b16 %v3226, %v3222
    %v3259 = vpack.c.b16 %v3227, %v3223
    %v3260 = vpack.c.b16 %v3228, %v3224
    %v3261 = vpack.c.b16 %v3229, %v3225
    %3294 = vmatpush.bf16.msra.mxu0 %v3258
    %3295 = vmatpush.bf16.msra.mxu0 %v3254
    %3296 = vmatpush.bf16.msra.mxu0 %v3250
    %3297 = vmatpush.bf16.msra.mxu0 %v3246
    %3298 = vmatpush.bf16.msra.mxu0 %v3242
    %3299 = vmatpush.bf16.msra.mxu0 %v3238
    %3300 = vmatpush.bf16.msra.mxu0 %v3234
    %3301 = vmatpush.bf16.msra.mxu0 %v3230
    %3302 = vmatmul.bf16.gmra.mxu0 %v3126
    %v3303 = vpop.f32.mrf.mxu0
    %v3304 = vadd.f32 %v3102, %v3303
    %v3305 = vpop.f32.mrf.mxu0
    %v3306 = vadd.f32 %v3102, %v3305
    %3307 = vmatmul.bf16.gmra.mxu0 %v3127
    %v3308 = vpop.f32.mrf.mxu0
    %v3309 = vadd.f32 %v3102, %v3308
    %v3310 = vpop.f32.mrf.mxu0
    %v3311 = vadd.f32 %v3102, %v3310
    %3312 = vmatmul.bf16.gmra.mxu0 %v3128
    %v3313 = vpop.f32.mrf.mxu0
    %v3314 = vadd.f32 %v3102, %v3313
    %v3315 = vpop.f32.mrf.mxu0
    %v3316 = vadd.f32 %v3102, %v3315
    %3317 = vmatmul.bf16.gmra.mxu0 %v3129
    %v3318 = vpop.f32.mrf.mxu0
    %v3319 = vadd.f32 %v3102, %v3318
    %v3320 = vpop.f32.mrf.mxu0
    %v3321 = vadd.f32 %v3102, %v3320
    %3322 = vdwg.mxu0
    %3323 = vmatpush.bf16.msra.mxu0 %v3259
    %3324 = vmatpush.bf16.msra.mxu0 %v3255
    %3325 = vmatpush.bf16.msra.mxu0 %v3251
    %3326 = vmatpush.bf16.msra.mxu0 %v3247
    %3327 = vmatpush.bf16.msra.mxu0 %v3243
    %3328 = vmatpush.bf16.msra.mxu0 %v3239
    %3329 = vmatpush.bf16.msra.mxu0 %v3235
    %3330 = vmatpush.bf16.msra.mxu0 %v3231
    %3331 = vmatmul.bf16.gmra.mxu0 %v3126
    %v3332 = vpop.f32.mrf.mxu0
    %v3333 = vadd.f32 %v3103, %v3332
    %v3334 = vpop.f32.mrf.mxu0
    %v3335 = vadd.f32 %v3103, %v3334
    %3336 = vmatmul.bf16.gmra.mxu0 %v3127
    %v3337 = vpop.f32.mrf.mxu0
    %v3338 = vadd.f32 %v3103, %v3337
    %v3339 = vpop.f32.mrf.mxu0
    %v3340 = vadd.f32 %v3103, %v3339
    %3341 = vmatmul.bf16.gmra.mxu0 %v3128
    %v3342 = vpop.f32.mrf.mxu0
    %v3343 = vadd.f32 %v3103, %v3342
    %v3344 = vpop.f32.mrf.mxu0
    %v3345 = vadd.f32 %v3103, %v3344
    %3346 = vmatmul.bf16.gmra.mxu0 %v3129
    %v3347 = vpop.f32.mrf.mxu0
    %v3348 = vadd.f32 %v3103, %v3347
    %v3349 = vpop.f32.mrf.mxu0
    %v3350 = vadd.f32 %v3103, %v3349
    %3351 = vdwg.mxu0
    %3352 = vmatpush.bf16.msra.mxu0 %v3260
    %3353 = vmatpush.bf16.msra.mxu0 %v3256
    %3354 = vmatpush.bf16.msra.mxu0 %v3252
    %3355 = vmatpush.bf16.msra.mxu0 %v3248
    %3356 = vmatpush.bf16.msra.mxu0 %v3244
    %3357 = vmatpush.bf16.msra.mxu0 %v3240
    %3358 = vmatpush.bf16.msra.mxu0 %v3236
    %3359 = vmatpush.bf16.msra.mxu0 %v3232
    %3360 = vmatmul.bf16.gmra.mxu0 %v3126
    %v3361 = vpop.f32.mrf.mxu0
    %v3362 = vadd.f32 %v3104, %v3361
    %v3363 = vpop.f32.mrf.mxu0
    %v3364 = vadd.f32 %v3104, %v3363
    %3365 = vmatmul.bf16.gmra.mxu0 %v3127
    %v3366 = vpop.f32.mrf.mxu0
    %v3367 = vadd.f32 %v3104, %v3366
    %v3368 = vpop.f32.mrf.mxu0
    %v3369 = vadd.f32 %v3104, %v3368
    %3370 = vmatmul.bf16.gmra.mxu0 %v3128
    %v3371 = vpop.f32.mrf.mxu0
    %v3372 = vadd.f32 %v3104, %v3371
    %v3373 = vpop.f32.mrf.mxu0
    %v3374 = vadd.f32 %v3104, %v3373
    %3375 = vmatmul.bf16.gmra.mxu0 %v3129
    %v3376 = vpop.f32.mrf.mxu0
    %v3377 = vadd.f32 %v3104, %v3376
    %v3378 = vpop.f32.mrf.mxu0
    %v3379 = vadd.f32 %v3104, %v3378
    %3380 = vdwg.mxu0
    %3381 = vmatpush.bf16.msra.mxu0 %v3261
    %3382 = vmatpush.bf16.msra.mxu0 %v3257
    %3383 = vmatpush.bf16.msra.mxu0 %v3253
    %3384 = vmatpush.bf16.msra.mxu0 %v3249
    %3385 = vmatpush.bf16.msra.mxu0 %v3245
    %3386 = vmatpush.bf16.msra.mxu0 %v3241
    %3387 = vmatpush.bf16.msra.mxu0 %v3237
    %3388 = vmatpush.bf16.msra.mxu0 %v3233
    %3389 = vmatmul.bf16.gmra.mxu0 %v3126
    %v3390 = vpop.f32.mrf.mxu0
    %v3391 = vadd.f32 %v3105, %v3390
    %v3392 = vpop.f32.mrf.mxu0
    %v3393 = vadd.f32 %v3105, %v3392
    %3394 = vmatmul.bf16.gmra.mxu0 %v3127
    %v3395 = vpop.f32.mrf.mxu0
    %v3396 = vadd.f32 %v3105, %v3395
    %v3397 = vpop.f32.mrf.mxu0
    %v3398 = vadd.f32 %v3105, %v3397
    %3399 = vmatmul.bf16.gmra.mxu0 %v3128
    %v3400 = vpop.f32.mrf.mxu0
    %v3401 = vadd.f32 %v3105, %v3400
    %v3402 = vpop.f32.mrf.mxu0
    %v3403 = vadd.f32 %v3105, %v3402
    %3404 = vmatmul.bf16.gmra.mxu0 %v3129
    %v3405 = vpop.f32.mrf.mxu0
    %v3406 = vadd.f32 %v3105, %v3405
    %v3407 = vpop.f32.mrf.mxu0
    %v3408 = vadd.f32 %v3105, %v3407
    %3409 = vdwg.mxu0
    %3410 = vst [vmem:[#allocation4] sm:$0xff] %v3304
    %3411 = vst [vmem:[#allocation4 + $0x8] sm:$0xff] %v3333
    %3412 = vst [vmem:[#allocation4 + $0x10] sm:$0xff] %v3362
    %3413 = vst [vmem:[#allocation4 + $0x18] sm:$0xff] %v3391
    %3414 = vst [vmem:[#allocation4 + $0x20] sm:$0xff] %v3306
    %3415 = vst [vmem:[#allocation4 + $0x28] sm:$0xff] %v3335
    %3416 = vst [vmem:[#allocation4 + $0x30] sm:$0xff] %v3364
    %3417 = vst [vmem:[#allocation4 + $0x38] sm:$0xff] %v3393
    %3418 = vst [vmem:[#allocation4 + $0x40] sm:$0xff] %v3309
    %3419 = vst [vmem:[#allocation4 + $0x48] sm:$0xff] %v3338
    %3420 = vst [vmem:[#allocation4 + $0x50] sm:$0xff] %v3367
    %3421 = vst [vmem:[#allocation4 + $0x58] sm:$0xff] %v3396
    %3422 = vst [vmem:[#allocation4 + $0x60] sm:$0xff] %v3311
    %3423 = vst [vmem:[#allocation4 + $0x68] sm:$0xff] %v3340
    %3424 = vst [vmem:[#allocation4 + $0x70] sm:$0xff] %v3369
    %3425 = vst [vmem:[#allocation4 + $0x78] sm:$0xff] %v3398
    %3426 = vst [vmem:[#allocation4 + $0x80] sm:$0xff] %v3314
    %3427 = vst [vmem:[#allocation4 + $0x88] sm:$0xff] %v3343
    %3428 = vst [vmem:[#allocation4 + $0x90] sm:$0xff] %v3372
    %3429 = vst [vmem:[#allocation4 + $0x98] sm:$0xff] %v3401
    %3430 = vst [vmem:[#allocation4 + $0xa0] sm:$0xff] %v3316
    %3431 = vst [vmem:[#allocation4 + $0xa8] sm:$0xff] %v3345
    %3432 = vst [vmem:[#allocation4 + $0xb0] sm:$0xff] %v3374
    %3433 = vst [vmem:[#allocation4 + $0xb8] sm:$0xff] %v3403
    %3434 = vst [vmem:[#allocation4 + $0xc0] sm:$0xff] %v3319
    %3435 = vst [vmem:[#allocation4 + $0xc8] sm:$0xff] %v3348
    %3436 = vst [vmem:[#allocation4 + $0xd0] sm:$0xff] %v3377
    %3437 = vst [vmem:[#allocation4 + $0xd8] sm:$0xff] %v3406
    %3438 = vst [vmem:[#allocation4 + $0xe0] sm:$0xff] %v3321
    %3439 = vst [vmem:[#allocation4 + $0xe8] sm:$0xff] %v3350
    %3440 = vst [vmem:[#allocation4 + $0xf0] sm:$0xff] %v3379
    %3441 = vst [vmem:[#allocation4 + $0xf8] sm:$0xff] %v3408
    %v3442 = vld [vmem:[%s495] sm:$0xff]
    %v3443 = vld [vmem:[%s495 + $0x8] sm:$0xff]
    %v3444 = vld [vmem:[%s495 + $0x10] sm:$0xff]
    %v3445 = vld [vmem:[%s495 + $0x18] sm:$0xff]
    %v3446 = vld [vmem:[#allocation10] sm:$0xff]
    %v3447 = vld [vmem:[#allocation10 + $0x8] sm:$0xff]
    %v3448 = vld [vmem:[#allocation10 + $0x10] sm:$0xff]
    %v3449 = vld [vmem:[#allocation10 + $0x18] sm:$0xff]
    %v3450 = vld [vmem:[#allocation10 + $0x20] sm:$0xff]
    %v3451 = vld [vmem:[#allocation10 + $0x28] sm:$0xff]
    %v3452 = vld [vmem:[#allocation10 + $0x30] sm:$0xff]
    %v3453 = vld [vmem:[#allocation10 + $0x38] sm:$0xff]
    %v3454 = vld [vmem:[#allocation10 + $0x40] sm:$0xff]
    %v3455 = vld [vmem:[#allocation10 + $0x48] sm:$0xff]
    %v3456 = vld [vmem:[#allocation10 + $0x50] sm:$0xff]
    %v3457 = vld [vmem:[#allocation10 + $0x58] sm:$0xff]
    %v3458 = vld [vmem:[#allocation10 + $0x60] sm:$0xff]
    %v3459 = vld [vmem:[#allocation10 + $0x68] sm:$0xff]
    %v3460 = vld [vmem:[#allocation10 + $0x70] sm:$0xff]
    %v3461 = vld [vmem:[#allocation10 + $0x78] sm:$0xff]
    %v3462 = vld [vmem:[#allocation10 + $0x80] sm:$0xff]
    %v3463 = vld [vmem:[#allocation10 + $0x88] sm:$0xff]
    %v3464 = vld [vmem:[#allocation10 + $0x90] sm:$0xff]
    %v3465 = vld [vmem:[#allocation10 + $0x98] sm:$0xff]
    %v3466 = vld [vmem:[#allocation10 + $0xa0] sm:$0xff]
    %v3467 = vld [vmem:[#allocation10 + $0xa8] sm:$0xff]
    %v3468 = vld [vmem:[#allocation10 + $0xb0] sm:$0xff]
    %v3469 = vld [vmem:[#allocation10 + $0xb8] sm:$0xff]
    %v3470 = vld [vmem:[#allocation10 + $0xc0] sm:$0xff]
    %v3471 = vld [vmem:[#allocation10 + $0xc8] sm:$0xff]
    %v3472 = vld [vmem:[#allocation10 + $0xd0] sm:$0xff]
    %v3473 = vld [vmem:[#allocation10 + $0xd8] sm:$0xff]
    %v3474 = vld [vmem:[#allocation10 + $0xe0] sm:$0xff]
    %v3475 = vld [vmem:[#allocation10 + $0xe8] sm:$0xff]
    %v3476 = vld [vmem:[#allocation10 + $0xf0] sm:$0xff]
    %v3477 = vld [vmem:[#allocation10 + $0xf8] sm:$0xff]
    %v3510 = vunpack.c.l.b16 %v3446
    %v3511 = vunpack.c.h.b16 %v3446
    %v3512 = vunpack.c.l.b16 %v3447
    %v3513 = vunpack.c.h.b16 %v3447
    %v3514 = vunpack.c.l.b16 %v3448
    %v3515 = vunpack.c.h.b16 %v3448
    %v3516 = vunpack.c.l.b16 %v3449
    %v3517 = vunpack.c.h.b16 %v3449
    %v3518 = vunpack.c.l.b16 %v3450
    %v3519 = vunpack.c.h.b16 %v3450
    %v3520 = vunpack.c.l.b16 %v3451
    %v3521 = vunpack.c.h.b16 %v3451
    %v3522 = vunpack.c.l.b16 %v3452
    %v3523 = vunpack.c.h.b16 %v3452
    %v3524 = vunpack.c.l.b16 %v3453
    %v3525 = vunpack.c.h.b16 %v3453
    %v3526 = vunpack.c.l.b16 %v3454
    %v3527 = vunpack.c.h.b16 %v3454
    %v3528 = vunpack.c.l.b16 %v3455
    %v3529 = vunpack.c.h.b16 %v3455
    %v3530 = vunpack.c.l.b16 %v3456
    %v3531 = vunpack.c.h.b16 %v3456
    %v3532 = vunpack.c.l.b16 %v3457
    %v3533 = vunpack.c.h.b16 %v3457
    %v3534 = vunpack.c.l.b16 %v3458
    %v3535 = vunpack.c.h.b16 %v3458
    %v3536 = vunpack.c.l.b16 %v3459
    %v3537 = vunpack.c.h.b16 %v3459
    %v3538 = vunpack.c.l.b16 %v3460
    %v3539 = vunpack.c.h.b16 %v3460
    %v3540 = vunpack.c.l.b16 %v3461
    %v3541 = vunpack.c.h.b16 %v3461
    %v3542 = vunpack.c.l.b16 %v3462
    %v3543 = vunpack.c.h.b16 %v3462
    %v3544 = vunpack.c.l.b16 %v3463
    %v3545 = vunpack.c.h.b16 %v3463
    %v3546 = vunpack.c.l.b16 %v3464
    %v3547 = vunpack.c.h.b16 %v3464
    %v3548 = vunpack.c.l.b16 %v3465
    %v3549 = vunpack.c.h.b16 %v3465
    %v3550 = vunpack.c.l.b16 %v3466
    %v3551 = vunpack.c.h.b16 %v3466
    %v3552 = vunpack.c.l.b16 %v3467
    %v3553 = vunpack.c.h.b16 %v3467
    %v3554 = vunpack.c.l.b16 %v3468
    %v3555 = vunpack.c.h.b16 %v3468
    %v3556 = vunpack.c.l.b16 %v3469
    %v3557 = vunpack.c.h.b16 %v3469
    %v3558 = vunpack.c.l.b16 %v3470
    %v3559 = vunpack.c.h.b16 %v3470
    %v3560 = vunpack.c.l.b16 %v3471
    %v3561 = vunpack.c.h.b16 %v3471
    %v3562 = vunpack.c.l.b16 %v3472
    %v3563 = vunpack.c.h.b16 %v3472
    %v3564 = vunpack.c.l.b16 %v3473
    %v3565 = vunpack.c.h.b16 %v3473
    %v3566 = vunpack.c.l.b16 %v3474
    %v3567 = vunpack.c.h.b16 %v3474
    %v3568 = vunpack.c.l.b16 %v3475
    %v3569 = vunpack.c.h.b16 %v3475
    %v3570 = vunpack.c.l.b16 %v3476
    %v3571 = vunpack.c.h.b16 %v3476
    %v3572 = vunpack.c.l.b16 %v3477
    %v3573 = vunpack.c.h.b16 %v3477
    %v3574 = vpack.c.b16 %v3514, %v3510
    %v3575 = vpack.c.b16 %v3515, %v3511
    %v3576 = vpack.c.b16 %v3516, %v3512
    %v3577 = vpack.c.b16 %v3517, %v3513
    %v3578 = vpack.c.b16 %v3522, %v3518
    %v3579 = vpack.c.b16 %v3523, %v3519
    %v3580 = vpack.c.b16 %v3524, %v3520
    %v3581 = vpack.c.b16 %v3525, %v3521
    %v3582 = vpack.c.b16 %v3530, %v3526
    %v3583 = vpack.c.b16 %v3531, %v3527
    %v3584 = vpack.c.b16 %v3532, %v3528
    %v3585 = vpack.c.b16 %v3533, %v3529
    %v3586 = vpack.c.b16 %v3538, %v3534
    %v3587 = vpack.c.b16 %v3539, %v3535
    %v3588 = vpack.c.b16 %v3540, %v3536
    %v3589 = vpack.c.b16 %v3541, %v3537
    %v3590 = vpack.c.b16 %v3546, %v3542
    %v3591 = vpack.c.b16 %v3547, %v3543
    %v3592 = vpack.c.b16 %v3548, %v3544
    %v3593 = vpack.c.b16 %v3549, %v3545
    %v3594 = vpack.c.b16 %v3554, %v3550
    %v3595 = vpack.c.b16 %v3555, %v3551
    %v3596 = vpack.c.b16 %v3556, %v3552
    %v3597 = vpack.c.b16 %v3557, %v3553
    %v3598 = vpack.c.b16 %v3562, %v3558
    %v3599 = vpack.c.b16 %v3563, %v3559
    %v3600 = vpack.c.b16 %v3564, %v3560
    %v3601 = vpack.c.b16 %v3565, %v3561
    %v3602 = vpack.c.b16 %v3570, %v3566
    %v3603 = vpack.c.b16 %v3571, %v3567
    %v3604 = vpack.c.b16 %v3572, %v3568
    %v3605 = vpack.c.b16 %v3573, %v3569
    %3638 = vmatpush.bf16.msra.mxu0 %v3602
    %3639 = vmatpush.bf16.msra.mxu0 %v3598
    %3640 = vmatpush.bf16.msra.mxu0 %v3594
    %3641 = vmatpush.bf16.msra.mxu0 %v3590
    %3642 = vmatpush.bf16.msra.mxu0 %v3586
    %3643 = vmatpush.bf16.msra.mxu0 %v3582
    %3644 = vmatpush.bf16.msra.mxu0 %v3578
    %3645 = vmatpush.bf16.msra.mxu0 %v3574
    %3646 = vmatmul.bf16.gmra.mxu0 0
    %v3647 = vpop.f32.mrf.mxu0
    %v3648 = vadd.f32 0.0, %v3647
    %v3649 = vpop.f32.mrf.mxu0
    %3650 = vdwg.mxu0
    %3651 = vmatpush.bf16.msra.mxu0 %v3603
    %3652 = vmatpush.bf16.msra.mxu0 %v3599
    %3653 = vmatpush.bf16.msra.mxu0 %v3595
    %3654 = vmatpush.bf16.msra.mxu0 %v3591
    %3655 = vmatpush.bf16.msra.mxu0 %v3587
    %3656 = vmatpush.bf16.msra.mxu0 %v3583
    %3657 = vmatpush.bf16.msra.mxu0 %v3579
    %3658 = vmatpush.bf16.msra.mxu0 %v3575
    %3659 = vmatmul.bf16.gmra.mxu0 0
    %v3660 = vpop.f32.mrf.mxu0
    %v3661 = vadd.f32 0.0, %v3660
    %v3662 = vpop.f32.mrf.mxu0
    %3663 = vdwg.mxu0
    %3664 = vmatpush.bf16.msra.mxu0 %v3604
    %3665 = vmatpush.bf16.msra.mxu0 %v3600
    %3666 = vmatpush.bf16.msra.mxu0 %v3596
    %3667 = vmatpush.bf16.msra.mxu0 %v3592
    %3668 = vmatpush.bf16.msra.mxu0 %v3588
    %3669 = vmatpush.bf16.msra.mxu0 %v3584
    %3670 = vmatpush.bf16.msra.mxu0 %v3580
    %3671 = vmatpush.bf16.msra.mxu0 %v3576
    %3672 = vmatmul.bf16.gmra.mxu0 0
    %v3673 = vpop.f32.mrf.mxu0
    %v3674 = vadd.f32 0.0, %v3673
    %v3675 = vpop.f32.mrf.mxu0
    %3676 = vdwg.mxu0
    %3677 = vmatpush.bf16.msra.mxu0 %v3605
    %3678 = vmatpush.bf16.msra.mxu0 %v3601
    %3679 = vmatpush.bf16.msra.mxu0 %v3597
    %3680 = vmatpush.bf16.msra.mxu0 %v3593
    %3681 = vmatpush.bf16.msra.mxu0 %v3589
    %3682 = vmatpush.bf16.msra.mxu0 %v3585
    %3683 = vmatpush.bf16.msra.mxu0 %v3581
    %3684 = vmatpush.bf16.msra.mxu0 %v3577
    %3685 = vmatmul.bf16.gmra.mxu0 0
    %v3686 = vpop.f32.mrf.mxu0
    %v3687 = vadd.f32 0.0, %v3686
    %v3688 = vpop.f32.mrf.mxu0
    %3689 = vdwg.mxu0
    %v3690 = vadd.f32 %v3442, %v3648
    %v3691 = vadd.f32 %v3443, %v3661
    %v3692 = vadd.f32 %v3444, %v3674
    %v3693 = vadd.f32 %v3445, %v3687
    %v3694 = vxor.u32 %v3690, 2147483648
    %v3695 = vxor.u32 %v3691, 2147483648
    %v3696 = vxor.u32 %v3692, 2147483648
    %v3697 = vmul.f32 %v3694, 1.442695
    %v3698 = vpow.pop %v3697
    %v3699 = vmul.f32 %v3695, 1.442695
    %v3700 = vpow.pop %v3699
    %v3701 = vmul.f32 %v3696, 1.442695
    %v3702 = vpow.pop %v3701
    %v3703 = vadd.f32 %v3698, 1.0
    %v3704 = vadd.f32 %v3700, 1.0
    %v3705 = vadd.f32 %v3702, 1.0
    %v3706 = vrcp.pop %v3703
    %v3707 = vmul.f32 %v3703, %v3706
    %v3708 = vsub.f32 1.0, %v3707
    %v3709 = vmul.f32 %v3706, %v3708
    %v3710 = vadd.f32 %v3706, %v3709
    %vm3711 = vweird.f32 %v3703
    %vm3712 = vweird.f32 %v3706
    %vm3713 = vmor %vm3711, %vm3712
    %v3714 = vsel %vm3713, %v3706, %v3710
    %v3715 = vand.u32 2147483647, %v3703
    %vm3716 = vcmp.eq.f32.partialorder %v3715, 8.507059e+37
    %v3717 = vand.u32 %v3703, 2147483648
    %v3718 = vor.u32 1.1754944e-38, %v3717
    %v3719 = vsel %vm3716, %v3718, %v3714
    %v3720 = vmul.f32 1.0, %v3719
    %v3721 = vrcp.pop %v3704
    %v3722 = vmul.f32 %v3704, %v3721
    %v3723 = vsub.f32 1.0, %v3722
    %v3724 = vmul.f32 %v3721, %v3723
    %v3725 = vadd.f32 %v3721, %v3724
    %vm3726 = vweird.f32 %v3704
    %vm3727 = vweird.f32 %v3721
    %vm3728 = vmor %vm3726, %vm3727
    %v3729 = vsel %vm3728, %v3721, %v3725
    %v3730 = vand.u32 2147483647, %v3704
    %vm3731 = vcmp.eq.f32.partialorder %v3730, 8.507059e+37
    %v3732 = vand.u32 %v3704, 2147483648
    %v3733 = vor.u32 1.1754944e-38, %v3732
    %v3734 = vsel %vm3731, %v3733, %v3729
    %v3735 = vmul.f32 1.0, %v3734
    %v3736 = vrcp.pop %v3705
    %v3737 = vmul.f32 %v3705, %v3736
    %v3738 = vsub.f32 1.0, %v3737
    %v3739 = vmul.f32 %v3736, %v3738
    %v3740 = vadd.f32 %v3736, %v3739
    %vm3741 = vweird.f32 %v3705
    %vm3742 = vweird.f32 %v3736
    %vm3743 = vmor %vm3741, %vm3742
    %v3744 = vsel %vm3743, %v3736, %v3740
    %v3745 = vand.u32 2147483647, %v3705
    %vm3746 = vcmp.eq.f32.partialorder %v3745, 8.507059e+37
    %v3747 = vand.u32 %v3705, 2147483648
    %v3748 = vor.u32 1.1754944e-38, %v3747
    %v3749 = vsel %vm3746, %v3748, %v3744
    %v3750 = vmul.f32 1.0, %v3749
    %v3751 = vtanh.pop %v3693
    %v3752 = vmul.f32 %v3735, 0.0
    %v3753 = vmul.f32 %v3720, %v3751
    %v3754 = vadd.f32 %v3752, %v3753
    %v3755 = vtanh.pop %v3754
    %v3756 = vmul.f32 %v3750, %v3755
    %v3757 = vld [vmem:[%s815] sm:$0xff]
    %v3758 = vld [vmem:[%s815 + $0x8] sm:$0xff]
    %v3759 = vld [vmem:[%s815 + $0x10] sm:$0xff]
    %v3760 = vld [vmem:[%s815 + $0x18] sm:$0xff]
    %v3761 = vpack.c.bf16 %v3756, %v3756
    %3762 = vmatpush.bf16.msra.mxu0 %v3602
    %3763 = vmatpush.bf16.msra.mxu0 %v3598
    %3764 = vmatpush.bf16.msra.mxu0 %v3594
    %3765 = vmatpush.bf16.msra.mxu0 %v3590
    %3766 = vmatpush.bf16.msra.mxu0 %v3586
    %3767 = vmatpush.bf16.msra.mxu0 %v3582
    %3768 = vmatpush.bf16.msra.mxu0 %v3578
    %3769 = vmatpush.bf16.msra.mxu0 %v3574
    %3770 = vmatmul.bf16.gmra.mxu0 %v3761
    %v3771 = vpop.f32.mrf.mxu0
    %v3772 = vadd.f32 0.0, %v3771
    %v3773 = vpop.f32.mrf.mxu0
    %3774 = vdwg.mxu0
    %3775 = vmatpush.bf16.msra.mxu0 %v3603
    %3776 = vmatpush.bf16.msra.mxu0 %v3599
    %3777 = vmatpush.bf16.msra.mxu0 %v3595
    %3778 = vmatpush.bf16.msra.mxu0 %v3591
    %3779 = vmatpush.bf16.msra.mxu0 %v3587
    %3780 = vmatpush.bf16.msra.mxu0 %v3583
    %3781 = vmatpush.bf16.msra.mxu0 %v3579
    %3782 = vmatpush.bf16.msra.mxu0 %v3575
    %3783 = vmatmul.bf16.gmra.mxu0 %v3761
    %v3784 = vpop.f32.mrf.mxu0
    %v3785 = vadd.f32 0.0, %v3784
    %v3786 = vpop.f32.mrf.mxu0
    %3787 = vdwg.mxu0
    %3788 = vmatpush.bf16.msra.mxu0 %v3604
    %3789 = vmatpush.bf16.msra.mxu0 %v3600
    %3790 = vmatpush.bf16.msra.mxu0 %v3596
    %3791 = vmatpush.bf16.msra.mxu0 %v3592
    %3792 = vmatpush.bf16.msra.mxu0 %v3588
    %3793 = vmatpush.bf16.msra.mxu0 %v3584
    %3794 = vmatpush.bf16.msra.mxu0 %v3580
    %3795 = vmatpush.bf16.msra.mxu0 %v3576
    %3796 = vmatmul.bf16.gmra.mxu0 %v3761
    %v3797 = vpop.f32.mrf.mxu0
    %v3798 = vadd.f32 0.0, %v3797
    %v3799 = vpop.f32.mrf.mxu0
    %3800 = vdwg.mxu0
    %3801 = vmatpush.bf16.msra.mxu0 %v3605
    %3802 = vmatpush.bf16.msra.mxu0 %v3601
    %3803 = vmatpush.bf16.msra.mxu0 %v3597
    %3804 = vmatpush.bf16.msra.mxu0 %v3593
    %3805 = vmatpush.bf16.msra.mxu0 %v3589
    %3806 = vmatpush.bf16.msra.mxu0 %v3585
    %3807 = vmatpush.bf16.msra.mxu0 %v3581
    %3808 = vmatpush.bf16.msra.mxu0 %v3577
    %3809 = vmatmul.bf16.gmra.mxu0 %v3761
    %v3810 = vpop.f32.mrf.mxu0
    %v3811 = vadd.f32 0.0, %v3810
    %v3812 = vpop.f32.mrf.mxu0
    %3813 = vdwg.mxu0
    %v3814 = vadd.f32 %v3757, %v3772
    %v3815 = vadd.f32 %v3758, %v3785
    %v3816 = vadd.f32 %v3759, %v3798
    %v3817 = vadd.f32 %v3760, %v3811
    %v3818 = vxor.u32 %v3814, 2147483648
    %v3819 = vxor.u32 %v3815, 2147483648
    %v3820 = vxor.u32 %v3816, 2147483648
    %v3821 = vmul.f32 %v3818, 1.442695
    %v3822 = vpow.pop %v3821
    %v3823 = vmul.f32 %v3819, 1.442695
    %v3824 = vpow.pop %v3823
    %v3825 = vmul.f32 %v3820, 1.442695
    %v3826 = vpow.pop %v3825
    %v3827 = vadd.f32 %v3822, 1.0
    %v3828 = vadd.f32 %v3824, 1.0
    %v3829 = vadd.f32 %v3826, 1.0
    %v3830 = vrcp.pop %v3827
    %v3831 = vmul.f32 %v3827, %v3830
    %v3832 = vsub.f32 1.0, %v3831
    %v3833 = vmul.f32 %v3830, %v3832
    %v3834 = vadd.f32 %v3830, %v3833
    %vm3835 = vweird.f32 %v3827
    %vm3836 = vweird.f32 %v3830
    %vm3837 = vmor %vm3835, %vm3836
    %v3838 = vsel %vm3837, %v3830, %v3834
    %v3839 = vand.u32 2147483647, %v3827
    %vm3840 = vcmp.eq.f32.partialorder %v3839, 8.507059e+37
    %v3841 = vand.u32 %v3827, 2147483648
    %v3842 = vor.u32 1.1754944e-38, %v3841
    %v3843 = vsel %vm3840, %v3842, %v3838
    %v3844 = vmul.f32 1.0, %v3843
    %v3845 = vrcp.pop %v3828
    %v3846 = vmul.f32 %v3828, %v3845
    %v3847 = vsub.f32 1.0, %v3846
    %v3848 = vmul.f32 %v3845, %v3847
    %v3849 = vadd.f32 %v3845, %v3848
    %vm3850 = vweird.f32 %v3828
    %vm3851 = vweird.f32 %v3845
    %vm3852 = vmor %vm3850, %vm3851
    %v3853 = vsel %vm3852, %v3845, %v3849
    %v3854 = vand.u32 2147483647, %v3828
    %vm3855 = vcmp.eq.f32.partialorder %v3854, 8.507059e+37
    %v3856 = vand.u32 %v3828, 2147483648
    %v3857 = vor.u32 1.1754944e-38, %v3856
    %v3858 = vsel %vm3855, %v3857, %v3853
    %v3859 = vmul.f32 1.0, %v3858
    %v3860 = vrcp.pop %v3829
    %v3861 = vmul.f32 %v3829, %v3860
    %v3862 = vsub.f32 1.0, %v3861
    %v3863 = vmul.f32 %v3860, %v3862
    %v3864 = vadd.f32 %v3860, %v3863
    %vm3865 = vweird.f32 %v3829
    %vm3866 = vweird.f32 %v3860
    %vm3867 = vmor %vm3865, %vm3866
    %v3868 = vsel %vm3867, %v3860, %v3864
    %v3869 = vand.u32 2147483647, %v3829
    %vm3870 = vcmp.eq.f32.partialorder %v3869, 8.507059e+37
    %v3871 = vand.u32 %v3829, 2147483648
    %v3872 = vor.u32 1.1754944e-38, %v3871
    %v3873 = vsel %vm3870, %v3872, %v3868
    %v3874 = vmul.f32 1.0, %v3873
    %v3875 = vtanh.pop %v3817
    %v3876 = vmul.f32 %v3859, %v3754
    %v3877 = vmul.f32 %v3844, %v3875
    %v3878 = vadd.f32 %v3876, %v3877
    %v3879 = vtanh.pop %v3878
    %v3880 = vmul.f32 %v3874, %v3879
    %v3881 = vld [vmem:[%s1136] sm:$0xff]
    %v3882 = vld [vmem:[%s1136 + $0x8] sm:$0xff]
    %v3883 = vld [vmem:[%s1136 + $0x10] sm:$0xff]
    %v3884 = vld [vmem:[%s1136 + $0x18] sm:$0xff]
    %v3885 = vpack.c.bf16 %v3880, %v3880
    %3886 = vmatpush.bf16.msra.mxu0 %v3602
    %3887 = vmatpush.bf16.msra.mxu0 %v3598
    %3888 = vmatpush.bf16.msra.mxu0 %v3594
    %3889 = vmatpush.bf16.msra.mxu0 %v3590
    %3890 = vmatpush.bf16.msra.mxu0 %v3586
    %3891 = vmatpush.bf16.msra.mxu0 %v3582
    %3892 = vmatpush.bf16.msra.mxu0 %v3578
    %3893 = vmatpush.bf16.msra.mxu0 %v3574
    %3894 = vmatmul.bf16.gmra.mxu0 %v3885
    %v3895 = vpop.f32.mrf.mxu0
    %v3896 = vadd.f32 0.0, %v3895
    %v3897 = vpop.f32.mrf.mxu0
    %3898 = vdwg.mxu0
    %3899 = vmatpush.bf16.msra.mxu0 %v3603
    %3900 = vmatpush.bf16.msra.mxu0 %v3599
    %3901 = vmatpush.bf16.msra.mxu0 %v3595
    %3902 = vmatpush.bf16.msra.mxu0 %v3591
    %3903 = vmatpush.bf16.msra.mxu0 %v3587
    %3904 = vmatpush.bf16.msra.mxu0 %v3583
    %3905 = vmatpush.bf16.msra.mxu0 %v3579
    %3906 = vmatpush.bf16.msra.mxu0 %v3575
    %3907 = vmatmul.bf16.gmra.mxu0 %v3885
    %v3908 = vpop.f32.mrf.mxu0
    %v3909 = vadd.f32 0.0, %v3908
    %v3910 = vpop.f32.mrf.mxu0
    %3911 = vdwg.mxu0
    %3912 = vmatpush.bf16.msra.mxu0 %v3604
    %3913 = vmatpush.bf16.msra.mxu0 %v3600
    %3914 = vmatpush.bf16.msra.mxu0 %v3596
    %3915 = vmatpush.bf16.msra.mxu0 %v3592
    %3916 = vmatpush.bf16.msra.mxu0 %v3588
    %3917 = vmatpush.bf16.msra.mxu0 %v3584
    %3918 = vmatpush.bf16.msra.mxu0 %v3580
    %3919 = vmatpush.bf16.msra.mxu0 %v3576
    %3920 = vmatmul.bf16.gmra.mxu0 %v3885
    %v3921 = vpop.f32.mrf.mxu0
    %v3922 = vadd.f32 0.0, %v3921
    %v3923 = vpop.f32.mrf.mxu0
    %3924 = vdwg.mxu0
    %3925 = vmatpush.bf16.msra.mxu0 %v3605
    %3926 = vmatpush.bf16.msra.mxu0 %v3601
    %3927 = vmatpush.bf16.msra.mxu0 %v3597
    %3928 = vmatpush.bf16.msra.mxu0 %v3593
    %3929 = vmatpush.bf16.msra.mxu0 %v3589
    %3930 = vmatpush.bf16.msra.mxu0 %v3585
    %3931 = vmatpush.bf16.msra.mxu0 %v3581
    %3932 = vmatpush.bf16.msra.mxu0 %v3577
    %3933 = vmatmul.bf16.gmra.mxu0 %v3885
    %v3934 = vpop.f32.mrf.mxu0
    %v3935 = vadd.f32 0.0, %v3934
    %v3936 = vpop.f32.mrf.mxu0
    %3937 = vdwg.mxu0
    %v3938 = vadd.f32 %v3881, %v3896
    %v3939 = vadd.f32 %v3882, %v3909
    %v3940 = vadd.f32 %v3883, %v3922
    %v3941 = vadd.f32 %v3884, %v3935
    %v3942 = vxor.u32 %v3938, 2147483648
    %v3943 = vxor.u32 %v3939, 2147483648
    %v3944 = vxor.u32 %v3940, 2147483648
    %v3945 = vmul.f32 %v3942, 1.442695
    %v3946 = vpow.pop %v3945
    %v3947 = vmul.f32 %v3943, 1.442695
    %v3948 = vpow.pop %v3947
    %v3949 = vmul.f32 %v3944, 1.442695
    %v3950 = vpow.pop %v3949
    %v3951 = vadd.f32 %v3946, 1.0
    %v3952 = vadd.f32 %v3948, 1.0
    %v3953 = vadd.f32 %v3950, 1.0
    %v3954 = vrcp.pop %v3951
    %v3955 = vmul.f32 %v3951, %v3954
    %v3956 = vsub.f32 1.0, %v3955
    %v3957 = vmul.f32 %v3954, %v3956
    %v3958 = vadd.f32 %v3954, %v3957
    %vm3959 = vweird.f32 %v3951
    %vm3960 = vweird.f32 %v3954
    %vm3961 = vmor %vm3959, %vm3960
    %v3962 = vsel %vm3961, %v3954, %v3958
    %v3963 = vand.u32 2147483647, %v3951
    %vm3964 = vcmp.eq.f32.partialorder %v3963, 8.507059e+37
    %v3965 = vand.u32 %v3951, 2147483648
    %v3966 = vor.u32 1.1754944e-38, %v3965
    %v3967 = vsel %vm3964, %v3966, %v3962
    %v3968 = vmul.f32 1.0, %v3967
    %v3969 = vrcp.pop %v3952
    %v3970 = vmul.f32 %v3952, %v3969
    %v3971 = vsub.f32 1.0, %v3970
    %v3972 = vmul.f32 %v3969, %v3971
    %v3973 = vadd.f32 %v3969, %v3972
    %vm3974 = vweird.f32 %v3952
    %vm3975 = vweird.f32 %v3969
    %vm3976 = vmor %vm3974, %vm3975
    %v3977 = vsel %vm3976, %v3969, %v3973
    %v3978 = vand.u32 2147483647, %v3952
    %vm3979 = vcmp.eq.f32.partialorder %v3978, 8.507059e+37
    %v3980 = vand.u32 %v3952, 2147483648
    %v3981 = vor.u32 1.1754944e-38, %v3980
    %v3982 = vsel %vm3979, %v3981, %v3977
    %v3983 = vmul.f32 1.0, %v3982
    %v3984 = vrcp.pop %v3953
    %v3985 = vmul.f32 %v3953, %v3984
    %v3986 = vsub.f32 1.0, %v3985
    %v3987 = vmul.f32 %v3984, %v3986
    %v3988 = vadd.f32 %v3984, %v3987
    %vm3989 = vweird.f32 %v3953
    %vm3990 = vweird.f32 %v3984
    %vm3991 = vmor %vm3989, %vm3990
    %v3992 = vsel %vm3991, %v3984, %v3988
    %v3993 = vand.u32 2147483647, %v3953
    %vm3994 = vcmp.eq.f32.partialorder %v3993, 8.507059e+37
    %v3995 = vand.u32 %v3953, 2147483648
    %v3996 = vor.u32 1.1754944e-38, %v3995
    %v3997 = vsel %vm3994, %v3996, %v3992
    %v3998 = vmul.f32 1.0, %v3997
    %v3999 = vtanh.pop %v3941
    %v4000 = vmul.f32 %v3983, %v3878
    %v4001 = vmul.f32 %v3968, %v3999
    %v4002 = vadd.f32 %v4000, %v4001
    %v4003 = vtanh.pop %v4002
    %v4004 = vmul.f32 %v3998, %v4003
    %v4005 = vld [vmem:[%s1457] sm:$0xff]
    %v4006 = vld [vmem:[%s1457 + $0x8] sm:$0xff]
    %v4007 = vld [vmem:[%s1457 + $0x10] sm:$0xff]
    %v4008 = vld [vmem:[%s1457 + $0x18] sm:$0xff]
    %v4009 = vpack.c.bf16 %v4004, %v4004
    %4010 = vmatpush.bf16.msra.mxu0 %v3602
    %4011 = vmatpush.bf16.msra.mxu0 %v3598
    %4012 = vmatpush.bf16.msra.mxu0 %v3594
    %4013 = vmatpush.bf16.msra.mxu0 %v3590
    %4014 = vmatpush.bf16.msra.mxu0 %v3586
    %4015 = vmatpush.bf16.msra.mxu0 %v3582
    %4016 = vmatpush.bf16.msra.mxu0 %v3578
    %4017 = vmatpush.bf16.msra.mxu0 %v3574
    %4018 = vmatmul.bf16.gmra.mxu0 %v4009
    %v4019 = vpop.f32.mrf.mxu0
    %v4020 = vadd.f32 0.0, %v4019
    %v4021 = vpop.f32.mrf.mxu0
    %4022 = vdwg.mxu0
    %4023 = vmatpush.bf16.msra.mxu0 %v3603
    %4024 = vmatpush.bf16.msra.mxu0 %v3599
    %4025 = vmatpush.bf16.msra.mxu0 %v3595
    %4026 = vmatpush.bf16.msra.mxu0 %v3591
    %4027 = vmatpush.bf16.msra.mxu0 %v3587
    %4028 = vmatpush.bf16.msra.mxu0 %v3583
    %4029 = vmatpush.bf16.msra.mxu0 %v3579
    %4030 = vmatpush.bf16.msra.mxu0 %v3575
    %4031 = vmatmul.bf16.gmra.mxu0 %v4009
    %v4032 = vpop.f32.mrf.mxu0
    %v4033 = vadd.f32 0.0, %v4032
    %v4034 = vpop.f32.mrf.mxu0
    %4035 = vdwg.mxu0
    %4036 = vmatpush.bf16.msra.mxu0 %v3604
    %4037 = vmatpush.bf16.msra.mxu0 %v3600
    %4038 = vmatpush.bf16.msra.mxu0 %v3596
    %4039 = vmatpush.bf16.msra.mxu0 %v3592
    %4040 = vmatpush.bf16.msra.mxu0 %v3588
    %4041 = vmatpush.bf16.msra.mxu0 %v3584
    %4042 = vmatpush.bf16.msra.mxu0 %v3580
    %4043 = vmatpush.bf16.msra.mxu0 %v3576
    %4044 = vmatmul.bf16.gmra.mxu0 %v4009
    %v4045 = vpop.f32.mrf.mxu0
    %v4046 = vadd.f32 0.0, %v4045
    %v4047 = vpop.f32.mrf.mxu0
    %4048 = vdwg.mxu0
    %4049 = vmatpush.bf16.msra.mxu0 %v3605
    %4050 = vmatpush.bf16.msra.mxu0 %v3601
    %4051 = vmatpush.bf16.msra.mxu0 %v3597
    %4052 = vmatpush.bf16.msra.mxu0 %v3593
    %4053 = vmatpush.bf16.msra.mxu0 %v3589
    %4054 = vmatpush.bf16.msra.mxu0 %v3585
    %4055 = vmatpush.bf16.msra.mxu0 %v3581
    %4056 = vmatpush.bf16.msra.mxu0 %v3577
    %4057 = vmatmul.bf16.gmra.mxu0 %v4009
    %v4058 = vpop.f32.mrf.mxu0
    %v4059 = vadd.f32 0.0, %v4058
    %v4060 = vpop.f32.mrf.mxu0
    %4061 = vdwg.mxu0
    %v4062 = vadd.f32 %v4005, %v4020
    %v4063 = vadd.f32 %v4006, %v4033
    %v4064 = vadd.f32 %v4007, %v4046
    %v4065 = vadd.f32 %v4008, %v4059
    %v4066 = vxor.u32 %v4062, 2147483648
    %v4067 = vxor.u32 %v4063, 2147483648
    %v4068 = vxor.u32 %v4064, 2147483648
    %v4069 = vmul.f32 %v4066, 1.442695
    %v4070 = vpow.pop %v4069
    %v4071 = vmul.f32 %v4067, 1.442695
    %v4072 = vpow.pop %v4071
    %v4073 = vmul.f32 %v4068, 1.442695
    %v4074 = vpow.pop %v4073
    %v4075 = vadd.f32 %v4070, 1.0
    %v4076 = vadd.f32 %v4072, 1.0
    %v4077 = vadd.f32 %v4074, 1.0
    %v4078 = vrcp.pop %v4075
    %v4079 = vmul.f32 %v4075, %v4078
    %v4080 = vsub.f32 1.0, %v4079
    %v4081 = vmul.f32 %v4078, %v4080
    %v4082 = vadd.f32 %v4078, %v4081
    %vm4083 = vweird.f32 %v4075
    %vm4084 = vweird.f32 %v4078
    %vm4085 = vmor %vm4083, %vm4084
    %v4086 = vsel %vm4085, %v4078, %v4082
    %v4087 = vand.u32 2147483647, %v4075
    %vm4088 = vcmp.eq.f32.partialorder %v4087, 8.507059e+37
    %v4089 = vand.u32 %v4075, 2147483648
    %v4090 = vor.u32 1.1754944e-38, %v4089
    %v4091 = vsel %vm4088, %v4090, %v4086
    %v4092 = vmul.f32 1.0, %v4091
    %v4093 = vrcp.pop %v4076
    %v4094 = vmul.f32 %v4076, %v4093
    %v4095 = vsub.f32 1.0, %v4094
    %v4096 = vmul.f32 %v4093, %v4095
    %v4097 = vadd.f32 %v4093, %v4096
    %vm4098 = vweird.f32 %v4076
    %vm4099 = vweird.f32 %v4093
    %vm4100 = vmor %vm4098, %vm4099
    %v4101 = vsel %vm4100, %v4093, %v4097
    %v4102 = vand.u32 2147483647, %v4076
    %vm4103 = vcmp.eq.f32.partialorder %v4102, 8.507059e+37
    %v4104 = vand.u32 %v4076, 2147483648
    %v4105 = vor.u32 1.1754944e-38, %v4104
    %v4106 = vsel %vm4103, %v4105, %v4101
    %v4107 = vmul.f32 1.0, %v4106
    %v4108 = vrcp.pop %v4077
    %v4109 = vmul.f32 %v4077, %v4108
    %v4110 = vsub.f32 1.0, %v4109
    %v4111 = vmul.f32 %v4108, %v4110
    %v4112 = vadd.f32 %v4108, %v4111
    %vm4113 = vweird.f32 %v4077
    %vm4114 = vweird.f32 %v4108
    %vm4115 = vmor %vm4113, %vm4114
    %v4116 = vsel %vm4115, %v4108, %v4112
    %v4117 = vand.u32 2147483647, %v4077
    %vm4118 = vcmp.eq.f32.partialorder %v4117, 8.507059e+37
    %v4119 = vand.u32 %v4077, 2147483648
    %v4120 = vor.u32 1.1754944e-38, %v4119
    %v4121 = vsel %vm4118, %v4120, %v4116
    %v4122 = vmul.f32 1.0, %v4121
    %v4123 = vtanh.pop %v4065
    %v4124 = vmul.f32 %v4107, %v4002
    %v4125 = vmul.f32 %v4092, %v4123
    %v4126 = vadd.f32 %v4124, %v4125
    %v4127 = vtanh.pop %v4126
    %v4128 = vmul.f32 %v4122, %v4127
    %v4129 = vld [vmem:[%s1778] sm:$0xff]
    %v4130 = vld [vmem:[%s1778 + $0x8] sm:$0xff]
    %v4131 = vld [vmem:[%s1778 + $0x10] sm:$0xff]
    %v4132 = vld [vmem:[%s1778 + $0x18] sm:$0xff]
    %v4133 = vpack.c.bf16 %v4128, %v4128
    %4134 = vmatpush.bf16.msra.mxu0 %v3602
    %4135 = vmatpush.bf16.msra.mxu0 %v3598
    %4136 = vmatpush.bf16.msra.mxu0 %v3594
    %4137 = vmatpush.bf16.msra.mxu0 %v3590
    %4138 = vmatpush.bf16.msra.mxu0 %v3586
    %4139 = vmatpush.bf16.msra.mxu0 %v3582
    %4140 = vmatpush.bf16.msra.mxu0 %v3578
    %4141 = vmatpush.bf16.msra.mxu0 %v3574
    %4142 = vmatmul.bf16.gmra.mxu0 %v4133
    %v4143 = vpop.f32.mrf.mxu0
    %v4144 = vadd.f32 0.0, %v4143
    %v4145 = vpop.f32.mrf.mxu0
    %4146 = vdwg.mxu0
    %4147 = vmatpush.bf16.msra.mxu0 %v3603
    %4148 = vmatpush.bf16.msra.mxu0 %v3599
    %4149 = vmatpush.bf16.msra.mxu0 %v3595
    %4150 = vmatpush.bf16.msra.mxu0 %v3591
    %4151 = vmatpush.bf16.msra.mxu0 %v3587
    %4152 = vmatpush.bf16.msra.mxu0 %v3583
    %4153 = vmatpush.bf16.msra.mxu0 %v3579
    %4154 = vmatpush.bf16.msra.mxu0 %v3575
    %4155 = vmatmul.bf16.gmra.mxu0 %v4133
    %v4156 = vpop.f32.mrf.mxu0
    %v4157 = vadd.f32 0.0, %v4156
    %v4158 = vpop.f32.mrf.mxu0
    %4159 = vdwg.mxu0
    %4160 = vmatpush.bf16.msra.mxu0 %v3604
    %4161 = vmatpush.bf16.msra.mxu0 %v3600
    %4162 = vmatpush.bf16.msra.mxu0 %v3596
    %4163 = vmatpush.bf16.msra.mxu0 %v3592
    %4164 = vmatpush.bf16.msra.mxu0 %v3588
    %4165 = vmatpush.bf16.msra.mxu0 %v3584
    %4166 = vmatpush.bf16.msra.mxu0 %v3580
    %4167 = vmatpush.bf16.msra.mxu0 %v3576
    %4168 = vmatmul.bf16.gmra.mxu0 %v4133
    %v4169 = vpop.f32.mrf.mxu0
    %v4170 = vadd.f32 0.0, %v4169
    %v4171 = vpop.f32.mrf.mxu0
    %4172 = vdwg.mxu0
    %4173 = vmatpush.bf16.msra.mxu0 %v3605
    %4174 = vmatpush.bf16.msra.mxu0 %v3601
    %4175 = vmatpush.bf16.msra.mxu0 %v3597
    %4176 = vmatpush.bf16.msra.mxu0 %v3593
    %4177 = vmatpush.bf16.msra.mxu0 %v3589
    %4178 = vmatpush.bf16.msra.mxu0 %v3585
    %4179 = vmatpush.bf16.msra.mxu0 %v3581
    %4180 = vmatpush.bf16.msra.mxu0 %v3577
    %4181 = vmatmul.bf16.gmra.mxu0 %v4133
    %v4182 = vpop.f32.mrf.mxu0
    %v4183 = vadd.f32 0.0, %v4182
    %v4184 = vpop.f32.mrf.mxu0
    %4185 = vdwg.mxu0
    %v4186 = vadd.f32 %v4129, %v4144
    %v4187 = vadd.f32 %v4130, %v4157
    %v4188 = vadd.f32 %v4131, %v4170
    %v4189 = vadd.f32 %v4132, %v4183
    %v4190 = vxor.u32 %v4186, 2147483648
    %v4191 = vxor.u32 %v4187, 2147483648
    %v4192 = vxor.u32 %v4188, 2147483648
    %v4193 = vmul.f32 %v4190, 1.442695
    %v4194 = vpow.pop %v4193
    %v4195 = vmul.f32 %v4191, 1.442695
    %v4196 = vpow.pop %v4195
    %v4197 = vmul.f32 %v4192, 1.442695
    %v4198 = vpow.pop %v4197
    %v4199 = vadd.f32 %v4194, 1.0
    %v4200 = vadd.f32 %v4196, 1.0
    %v4201 = vadd.f32 %v4198, 1.0
    %v4202 = vrcp.pop %v4199
    %v4203 = vmul.f32 %v4199, %v4202
    %v4204 = vsub.f32 1.0, %v4203
    %v4205 = vmul.f32 %v4202, %v4204
    %v4206 = vadd.f32 %v4202, %v4205
    %vm4207 = vweird.f32 %v4199
    %vm4208 = vweird.f32 %v4202
    %vm4209 = vmor %vm4207, %vm4208
    %v4210 = vsel %vm4209, %v4202, %v4206
    %v4211 = vand.u32 2147483647, %v4199
    %vm4212 = vcmp.eq.f32.partialorder %v4211, 8.507059e+37
    %v4213 = vand.u32 %v4199, 2147483648
    %v4214 = vor.u32 1.1754944e-38, %v4213
    %v4215 = vsel %vm4212, %v4214, %v4210
    %v4216 = vmul.f32 1.0, %v4215
    %v4217 = vrcp.pop %v4200
    %v4218 = vmul.f32 %v4200, %v4217
    %v4219 = vsub.f32 1.0, %v4218
    %v4220 = vmul.f32 %v4217, %v4219
    %v4221 = vadd.f32 %v4217, %v4220
    %vm4222 = vweird.f32 %v4200
    %vm4223 = vweird.f32 %v4217
    %vm4224 = vmor %vm4222, %vm4223
    %v4225 = vsel %vm4224, %v4217, %v4221
    %v4226 = vand.u32 2147483647, %v4200
    %vm4227 = vcmp.eq.f32.partialorder %v4226, 8.507059e+37
    %v4228 = vand.u32 %v4200, 2147483648
    %v4229 = vor.u32 1.1754944e-38, %v4228
    %v4230 = vsel %vm4227, %v4229, %v4225
    %v4231 = vmul.f32 1.0, %v4230
    %v4232 = vrcp.pop %v4201
    %v4233 = vmul.f32 %v4201, %v4232
    %v4234 = vsub.f32 1.0, %v4233
    %v4235 = vmul.f32 %v4232, %v4234
    %v4236 = vadd.f32 %v4232, %v4235
    %vm4237 = vweird.f32 %v4201
    %vm4238 = vweird.f32 %v4232
    %vm4239 = vmor %vm4237, %vm4238
    %v4240 = vsel %vm4239, %v4232, %v4236
    %v4241 = vand.u32 2147483647, %v4201
    %vm4242 = vcmp.eq.f32.partialorder %v4241, 8.507059e+37
    %v4243 = vand.u32 %v4201, 2147483648
    %v4244 = vor.u32 1.1754944e-38, %v4243
    %v4245 = vsel %vm4242, %v4244, %v4240
    %v4246 = vmul.f32 1.0, %v4245
    %v4247 = vtanh.pop %v4189
    %v4248 = vmul.f32 %v4231, %v4126
    %v4249 = vmul.f32 %v4216, %v4247
    %v4250 = vadd.f32 %v4248, %v4249
    %v4251 = vtanh.pop %v4250
    %v4252 = vmul.f32 %v4246, %v4251
    %v4253 = vld [vmem:[%s2099] sm:$0xff]
    %v4254 = vld [vmem:[%s2099 + $0x8] sm:$0xff]
    %v4255 = vld [vmem:[%s2099 + $0x10] sm:$0xff]
    %v4256 = vld [vmem:[%s2099 + $0x18] sm:$0xff]
    %v4257 = vpack.c.bf16 %v4252, %v4252
    %4258 = vmatpush.bf16.msra.mxu0 %v3602
    %4259 = vmatpush.bf16.msra.mxu0 %v3598
    %4260 = vmatpush.bf16.msra.mxu0 %v3594
    %4261 = vmatpush.bf16.msra.mxu0 %v3590
    %4262 = vmatpush.bf16.msra.mxu0 %v3586
    %4263 = vmatpush.bf16.msra.mxu0 %v3582
    %4264 = vmatpush.bf16.msra.mxu0 %v3578
    %4265 = vmatpush.bf16.msra.mxu0 %v3574
    %4266 = vmatmul.bf16.gmra.mxu0 %v4257
    %v4267 = vpop.f32.mrf.mxu0
    %v4268 = vadd.f32 0.0, %v4267
    %v4269 = vpop.f32.mrf.mxu0
    %4270 = vdwg.mxu0
    %4271 = vmatpush.bf16.msra.mxu0 %v3603
    %4272 = vmatpush.bf16.msra.mxu0 %v3599
    %4273 = vmatpush.bf16.msra.mxu0 %v3595
    %4274 = vmatpush.bf16.msra.mxu0 %v3591
    %4275 = vmatpush.bf16.msra.mxu0 %v3587
    %4276 = vmatpush.bf16.msra.mxu0 %v3583
    %4277 = vmatpush.bf16.msra.mxu0 %v3579
    %4278 = vmatpush.bf16.msra.mxu0 %v3575
    %4279 = vmatmul.bf16.gmra.mxu0 %v4257
    %v4280 = vpop.f32.mrf.mxu0
    %v4281 = vadd.f32 0.0, %v4280
    %v4282 = vpop.f32.mrf.mxu0
    %4283 = vdwg.mxu0
    %4284 = vmatpush.bf16.msra.mxu0 %v3604
    %4285 = vmatpush.bf16.msra.mxu0 %v3600
    %4286 = vmatpush.bf16.msra.mxu0 %v3596
    %4287 = vmatpush.bf16.msra.mxu0 %v3592
    %4288 = vmatpush.bf16.msra.mxu0 %v3588
    %4289 = vmatpush.bf16.msra.mxu0 %v3584
    %4290 = vmatpush.bf16.msra.mxu0 %v3580
    %4291 = vmatpush.bf16.msra.mxu0 %v3576
    %4292 = vmatmul.bf16.gmra.mxu0 %v4257
    %v4293 = vpop.f32.mrf.mxu0
    %v4294 = vadd.f32 0.0, %v4293
    %v4295 = vpop.f32.mrf.mxu0
    %4296 = vdwg.mxu0
    %4297 = vmatpush.bf16.msra.mxu0 %v3605
    %4298 = vmatpush.bf16.msra.mxu0 %v3601
    %4299 = vmatpush.bf16.msra.mxu0 %v3597
    %4300 = vmatpush.bf16.msra.mxu0 %v3593
    %4301 = vmatpush.bf16.msra.mxu0 %v3589
    %4302 = vmatpush.bf16.msra.mxu0 %v3585
    %4303 = vmatpush.bf16.msra.mxu0 %v3581
    %4304 = vmatpush.bf16.msra.mxu0 %v3577
    %4305 = vmatmul.bf16.gmra.mxu0 %v4257
    %v4306 = vpop.f32.mrf.mxu0
    %v4307 = vadd.f32 0.0, %v4306
    %v4308 = vpop.f32.mrf.mxu0
    %4309 = vdwg.mxu0
    %v4310 = vadd.f32 %v4253, %v4268
    %v4311 = vadd.f32 %v4254, %v4281
    %v4312 = vadd.f32 %v4255, %v4294
    %v4313 = vadd.f32 %v4256, %v4307
    %v4314 = vxor.u32 %v4310, 2147483648
    %v4315 = vxor.u32 %v4311, 2147483648
    %v4316 = vxor.u32 %v4312, 2147483648
    %v4317 = vmul.f32 %v4314, 1.442695
    %v4318 = vpow.pop %v4317
    %v4319 = vmul.f32 %v4315, 1.442695
    %v4320 = vpow.pop %v4319
    %v4321 = vmul.f32 %v4316, 1.442695
    %v4322 = vpow.pop %v4321
    %v4323 = vadd.f32 %v4318, 1.0
    %v4324 = vadd.f32 %v4320, 1.0
    %v4325 = vadd.f32 %v4322, 1.0
    %v4326 = vrcp.pop %v4323
    %v4327 = vmul.f32 %v4323, %v4326
    %v4328 = vsub.f32 1.0, %v4327
    %v4329 = vmul.f32 %v4326, %v4328
    %v4330 = vadd.f32 %v4326, %v4329
    %vm4331 = vweird.f32 %v4323
    %vm4332 = vweird.f32 %v4326
    %vm4333 = vmor %vm4331, %vm4332
    %v4334 = vsel %vm4333, %v4326, %v4330
    %v4335 = vand.u32 2147483647, %v4323
    %vm4336 = vcmp.eq.f32.partialorder %v4335, 8.507059e+37
    %v4337 = vand.u32 %v4323, 2147483648
    %v4338 = vor.u32 1.1754944e-38, %v4337
    %v4339 = vsel %vm4336, %v4338, %v4334
    %v4340 = vmul.f32 1.0, %v4339
    %v4341 = vrcp.pop %v4324
    %v4342 = vmul.f32 %v4324, %v4341
    %v4343 = vsub.f32 1.0, %v4342
    %v4344 = vmul.f32 %v4341, %v4343
    %v4345 = vadd.f32 %v4341, %v4344
    %vm4346 = vweird.f32 %v4324
    %vm4347 = vweird.f32 %v4341
    %vm4348 = vmor %vm4346, %vm4347
    %v4349 = vsel %vm4348, %v4341, %v4345
    %v4350 = vand.u32 2147483647, %v4324
    %vm4351 = vcmp.eq.f32.partialorder %v4350, 8.507059e+37
    %v4352 = vand.u32 %v4324, 2147483648
    %v4353 = vor.u32 1.1754944e-38, %v4352
    %v4354 = vsel %vm4351, %v4353, %v4349
    %v4355 = vmul.f32 1.0, %v4354
    %v4356 = vrcp.pop %v4325
    %v4357 = vmul.f32 %v4325, %v4356
    %v4358 = vsub.f32 1.0, %v4357
    %v4359 = vmul.f32 %v4356, %v4358
    %v4360 = vadd.f32 %v4356, %v4359
    %vm4361 = vweird.f32 %v4325
    %vm4362 = vweird.f32 %v4356
    %vm4363 = vmor %vm4361, %vm4362
    %v4364 = vsel %vm4363, %v4356, %v4360
    %v4365 = vand.u32 2147483647, %v4325
    %vm4366 = vcmp.eq.f32.partialorder %v4365, 8.507059e+37
    %v4367 = vand.u32 %v4325, 2147483648
    %v4368 = vor.u32 1.1754944e-38, %v4367
    %v4369 = vsel %vm4366, %v4368, %v4364
    %v4370 = vmul.f32 1.0, %v4369
    %v4371 = vtanh.pop %v4313
    %v4372 = vmul.f32 %v4355, %v4250
    %v4373 = vmul.f32 %v4340, %v4371
    %v4374 = vadd.f32 %v4372, %v4373
    %v4375 = vtanh.pop %v4374
    %v4376 = vmul.f32 %v4370, %v4375
    %v4377 = vld [vmem:[%s2420] sm:$0xff]
    %v4378 = vld [vmem:[%s2420 + $0x8] sm:$0xff]
    %v4379 = vld [vmem:[%s2420 + $0x10] sm:$0xff]
    %v4380 = vld [vmem:[%s2420 + $0x18] sm:$0xff]
    %v4381 = vpack.c.bf16 %v4376, %v4376
    %4382 = vmatpush.bf16.msra.mxu0 %v3602
    %4383 = vmatpush.bf16.msra.mxu0 %v3598
    %4384 = vmatpush.bf16.msra.mxu0 %v3594
    %4385 = vmatpush.bf16.msra.mxu0 %v3590
    %4386 = vmatpush.bf16.msra.mxu0 %v3586
    %4387 = vmatpush.bf16.msra.mxu0 %v3582
    %4388 = vmatpush.bf16.msra.mxu0 %v3578
    %4389 = vmatpush.bf16.msra.mxu0 %v3574
    %4390 = vmatmul.bf16.gmra.mxu0 %v4381
    %v4391 = vpop.f32.mrf.mxu0
    %v4392 = vadd.f32 0.0, %v4391
    %v4393 = vpop.f32.mrf.mxu0
    %4394 = vdwg.mxu0
    %4395 = vmatpush.bf16.msra.mxu0 %v3603
    %4396 = vmatpush.bf16.msra.mxu0 %v3599
    %4397 = vmatpush.bf16.msra.mxu0 %v3595
    %4398 = vmatpush.bf16.msra.mxu0 %v3591
    %4399 = vmatpush.bf16.msra.mxu0 %v3587
    %4400 = vmatpush.bf16.msra.mxu0 %v3583
    %4401 = vmatpush.bf16.msra.mxu0 %v3579
    %4402 = vmatpush.bf16.msra.mxu0 %v3575
    %4403 = vmatmul.bf16.gmra.mxu0 %v4381
    %v4404 = vpop.f32.mrf.mxu0
    %v4405 = vadd.f32 0.0, %v4404
    %v4406 = vpop.f32.mrf.mxu0
    %4407 = vdwg.mxu0
    %4408 = vmatpush.bf16.msra.mxu0 %v3604
    %4409 = vmatpush.bf16.msra.mxu0 %v3600
    %4410 = vmatpush.bf16.msra.mxu0 %v3596
    %4411 = vmatpush.bf16.msra.mxu0 %v3592
    %4412 = vmatpush.bf16.msra.mxu0 %v3588
    %4413 = vmatpush.bf16.msra.mxu0 %v3584
    %4414 = vmatpush.bf16.msra.mxu0 %v3580
    %4415 = vmatpush.bf16.msra.mxu0 %v3576
    %4416 = vmatmul.bf16.gmra.mxu0 %v4381
    %v4417 = vpop.f32.mrf.mxu0
    %v4418 = vadd.f32 0.0, %v4417
    %v4419 = vpop.f32.mrf.mxu0
    %4420 = vdwg.mxu0
    %4421 = vmatpush.bf16.msra.mxu0 %v3605
    %4422 = vmatpush.bf16.msra.mxu0 %v3601
    %4423 = vmatpush.bf16.msra.mxu0 %v3597
    %4424 = vmatpush.bf16.msra.mxu0 %v3593
    %4425 = vmatpush.bf16.msra.mxu0 %v3589
    %4426 = vmatpush.bf16.msra.mxu0 %v3585
    %4427 = vmatpush.bf16.msra.mxu0 %v3581
    %4428 = vmatpush.bf16.msra.mxu0 %v3577
    %4429 = vmatmul.bf16.gmra.mxu0 %v4381
    %v4430 = vpop.f32.mrf.mxu0
    %v4431 = vadd.f32 0.0, %v4430
    %v4432 = vpop.f32.mrf.mxu0
    %4433 = vdwg.mxu0
    %v4434 = vadd.f32 %v4377, %v4392
    %v4435 = vadd.f32 %v4378, %v4405
    %v4436 = vadd.f32 %v4379, %v4418
    %v4437 = vadd.f32 %v4380, %v4431
    %v4438 = vxor.u32 %v4434, 2147483648
    %v4439 = vxor.u32 %v4435, 2147483648
    %v4440 = vxor.u32 %v4436, 2147483648
    %v4441 = vmul.f32 %v4438, 1.442695
    %v4442 = vpow.pop %v4441
    %v4443 = vmul.f32 %v4439, 1.442695
    %v4444 = vpow.pop %v4443
    %v4445 = vmul.f32 %v4440, 1.442695
    %v4446 = vpow.pop %v4445
    %v4447 = vadd.f32 %v4442, 1.0
    %v4448 = vadd.f32 %v4444, 1.0
    %v4449 = vadd.f32 %v4446, 1.0
    %v4450 = vrcp.pop %v4447
    %v4451 = vmul.f32 %v4447, %v4450
    %v4452 = vsub.f32 1.0, %v4451
    %v4453 = vmul.f32 %v4450, %v4452
    %v4454 = vadd.f32 %v4450, %v4453
    %vm4455 = vweird.f32 %v4447
    %vm4456 = vweird.f32 %v4450
    %vm4457 = vmor %vm4455, %vm4456
    %v4458 = vsel %vm4457, %v4450, %v4454
    %v4459 = vand.u32 2147483647, %v4447
    %vm4460 = vcmp.eq.f32.partialorder %v4459, 8.507059e+37
    %v4461 = vand.u32 %v4447, 2147483648
    %v4462 = vor.u32 1.1754944e-38, %v4461
    %v4463 = vsel %vm4460, %v4462, %v4458
    %v4464 = vmul.f32 1.0, %v4463
    %v4465 = vrcp.pop %v4448
    %v4466 = vmul.f32 %v4448, %v4465
    %v4467 = vsub.f32 1.0, %v4466
    %v4468 = vmul.f32 %v4465, %v4467
    %v4469 = vadd.f32 %v4465, %v4468
    %vm4470 = vweird.f32 %v4448
    %vm4471 = vweird.f32 %v4465
    %vm4472 = vmor %vm4470, %vm4471
    %v4473 = vsel %vm4472, %v4465, %v4469
    %v4474 = vand.u32 2147483647, %v4448
    %vm4475 = vcmp.eq.f32.partialorder %v4474, 8.507059e+37
    %v4476 = vand.u32 %v4448, 2147483648
    %v4477 = vor.u32 1.1754944e-38, %v4476
    %v4478 = vsel %vm4475, %v4477, %v4473
    %v4479 = vmul.f32 1.0, %v4478
    %v4480 = vrcp.pop %v4449
    %v4481 = vmul.f32 %v4449, %v4480
    %v4482 = vsub.f32 1.0, %v4481
    %v4483 = vmul.f32 %v4480, %v4482
    %v4484 = vadd.f32 %v4480, %v4483
    %vm4485 = vweird.f32 %v4449
    %vm4486 = vweird.f32 %v4480
    %vm4487 = vmor %vm4485, %vm4486
    %v4488 = vsel %vm4487, %v4480, %v4484
    %v4489 = vand.u32 2147483647, %v4449
    %vm4490 = vcmp.eq.f32.partialorder %v4489, 8.507059e+37
    %v4491 = vand.u32 %v4449, 2147483648
    %v4492 = vor.u32 1.1754944e-38, %v4491
    %v4493 = vsel %vm4490, %v4492, %v4488
    %v4494 = vmul.f32 1.0, %v4493
    %v4495 = vtanh.pop %v4437
    %v4496 = vmul.f32 %v4479, %v4374
    %v4497 = vmul.f32 %v4464, %v4495
    %v4498 = vadd.f32 %v4496, %v4497
    %v4499 = vtanh.pop %v4498
    %v4500 = vmul.f32 %v4494, %v4499
    %v4501 = vld [vmem:[%s2741] sm:$0xff]
    %v4502 = vld [vmem:[%s2741 + $0x8] sm:$0xff]
    %v4503 = vld [vmem:[%s2741 + $0x10] sm:$0xff]
    %v4504 = vld [vmem:[%s2741 + $0x18] sm:$0xff]
    %v4505 = vpack.c.bf16 %v4500, %v4500
    %4506 = vmatpush.bf16.msra.mxu0 %v3602
    %4507 = vmatpush.bf16.msra.mxu0 %v3598
    %4508 = vmatpush.bf16.msra.mxu0 %v3594
    %4509 = vmatpush.bf16.msra.mxu0 %v3590
    %4510 = vmatpush.bf16.msra.mxu0 %v3586
    %4511 = vmatpush.bf16.msra.mxu0 %v3582
    %4512 = vmatpush.bf16.msra.mxu0 %v3578
    %4513 = vmatpush.bf16.msra.mxu0 %v3574
    %4514 = vmatmul.bf16.gmra.mxu0 %v4505
    %v4515 = vpop.f32.mrf.mxu0
    %v4516 = vadd.f32 0.0, %v4515
    %v4517 = vpop.f32.mrf.mxu0
    %4518 = vdwg.mxu0
    %4519 = vmatpush.bf16.msra.mxu0 %v3603
    %4520 = vmatpush.bf16.msra.mxu0 %v3599
    %4521 = vmatpush.bf16.msra.mxu0 %v3595
    %4522 = vmatpush.bf16.msra.mxu0 %v3591
    %4523 = vmatpush.bf16.msra.mxu0 %v3587
    %4524 = vmatpush.bf16.msra.mxu0 %v3583
    %4525 = vmatpush.bf16.msra.mxu0 %v3579
    %4526 = vmatpush.bf16.msra.mxu0 %v3575
    %4527 = vmatmul.bf16.gmra.mxu0 %v4505
    %v4528 = vpop.f32.mrf.mxu0
    %v4529 = vadd.f32 0.0, %v4528
    %v4530 = vpop.f32.mrf.mxu0
    %4531 = vdwg.mxu0
    %4532 = vmatpush.bf16.msra.mxu0 %v3604
    %4533 = vmatpush.bf16.msra.mxu0 %v3600
    %4534 = vmatpush.bf16.msra.mxu0 %v3596
    %4535 = vmatpush.bf16.msra.mxu0 %v3592
    %4536 = vmatpush.bf16.msra.mxu0 %v3588
    %4537 = vmatpush.bf16.msra.mxu0 %v3584
    %4538 = vmatpush.bf16.msra.mxu0 %v3580
    %4539 = vmatpush.bf16.msra.mxu0 %v3576
    %4540 = vmatmul.bf16.gmra.mxu0 %v4505
    %v4541 = vpop.f32.mrf.mxu0
    %v4542 = vadd.f32 0.0, %v4541
    %v4543 = vpop.f32.mrf.mxu0
    %4544 = vdwg.mxu0
    %4545 = vmatpush.bf16.msra.mxu0 %v3605
    %4546 = vmatpush.bf16.msra.mxu0 %v3601
    %4547 = vmatpush.bf16.msra.mxu0 %v3597
    %4548 = vmatpush.bf16.msra.mxu0 %v3593
    %4549 = vmatpush.bf16.msra.mxu0 %v3589
    %4550 = vmatpush.bf16.msra.mxu0 %v3585
    %4551 = vmatpush.bf16.msra.mxu0 %v3581
    %4552 = vmatpush.bf16.msra.mxu0 %v3577
    %4553 = vmatmul.bf16.gmra.mxu0 %v4505
    %v4554 = vpop.f32.mrf.mxu0
    %v4555 = vadd.f32 0.0, %v4554
    %v4556 = vpop.f32.mrf.mxu0
    %4557 = vdwg.mxu0
    %v4558 = vadd.f32 %v4501, %v4516
    %v4559 = vadd.f32 %v4502, %v4529
    %v4560 = vadd.f32 %v4503, %v4542
    %v4561 = vadd.f32 %v4504, %v4555
    %v4562 = vxor.u32 %v4558, 2147483648
    %v4563 = vxor.u32 %v4559, 2147483648
    %v4564 = vxor.u32 %v4560, 2147483648
    %v4565 = vmul.f32 %v4562, 1.442695
    %v4566 = vpow.pop %v4565
    %v4567 = vmul.f32 %v4563, 1.442695
    %v4568 = vpow.pop %v4567
    %v4569 = vmul.f32 %v4564, 1.442695
    %v4570 = vpow.pop %v4569
    %v4571 = vadd.f32 %v4566, 1.0
    %v4572 = vadd.f32 %v4568, 1.0
    %v4573 = vadd.f32 %v4570, 1.0
    %v4574 = vrcp.pop %v4571
    %v4575 = vmul.f32 %v4571, %v4574
    %v4576 = vsub.f32 1.0, %v4575
    %v4577 = vmul.f32 %v4574, %v4576
    %v4578 = vadd.f32 %v4574, %v4577
    %vm4579 = vweird.f32 %v4571
    %vm4580 = vweird.f32 %v4574
    %vm4581 = vmor %vm4579, %vm4580
    %v4582 = vsel %vm4581, %v4574, %v4578
    %v4583 = vand.u32 2147483647, %v4571
    %vm4584 = vcmp.eq.f32.partialorder %v4583, 8.507059e+37
    %v4585 = vand.u32 %v4571, 2147483648
    %v4586 = vor.u32 1.1754944e-38, %v4585
    %v4587 = vsel %vm4584, %v4586, %v4582
    %v4588 = vmul.f32 1.0, %v4587
    %v4589 = vrcp.pop %v4572
    %v4590 = vmul.f32 %v4572, %v4589
    %v4591 = vsub.f32 1.0, %v4590
    %v4592 = vmul.f32 %v4589, %v4591
    %v4593 = vadd.f32 %v4589, %v4592
    %vm4594 = vweird.f32 %v4572
    %vm4595 = vweird.f32 %v4589
    %vm4596 = vmor %vm4594, %vm4595
    %v4597 = vsel %vm4596, %v4589, %v4593
    %v4598 = vand.u32 2147483647, %v4572
    %vm4599 = vcmp.eq.f32.partialorder %v4598, 8.507059e+37
    %v4600 = vand.u32 %v4572, 2147483648
    %v4601 = vor.u32 1.1754944e-38, %v4600
    %v4602 = vsel %vm4599, %v4601, %v4597
    %v4603 = vmul.f32 1.0, %v4602
    %v4604 = vrcp.pop %v4573
    %v4605 = vmul.f32 %v4573, %v4604
    %v4606 = vsub.f32 1.0, %v4605
    %v4607 = vmul.f32 %v4604, %v4606
    %v4608 = vadd.f32 %v4604, %v4607
    %vm4609 = vweird.f32 %v4573
    %vm4610 = vweird.f32 %v4604
    %vm4611 = vmor %vm4609, %vm4610
    %v4612 = vsel %vm4611, %v4604, %v4608
    %v4613 = vand.u32 2147483647, %v4573
    %vm4614 = vcmp.eq.f32.partialorder %v4613, 8.507059e+37
    %v4615 = vand.u32 %v4573, 2147483648
    %v4616 = vor.u32 1.1754944e-38, %v4615
    %v4617 = vsel %vm4614, %v4616, %v4612
    %v4618 = vmul.f32 1.0, %v4617
    %v4619 = vtanh.pop %v4561
    %v4620 = vmul.f32 %v4603, %v4498
    %v4621 = vmul.f32 %v4588, %v4619
    %v4622 = vadd.f32 %v4620, %v4621
    %v4623 = vtanh.pop %v4622
    %v4624 = vmul.f32 %v4618, %v4623
    %v4625 = vld [vmem:[#allocation12] sm:$0xff]
    %v4626 = vld [vmem:[#allocation12 + $0x8] sm:$0xff]
    %v4627 = vld [vmem:[#allocation12 + $0x10] sm:$0xff]
    %v4628 = vld [vmem:[#allocation12 + $0x18] sm:$0xff]
    %v4629 = vld [vmem:[#allocation12 + $0x20] sm:$0xff]
    %v4630 = vld [vmem:[#allocation12 + $0x28] sm:$0xff]
    %v4631 = vld [vmem:[#allocation12 + $0x30] sm:$0xff]
    %v4632 = vld [vmem:[#allocation12 + $0x38] sm:$0xff]
    %v4633 = vld [vmem:[#allocation12 + $0x40] sm:$0xff]
    %v4634 = vld [vmem:[#allocation12 + $0x48] sm:$0xff]
    %v4635 = vld [vmem:[#allocation12 + $0x50] sm:$0xff]
    %v4636 = vld [vmem:[#allocation12 + $0x58] sm:$0xff]
    %v4637 = vld [vmem:[#allocation12 + $0x60] sm:$0xff]
    %v4638 = vld [vmem:[#allocation12 + $0x68] sm:$0xff]
    %v4639 = vld [vmem:[#allocation12 + $0x70] sm:$0xff]
    %v4640 = vld [vmem:[#allocation12 + $0x78] sm:$0xff]
    %v4641 = vld [vmem:[%s8] sm:$0x1]
    %v4643 = vperm.slane %v4641, 0
    %4645 = vmatpush.msra.mxu0 %v4640
    %4646 = vmatpush.msra.mxu0 %v4639
    %4647 = vmatpush.msra.mxu0 %v4638
    %4648 = vmatpush.msra.mxu0 %v4637
    %4649 = vmatpush.msra.mxu0 %v4636
    %4650 = vmatpush.msra.mxu0 %v4635
    %4651 = vmatpush.msra.mxu0 %v4634
    %4652 = vmatpush.msra.mxu0 %v4633
    %4653 = vmatpush.msra.mxu0 %v4632
    %4654 = vmatpush.msra.mxu0 %v4631
    %4655 = vmatpush.msra.mxu0 %v4630
    %4656 = vmatpush.msra.mxu0 %v4629
    %4657 = vmatpush.msra.mxu0 %v4628
    %4658 = vmatpush.msra.mxu0 %v4627
    %4659 = vmatpush.msra.mxu0 %v4626
    %4660 = vmatpush.msra.mxu0 %v4625
    %4661 = vmatmul.f32.gmra.mxu0 %v4624
    %v4662 = vpop.f32.mrf.mxu0
    %v4663 = vadd.f32 %v4643, %v4662
    %4664 = vdwg.mxu0
    %4665 = vst [vmem:[%s9] sm:$0xff] %v4663
    // Predicated region
    $region58: #{forward.1} parent=1 // pred_check
      _
    $region59: #{forward.1} parent=1 // pred_check_branch
      %4667 = sbr.rel (0) target = $region61
    $region60: #{forward.1} parent=1 // pred_region
      _
    $region61: #{forward.1} parent=1 // pred_fallthru
      _
    // Predicated region
    $region62: #{forward.1} parent=1 // pred_check
      _
    $region63: #{forward.1} parent=1 // pred_check_branch
      %4669 = sbr.rel (0) target = $region65
    $region64: #{forward.1} parent=1 // pred_region
      _
    $region65: #{forward.1} parent=1 // pred_fallthru
      _
    %4670 = vsyncpa [#allocation6], 1
    %4671 = vsyncpa [#allocation8], 1
    %4672 = vsyncpa [#allocation11], 1

</llo_original>
